<compile_context>
chip_gen: v7x
topology: tpu7x:2x2x1
jax: 0.10.0
libtpu: 0.0.40
codegen_flags: <defaults>
</compile_context>

<pallas_src>
import functools

import jax
import jax.numpy as jnp
from jax import lax
from jax.experimental import pallas as pl
from jax.experimental.pallas import tpu as pltpu

LANE = 128


def _round_up(x, m):
    return (x + m - 1) // m * m


def _elu(x):
    return jnp.where(x > 0, x, jnp.exp(x) - 1.0)


def _masked_softmax_attention(adj_i8, alpha_dst_col, alpha_src_row):
    """att[i, j] = softmax_j( leaky_relu(alpha_dst[i] + alpha_src[j], 0.2) masked by adj )."""
    logits = alpha_dst_col + alpha_src_row                       # [TM, Np]
    logits = jnp.maximum(logits, 0.2 * logits)                   # leaky_relu w/o select
    adjf = adj_i8.astype(jnp.float32)
    logits = jnp.where(adjf > 0.0, logits, jnp.float32(-1e30))
    logits = logits - jnp.max(logits, axis=1, keepdims=True)
    p = jnp.exp(logits)
    denom = jnp.sum(p, axis=1, keepdims=True)
    # self loops guarantee at least one unmasked entry per row -> denom > 0
    return p * pl.reciprocal(denom, approx=False)


# ---------------- kernel A: projection + attention scalars ----------------
def _project_kernel(feat_ref, w1_ref, asrc8_ref, adstw_ref,
                    h_ref, alpha_src_ref, alpha_dst_ref):
    h = jnp.dot(feat_ref[...], w1_ref[...], preferred_element_type=jnp.float32)  # [TM, C1p]
    h_ref[...] = h
    # lane-major alpha_src: (8, C1p) x (TM, C1p)^T -> (8, TM); only row 0 is real.
    alpha_src_ref[...] = lax.dot_general(
        asrc8_ref[...], h, (((1,), (1,)), ((), ())),
        preferred_element_type=jnp.float32)                                       # [8, TM]
    alpha_dst_ref[...] = jnp.sum(h * adstw_ref[...], axis=1, keepdims=True)        # [TM, 1]


# ------------- kernel B: conv1 (attention) + conv2 + tied h3 projection -------------
def _encode_kernel(adj_ref, adst_ref, asrc_ref, h_ref, w2_ref, w2t_ref,
                   h2_ref, h3p_ref):
    att = _masked_softmax_attention(adj_ref[...], adst_ref[...], asrc_ref[0:1, :])
    h1 = _elu(jnp.dot(att, h_ref[...], preferred_element_type=jnp.float32))        # [TM, C1p]
    h2 = jnp.dot(h1, w2_ref[...], preferred_element_type=jnp.float32)              # [TM, C2p]
    norm = jnp.sqrt(jnp.sum(h2 * h2, axis=1, keepdims=True))
    h2 = h2 / jnp.maximum(norm, jnp.float32(1e-12))                                # F.normalize
    h2_ref[...] = h2
    h3p_ref[...] = jnp.dot(h2, w2t_ref[...], preferred_element_type=jnp.float32)   # [TM, C1p]


# ------------- kernel C: conv3 (tied attention) + conv4 + MSE loss -------------
def _decode_kernel(adj_ref, adst_ref, asrc_ref, h3p_ref, w1t_ref, feat_ref,
                   h4_ref, loss_ref, acc_ref, *, inv_count):
    t = pl.program_id(0)
    att = _masked_softmax_attention(adj_ref[...], adst_ref[...], asrc_ref[0:1, :])
    h3 = _elu(jnp.dot(att, h3p_ref[...], preferred_element_type=jnp.float32))      # [TM, C1p]
    h4 = jnp.dot(h3, w1t_ref[...], preferred_element_type=jnp.float32)             # [TM, Lp]
    h4_ref[...] = h4

    diff = feat_ref[...] - h4
    part = jnp.sum(diff * diff)

    @pl.when(t == 0)
    def _init():
        acc_ref[0] = jnp.float32(0.0)

    acc_ref[0] += part

    @pl.when(t == pl.num_programs(0) - 1)
    def _finalize():
        loss_ref[0, 0] = acc_ref[0] * jnp.float32(inv_count)


@functools.partial(jax.jit, static_argnames=("row_tile",))
def passage_forward(features, adj, w1, w2, att_src, att_dst, *, row_tile=128):
    """Fused PASSAGE forward. Returns (loss, latent h2, reconstruction h4)."""
    assert row_tile % LANE == 0, "row_tile must be a multiple of 128"
    N, L = features.shape
    C1 = w1.shape[1]
    C2 = w2.shape[1]
    TM = row_tile
    Np = _round_up(N, TM)
    Lp = _round_up(L, LANE)
    C1p = _round_up(C1, LANE)
    C2p = _round_up(C2, LANE)
    T = Np // TM
    f32 = jnp.float32

    # ---- zero-padded, lane-dense operands (zero padding is mathematically transparent) ----
    feat_p = jnp.zeros((Np, Lp), f32).at[:N, :L].set(features.astype(f32))
    # int8 adjacency mask; self loops on the whole padded diagonal keep every softmax
    # row well defined (matches GATConv(add_self_loops=True) for the real nodes).
    adj_p = jnp.zeros((Np, Np), jnp.int8).at[:N, :N].set((adj > 0).astype(jnp.int8))
    diag = jnp.arange(Np)
    adj_p = adj_p.at[diag, diag].set(1)
    w1_p = jnp.zeros((Lp, C1p), f32).at[:L, :C1].set(w1.astype(f32))
    w2_p = jnp.zeros((C1p, C2p), f32).at[:C1, :C2].set(w2.astype(f32))
    w1t_p = w1_p.T                      # pre-transposed in the wrapper (layout plumbing)
    w2t_p = w2_p.T
    asrc8_p = jnp.zeros((8, C1p), f32).at[0, :C1].set(att_src[0].astype(f32))
    adstw_p = jnp.zeros((1, C1p), f32).at[0, :C1].set(att_dst[0].astype(f32))

    par = pltpu.CompilerParams(dimension_semantics=("parallel",),
                               vmem_limit_bytes=64 * 1024 * 1024)
    arb = pltpu.CompilerParams(dimension_semantics=("arbitrary",),
                               vmem_limit_bytes=64 * 1024 * 1024)

    # ---- A: project features, compute per-node attention scalars ----
    h_full, alpha_src, alpha_dst = pl.pallas_call(
        _project_kernel,
        grid=(T,),
        in_specs=[
            pl.BlockSpec((TM, Lp), lambda t: (t, 0)),      # features row tile
            pl.BlockSpec((Lp, C1p), lambda t: (0, 0)),     # W1 (resident)
            pl.BlockSpec((8, C1p), lambda t: (0, 0)),      # att_src weights (row 0 real)
            pl.BlockSpec((1, C1p), lambda t: (0, 0)),      # att_dst weights
        ],
        out_specs=(
            pl.BlockSpec((TM, C1p), lambda t: (t, 0)),     # h = x @ W1
            pl.BlockSpec((8, TM), lambda t: (0, t)),       # alpha_src, lane-major
            pl.BlockSpec((TM, 1), lambda t: (t, 0)),       # alpha_dst
        ),
        out_shape=(
            jax.ShapeDtypeStruct((Np, C1p), f32),
            jax.ShapeDtypeStruct((8, Np), f32),
            jax.ShapeDtypeStruct((Np, 1), f32),
        ),
        compiler_params=par,
    )(feat_p, w1_p, asrc8_p, adstw_p)

    # ---- B: conv1 attention + conv2 + tied projection for conv3 ----
    h2_p, h3p_full = pl.pallas_call(
        _encode_kernel,
        grid=(T,),
        in_specs=[
            pl.BlockSpec((TM, Np), lambda t: (t, 0)),      # adjacency row tile (int8)
            pl.BlockSpec((TM, 1), lambda t: (t, 0)),       # alpha_dst tile
            pl.BlockSpec((8, Np), lambda t: (0, 0)),       # alpha_src (resident)
            pl.BlockSpec((Np, C1p), lambda t: (0, 0)),     # h (resident)
            pl.BlockSpec((C1p, C2p), lambda t: (0, 0)),    # W2
            pl.BlockSpec((C2p, C1p), lambda t: (0, 0)),    # W2^T (pre-transposed)
        ],
        out_specs=(
            pl.BlockSpec((TM, C2p), lambda t: (t, 0)),     # h2 (latent)
            pl.BlockSpec((TM, C1p), lambda t: (t, 0)),     # h3p = h2 @ W2^T
        ),
        out_shape=(
            jax.ShapeDtypeStruct((Np, C2p), f32),
            jax.ShapeDtypeStruct((Np, C1p), f32),
        ),
        compiler_params=par,
    )(adj_p, alpha_dst, alpha_src, h_full, w2_p, w2t_p)

    # ---- C: conv3 (tied attention) + conv4 + MSE loss ----
    decode = functools.partial(_decode_kernel, inv_count=1.0 / float(N * L))
    h4_p, loss = pl.pallas_call(
        decode,
        grid=(T,),
        in_specs=[
            pl.BlockSpec((TM, Np), lambda t: (t, 0)),      # adjacency row tile (int8)
            pl.BlockSpec((TM, 1), lambda t: (t, 0)),       # alpha_dst tile
            pl.BlockSpec((8, Np), lambda t: (0, 0)),       # alpha_src (resident)
            pl.BlockSpec((Np, C1p), lambda t: (0, 0)),     # h3p (resident)
            pl.BlockSpec((C1p, Lp), lambda t: (0, 0)),     # W1^T (pre-transposed)
            pl.BlockSpec((TM, Lp), lambda t: (t, 0)),      # features row tile
        ],
        out_specs=(
            pl.BlockSpec((TM, Lp), lambda t: (t, 0)),      # reconstruction h4
            pl.BlockSpec((1, 1), lambda t: (0, 0),
                         memory_space=pltpu.MemorySpace.SMEM),   # scalar loss
        ),
        out_shape=(
            jax.ShapeDtypeStruct((Np, Lp), f32),
            jax.ShapeDtypeStruct((1, 1), f32),
        ),
        scratch_shapes=[pltpu.SMEM((1,), jnp.float32)],
        compiler_params=arb,   # loss accumulator is carried across tiles -> sequential
    )(adj_p, alpha_dst, alpha_src, h3p_full, w1t_p, feat_p)

    return loss[0, 0], h2_p[:N, :C2], h4_p[:N, :L]


def passage_reference(features, adj, w1, w2, att_src, att_dst):
    """Pure-JAX reference with identical semantics (for correctness check)."""
    h = features @ w1
    a_s = jnp.sum(h * att_src, axis=-1, keepdims=True)
    a_d = jnp.sum(h * att_dst, axis=-1, keepdims=True)
    logits = a_d + a_s.T
    logits = jnp.maximum(logits, 0.2 * logits)
    logits = jnp.where(adj > 0, logits, -1e30)
    logits = logits - jnp.max(logits, axis=1, keepdims=True)
    e = jnp.exp(logits)
    att = e / jnp.sum(e, axis=1, keepdims=True)
    h1 = _elu(att @ h)
    h2 = h1 @ w2
    h2 = h2 / jnp.maximum(jnp.sqrt(jnp.sum(h2 * h2, axis=1, keepdims=True)), 1e-12)
    h3 = _elu(att @ (h2 @ w2.T))
    h4 = h3 @ w1.T
    loss = jnp.mean((features - h4) ** 2)
    return loss, h2, h4


if __name__ == "__main__":
    # Small deterministic problem: N nodes, number_of_labels input channels,
    # GATE_hidden_size_1 / GATE_hidden_size_2 hidden widths.
    N = 200                # number of nodes (not a tile multiple -> exercises padding)
    NUM_LABELS = 48        # input feature dim
    HID1 = 32              # GATE_hidden_size_1
    HID2 = 16              # GATE_hidden_size_2

    key = jax.random.PRNGKey(0)
    k_feat, k_w1, k_w2, k_as, k_ad = jax.random.split(key, 5)

    features = jax.random.normal(k_feat, (N, NUM_LABELS), dtype=jnp.float32)
    w1 = jax.random.normal(k_w1, (NUM_LABELS, HID1), dtype=jnp.float32) * 0.2
    w2 = jax.random.normal(k_w2, (HID1, HID2), dtype=jnp.float32) * 0.3
    att_src = jax.random.normal(k_as, (1, HID1), dtype=jnp.float32) * 0.2
    att_dst = jax.random.normal(k_ad, (1, HID1), dtype=jnp.float32) * 0.2

    # edge_index: bidirectional ring graph, materialized as a dense adjacency mask
    # adj[i, j] = 1 iff there is a message edge j -> i, plus self loops
    # (GATConv(add_self_loops=True)).
    idx = jnp.arange(N)
    src = jnp.concatenate([idx, (idx + 1) % N])
    dst = jnp.concatenate([(idx + 1) % N, idx])
    adj = jnp.zeros((N, N), dtype=jnp.float32).at[dst, src].set(1.0)
    adj = adj.at[idx, idx].set(1.0)

    loss, h2, h4 = passage_forward(features, adj, w1, w2, att_src, att_dst)
    jax.block_until_ready((loss, h2, h4))

    loss_ref, h2_ref, h4_ref = passage_reference(features, adj, w1, w2, att_src, att_dst)
    assert jnp.allclose(loss, loss_ref, rtol=1e-4, atol=1e-5), (loss, loss_ref)
    assert jnp.allclose(h2, h2_ref, rtol=1e-4, atol=1e-5)
    assert jnp.allclose(h4, h4_ref, rtol=1e-4, atol=1e-5)

    print("KERNEL_OK")
</pallas_src>

<mosaic_0001>
module attributes {stable_mosaic.version = 11 : i64} {
  func.func @_project_kernel(%arg0: i32, %arg1: memref<128x128xf32, #tpu.memory_space<vmem>>, %arg2: memref<128x128xf32, #tpu.memory_space<vmem>>, %arg3: memref<8x128xf32, #tpu.memory_space<vmem>>, %arg4: memref<1x128xf32, #tpu.memory_space<vmem>>, %arg5: memref<128x128xf32, #tpu.memory_space<vmem>>, %arg6: memref<8x128xf32, #tpu.memory_space<vmem>>, %arg7: memref<128x1xf32, #tpu.memory_space<vmem>>) attributes {dimension_semantics = [#tpu.dimension_semantics<parallel>], iteration_bounds = array<i64: 2>, scalar_prefetch = 0 : i64, scratch_operands = 0 : i64, tpu.core_type = #tpu.core_type<tc>, window_params = [{transform_indices = @transform_0, window_bounds = array<i64: 128, 128>}, {pipeline_mode = #tpu.pipeline_mode<synchronous>, transform_indices = @transform_1, window_bounds = array<i64: 128, 128>}, {pipeline_mode = #tpu.pipeline_mode<synchronous>, transform_indices = @transform_2, window_bounds = array<i64: 8, 128>}, {pipeline_mode = #tpu.pipeline_mode<synchronous>, transform_indices = @transform_3, window_bounds = array<i64: 1, 128>}, {transform_indices = @transform_4, window_bounds = array<i64: 128, 128>}, {transform_indices = @transform_5, window_bounds = array<i64: 8, 128>}, {transform_indices = @transform_6, window_bounds = array<i64: 128, 1>}]} {
    %c0 = arith.constant 0 : index
    %c0_0 = arith.constant 0 : index
    %0 = vector.load %arg1[%c0, %c0_0] : memref<128x128xf32, #tpu.memory_space<vmem>>, vector<128x128xf32>
    %c0_1 = arith.constant 0 : index
    %c0_2 = arith.constant 0 : index
    %1 = vector.load %arg2[%c0_1, %c0_2] : memref<128x128xf32, #tpu.memory_space<vmem>>, vector<128x128xf32>
    %cst = arith.constant dense<0.000000e+00> : vector<128x128xf32>
    %2 = tpu.matmul %0, %1, %cst {dimension_numbers = #tpu.dot_dimension_numbers<[1], [0], [0], [1], [0, 0, 1, 1], [], []>} : vector<128x128xf32>, vector<128x128xf32>, vector<128x128xf32> -> vector<128x128xf32>
    %c0_3 = arith.constant 0 : index
    %c0_4 = arith.constant 0 : index
    %3 = vector.load %arg5[%c0_3, %c0_4] : memref<128x128xf32, #tpu.memory_space<vmem>>, vector<128x128xf32>
    tpu.vector_store %arg5[%c0_3, %c0_4], %2 {strides = array<i32>} : memref<128x128xf32, #tpu.memory_space<vmem>>, vector<128x128xf32>,
    %c0_5 = arith.constant 0 : index
    %c0_6 = arith.constant 0 : index
    %4 = vector.load %arg3[%c0_5, %c0_6] : memref<8x128xf32, #tpu.memory_space<vmem>>, vector<8x128xf32>
    %cst_7 = arith.constant dense<0.000000e+00> : vector<8x128xf32>
    %5 = tpu.matmul %4, %2, %cst_7 {dimension_numbers = #tpu.dot_dimension_numbers<[1], [1], [0], [0], [0, 0, 1, 0], [], []>} : vector<8x128xf32>, vector<128x128xf32>, vector<8x128xf32> -> vector<8x128xf32>
    %c0_8 = arith.constant 0 : index
    %c0_9 = arith.constant 0 : index
    %6 = vector.load %arg6[%c0_8, %c0_9] : memref<8x128xf32, #tpu.memory_space<vmem>>, vector<8x128xf32>
    tpu.vector_store %arg6[%c0_8, %c0_9], %5 {strides = array<i32>} : memref<8x128xf32, #tpu.memory_space<vmem>>, vector<8x128xf32>,
    %c0_10 = arith.constant 0 : index
    %c0_11 = arith.constant 0 : index
    %7 = vector.load %arg4[%c0_10, %c0_11] : memref<1x128xf32, #tpu.memory_space<vmem>>, vector<1x128xf32>
    %8 = vector.broadcast %7 : vector<1x128xf32> to vector<128x128xf32>
    %9 = arith.mulf %2, %8 : vector<128x128xf32>
    %cst_12 = arith.constant dense<0.000000e+00> : vector<128xf32>
    %10 = vector.multi_reduction <add>, %9, %cst_12 [1] : vector<128x128xf32> to vector<128xf32>
    %11 = vector.shape_cast %10 : vector<128xf32> to vector<128x1xf32>
    %c0_13 = arith.constant 0 : index
    %c0_14 = arith.constant 0 : index
    %12 = vector.load %arg7[%c0_13, %c0_14] : memref<128x1xf32, #tpu.memory_space<vmem>>, vector<128x1xf32>
    tpu.vector_store %arg7[%c0_13, %c0_14], %11 {strides = array<i32>} : memref<128x1xf32, #tpu.memory_space<vmem>>, vector<128x1xf32>,
    return
  }
  func.func @transform_0(%arg0: i32) -> (i32, i32) {
    %c0_i32 = arith.constant 0 : i32
    %c0_i32_0 = arith.constant 0 : i32
    return %arg0, %c0_i32 : i32, i32
  }
  func.func @transform_1(%arg0: i32) -> (i32, i32) {
    %c0_i32 = arith.constant 0 : i32
    %c0_i32_0 = arith.constant 0 : i32
    %c0_i32_1 = arith.constant 0 : i32
    return %c0_i32, %c0_i32_0 : i32, i32
  }
  func.func @transform_2(%arg0: i32) -> (i32, i32) {
    %c0_i32 = arith.constant 0 : i32
    %c0_i32_0 = arith.constant 0 : i32
    %c0_i32_1 = arith.constant 0 : i32
    return %c0_i32, %c0_i32_0 : i32, i32
  }
  func.func @transform_3(%arg0: i32) -> (i32, i32) {
    %c0_i32 = arith.constant 0 : i32
    %c0_i32_0 = arith.constant 0 : i32
    %c0_i32_1 = arith.constant 0 : i32
    return %c0_i32, %c0_i32_0 : i32, i32
  }
  func.func @transform_4(%arg0: i32) -> (i32, i32) {
    %c0_i32 = arith.constant 0 : i32
    %c0_i32_0 = arith.constant 0 : i32
    return %arg0, %c0_i32 : i32, i32
  }
  func.func @transform_5(%arg0: i32) -> (i32, i32) {
    %c0_i32 = arith.constant 0 : i32
    %c0_i32_0 = arith.constant 0 : i32
    return %c0_i32, %arg0 : i32, i32
  }
  func.func @transform_6(%arg0: i32) -> (i32, i32) {
    %c0_i32 = arith.constant 0 : i32
    %c0_i32_0 = arith.constant 0 : i32
    return %arg0, %c0_i32 : i32, i32
  }
}

module attributes {stable_mosaic.version = 11 : i64} {
  func.func @_encode_kernel(%arg0: i32, %arg1: memref<128x256xi8, #tpu.memory_space<vmem>>, %arg2: memref<128x1xf32, #tpu.memory_space<vmem>>, %arg3: memref<8x256xf32, #tpu.memory_space<vmem>>, %arg4: memref<256x128xf32, #tpu.memory_space<vmem>>, %arg5: memref<128x128xf32, #tpu.memory_space<vmem>>, %arg6: memref<128x128xf32, #tpu.memory_space<vmem>>, %arg7: memref<128x128xf32, #tpu.memory_space<vmem>>, %arg8: memref<128x128xf32, #tpu.memory_space<vmem>>) attributes {dimension_semantics = [#tpu.dimension_semantics<parallel>], iteration_bounds = array<i64: 2>, scalar_prefetch = 0 : i64, scratch_operands = 0 : i64, tpu.core_type = #tpu.core_type<tc>, window_params = [{transform_indices = @transform_0, window_bounds = array<i64: 128, 256>}, {transform_indices = @transform_1, window_bounds = array<i64: 128, 1>}, {pipeline_mode = #tpu.pipeline_mode<synchronous>, transform_indices = @transform_2, window_bounds = array<i64: 8, 256>}, {pipeline_mode = #tpu.pipeline_mode<synchronous>, transform_indices = @transform_3, window_bounds = array<i64: 256, 128>}, {pipeline_mode = #tpu.pipeline_mode<synchronous>, transform_indices = @transform_4, window_bounds = array<i64: 128, 128>}, {pipeline_mode = #tpu.pipeline_mode<synchronous>, transform_indices = @transform_5, window_bounds = array<i64: 128, 128>}, {transform_indices = @transform_6, window_bounds = array<i64: 128, 128>}, {transform_indices = @transform_7, window_bounds = array<i64: 128, 128>}]} {
    %c0 = arith.constant 0 : index
    %c0_0 = arith.constant 0 : index
    %0 = vector.load %arg1[%c0, %c0_0] : memref<128x256xi8, #tpu.memory_space<vmem>>, vector<128x256xi8>
    %c0_1 = arith.constant 0 : index
    %c0_2 = arith.constant 0 : index
    %1 = vector.load %arg2[%c0_1, %c0_2] : memref<128x1xf32, #tpu.memory_space<vmem>>, vector<128x1xf32>
    %c0_3 = arith.constant 0 : index
    %c0_4 = arith.constant 0 : index
    %2 = vector.load %arg3[%c0_3, %c0_4] : memref<8x256xf32, #tpu.memory_space<vmem>>, vector<1x256xf32>
    %3 = vector.broadcast %1 : vector<128x1xf32> to vector<128x256xf32>
    %4 = vector.broadcast %2 : vector<1x256xf32> to vector<128x256xf32>
    %5 = arith.addf %3, %4 : vector<128x256xf32>
    %cst = arith.constant 2.000000e-01 : f32
    %6 = vector.broadcast %cst : f32 to vector<128x256xf32>
    %7 = arith.mulf %6, %5 : vector<128x256xf32>
    %8 = arith.maximumf %5, %7 : vector<128x256xf32>
    %9 = arith.sitofp %0 : vector<128x256xi8> to vector<128x256xf32>
    %cst_5 = arith.constant 0.000000e+00 : f32
    %10 = vector.broadcast %cst_5 : f32 to vector<128x256xf32>
    %11 = arith.cmpf ogt, %9, %10 : vector<128x256xf32>
    %cst_6 = arith.constant -1.000000e+30 : f32
    %12 = vector.broadcast %cst_6 : f32 to vector<128x256xf32>
    %13 = arith.select %11, %8, %12 : vector<128x256xi1>, vector<128x256xf32>
    %cst_7 = arith.constant dense<0xFF800000> : vector<128xf32>
    %14 = vector.multi_reduction <maximumf>, %13, %cst_7 [1] : vector<128x256xf32> to vector<128xf32>
    %15 = vector.shape_cast %14 : vector<128xf32> to vector<128x1xf32>
    %16 = vector.broadcast %15 : vector<128x1xf32> to vector<128x256xf32>
    %17 = arith.subf %13, %16 : vector<128x256xf32>
    %18 = math.exp %17 : vector<128x256xf32>
    %cst_8 = arith.constant dense<0.000000e+00> : vector<128xf32>
    %19 = vector.multi_reduction <add>, %18, %cst_8 [1] : vector<128x256xf32> to vector<128xf32>
    %20 = vector.shape_cast %19 : vector<128xf32> to vector<128x1xf32>
    %21 = tpu.reciprocal %20 : vector<128x1xf32> -> vector<128x1xf32>
    %22 = vector.broadcast %21 : vector<128x1xf32> to vector<128x256xf32>
    %23 = arith.mulf %18, %22 : vector<128x256xf32>
    %c0_9 = arith.constant 0 : index
    %c0_10 = arith.constant 0 : index
    %24 = vector.load %arg4[%c0_9, %c0_10] : memref<256x128xf32, #tpu.memory_space<vmem>>, vector<256x128xf32>
    %cst_11 = arith.constant dense<0.000000e+00> : vector<128x128xf32>
    %25 = tpu.matmul %23, %24, %cst_11 {dimension_numbers = #tpu.dot_dimension_numbers<[1], [0], [0], [1], [0, 0, 1, 1], [], []>} : vector<128x256xf32>, vector<256x128xf32>, vector<128x128xf32> -> vector<128x128xf32>
    %cst_12 = arith.constant 0.000000e+00 : f32
    %26 = vector.broadcast %cst_12 : f32 to vector<128x128xf32>
    %27 = arith.cmpf ogt, %25, %26 : vector<128x128xf32>
    %28 = math.exp %25 : vector<128x128xf32>
    %cst_13 = arith.constant 1.000000e+00 : f32
    %29 = vector.broadcast %cst_13 : f32 to vector<128x128xf32>
    %30 = arith.subf %28, %29 : vector<128x128xf32>
    %31 = arith.select %27, %25, %30 : vector<128x128xi1>, vector<128x128xf32>
    %c0_14 = arith.constant 0 : index
    %c0_15 = arith.constant 0 : index
    %32 = vector.load %arg5[%c0_14, %c0_15] : memref<128x128xf32, #tpu.memory_space<vmem>>, vector<128x128xf32>
    %cst_16 = arith.constant dense<0.000000e+00> : vector<128x128xf32>
    %33 = tpu.matmul %31, %32, %cst_16 {dimension_numbers = #tpu.dot_dimension_numbers<[1], [0], [0], [1], [0, 0, 1, 1], [], []>} : vector<128x128xf32>, vector<128x128xf32>, vector<128x128xf32> -> vector<128x128xf32>
    %34 = arith.mulf %33, %33 : vector<128x128xf32>
    %cst_17 = arith.constant dense<0.000000e+00> : vector<128xf32>
    %35 = vector.multi_reduction <add>, %34, %cst_17 [1] : vector<128x128xf32> to vector<128xf32>
    %36 = vector.shape_cast %35 : vector<128xf32> to vector<128x1xf32>
    %37 = math.sqrt %36 : vector<128x1xf32>
    %cst_18 = arith.constant 9.99999996E-13 : f32
    %38 = vector.broadcast %cst_18 : f32 to vector<128x1xf32>
    %39 = arith.maximumf %37, %38 : vector<128x1xf32>
    %40 = vector.broadcast %39 : vector<128x1xf32> to vector<128x128xf32>
    %41 = arith.divf %33, %40 : vector<128x128xf32>
    %c0_19 = arith.constant 0 : index
    %c0_20 = arith.constant 0 : index
    %42 = vector.load %arg7[%c0_19, %c0_20] : memref<128x128xf32, #tpu.memory_space<vmem>>, vector<128x128xf32>
    tpu.vector_store %arg7[%c0_19, %c0_20], %41 {strides = array<i32>} : memref<128x128xf32, #tpu.memory_space<vmem>>, vector<128x128xf32>,
    %c0_21 = arith.constant 0 : index
    %c0_22 = arith.constant 0 : index
    %43 = vector.load %arg6[%c0_21, %c0_22] : memref<128x128xf32, #tpu.memory_space<vmem>>, vector<128x128xf32>
    %cst_23 = arith.constant dense<0.000000e+00> : vector<128x128xf32>
    %44 = tpu.matmul %41, %43, %cst_23 {dimension_numbers = #tpu.dot_dimension_numbers<[1], [0], [0], [1], [0, 0, 1, 1], [], []>} : vector<128x128xf32>, vector<128x128xf32>, vector<128x128xf32> -> vector<128x128xf32>
    %c0_24 = arith.constant 0 : index
    %c0_25 = arith.constant 0 : index
    %45 = vector.load %arg8[%c0_24, %c0_25] : memref<128x128xf32, #tpu.memory_space<vmem>>, vector<128x128xf32>
    tpu.vector_store %arg8[%c0_24, %c0_25], %44 {strides = array<i32>} : memref<128x128xf32, #tpu.memory_space<vmem>>, vector<128x128xf32>,
    return
  }
  func.func @transform_0(%arg0: i32) -> (i32, i32) {
    %c0_i32 = arith.constant 0 : i32
    %c0_i32_0 = arith.constant 0 : i32
    return %arg0, %c0_i32 : i32, i32
  }
  func.func @transform_1(%arg0: i32) -> (i32, i32) {
    %c0_i32 = arith.constant 0 : i32
    %c0_i32_0 = arith.constant 0 : i32
    return %arg0, %c0_i32 : i32, i32
  }
  func.func @transform_2(%arg0: i32) -> (i32, i32) {
    %c0_i32 = arith.constant 0 : i32
    %c0_i32_0 = arith.constant 0 : i32
    %c0_i32_1 = arith.constant 0 : i32
    return %c0_i32, %c0_i32_0 : i32, i32
  }
  func.func @transform_3(%arg0: i32) -> (i32, i32) {
    %c0_i32 = arith.constant 0 : i32
    %c0_i32_0 = arith.constant 0 : i32
    %c0_i32_1 = arith.constant 0 : i32
    return %c0_i32, %c0_i32_0 : i32, i32
  }
  func.func @transform_4(%arg0: i32) -> (i32, i32) {
    %c0_i32 = arith.constant 0 : i32
    %c0_i32_0 = arith.constant 0 : i32
    %c0_i32_1 = arith.constant 0 : i32
    return %c0_i32, %c0_i32_0 : i32, i32
  }
  func.func @transform_5(%arg0: i32) -> (i32, i32) {
    %c0_i32 = arith.constant 0 : i32
    %c0_i32_0 = arith.constant 0 : i32
    %c0_i32_1 = arith.constant 0 : i32
    return %c0_i32, %c0_i32_0 : i32, i32
  }
  func.func @transform_6(%arg0: i32) -> (i32, i32) {
    %c0_i32 = arith.constant 0 : i32
    %c0_i32_0 = arith.constant 0 : i32
    return %arg0, %c0_i32 : i32, i32
  }
  func.func @transform_7(%arg0: i32) -> (i32, i32) {
    %c0_i32 = arith.constant 0 : i32
    %c0_i32_0 = arith.constant 0 : i32
    return %arg0, %c0_i32 : i32, i32
  }
}

module attributes {stable_mosaic.version = 11 : i64} {
  func.func @_decode_kernel(%arg0: i32, %arg1: memref<128x256xi8, #tpu.memory_space<vmem>>, %arg2: memref<128x1xf32, #tpu.memory_space<vmem>>, %arg3: memref<8x256xf32, #tpu.memory_space<vmem>>, %arg4: memref<256x128xf32, #tpu.memory_space<vmem>>, %arg5: memref<128x128xf32, #tpu.memory_space<vmem>>, %arg6: memref<128x128xf32, #tpu.memory_space<vmem>>, %arg7: memref<128x128xf32, #tpu.memory_space<vmem>>, %arg8: memref<1x1xf32, #tpu.memory_space<smem>>, %arg9: memref<1xf32, #tpu.memory_space<smem>>) attributes {dimension_semantics = [#tpu.dimension_semantics<arbitrary>], iteration_bounds = array<i64: 2>, scalar_prefetch = 0 : i64, scratch_operands = 1 : i64, tpu.core_type = #tpu.core_type<tc>, window_params = [{transform_indices = @transform_0, window_bounds = array<i64: 128, 256>}, {transform_indices = @transform_1, window_bounds = array<i64: 128, 1>}, {pipeline_mode = #tpu.pipeline_mode<synchronous>, transform_indices = @transform_2, window_bounds = array<i64: 8, 256>}, {pipeline_mode = #tpu.pipeline_mode<synchronous>, transform_indices = @transform_3, window_bounds = array<i64: 256, 128>}, {pipeline_mode = #tpu.pipeline_mode<synchronous>, transform_indices = @transform_4, window_bounds = array<i64: 128, 128>}, {transform_indices = @transform_5, window_bounds = array<i64: 128, 128>}, {transform_indices = @transform_6, window_bounds = array<i64: 128, 128>}, {transform_indices = @transform_7, window_bounds = array<i64: 1, 1>}]} {
    %c0 = arith.constant 0 : index
    %c0_0 = arith.constant 0 : index
    %0 = vector.load %arg1[%c0, %c0_0] : memref<128x256xi8, #tpu.memory_space<vmem>>, vector<128x256xi8>
    %c0_1 = arith.constant 0 : index
    %c0_2 = arith.constant 0 : index
    %1 = vector.load %arg2[%c0_1, %c0_2] : memref<128x1xf32, #tpu.memory_space<vmem>>, vector<128x1xf32>
    %c0_3 = arith.constant 0 : index
    %c0_4 = arith.constant 0 : index
    %2 = vector.load %arg3[%c0_3, %c0_4] : memref<8x256xf32, #tpu.memory_space<vmem>>, vector<1x256xf32>
    %3 = vector.broadcast %1 : vector<128x1xf32> to vector<128x256xf32>
    %4 = vector.broadcast %2 : vector<1x256xf32> to vector<128x256xf32>
    %5 = arith.addf %3, %4 : vector<128x256xf32>
    %cst = arith.constant 2.000000e-01 : f32
    %6 = vector.broadcast %cst : f32 to vector<128x256xf32>
    %7 = arith.mulf %6, %5 : vector<128x256xf32>
    %8 = arith.maximumf %5, %7 : vector<128x256xf32>
    %9 = arith.sitofp %0 : vector<128x256xi8> to vector<128x256xf32>
    %cst_5 = arith.constant 0.000000e+00 : f32
    %10 = vector.broadcast %cst_5 : f32 to vector<128x256xf32>
    %11 = arith.cmpf ogt, %9, %10 : vector<128x256xf32>
    %cst_6 = arith.constant -1.000000e+30 : f32
    %12 = vector.broadcast %cst_6 : f32 to vector<128x256xf32>
    %13 = arith.select %11, %8, %12 : vector<128x256xi1>, vector<128x256xf32>
    %cst_7 = arith.constant dense<0xFF800000> : vector<128xf32>
    %14 = vector.multi_reduction <maximumf>, %13, %cst_7 [1] : vector<128x256xf32> to vector<128xf32>
    %15 = vector.shape_cast %14 : vector<128xf32> to vector<128x1xf32>
    %16 = vector.broadcast %15 : vector<128x1xf32> to vector<128x256xf32>
    %17 = arith.subf %13, %16 : vector<128x256xf32>
    %18 = math.exp %17 : vector<128x256xf32>
    %cst_8 = arith.constant dense<0.000000e+00> : vector<128xf32>
    %19 = vector.multi_reduction <add>, %18, %cst_8 [1] : vector<128x256xf32> to vector<128xf32>
    %20 = vector.shape_cast %19 : vector<128xf32> to vector<128x1xf32>
    %21 = tpu.reciprocal %20 : vector<128x1xf32> -> vector<128x1xf32>
    %22 = vector.broadcast %21 : vector<128x1xf32> to vector<128x256xf32>
    %23 = arith.mulf %18, %22 : vector<128x256xf32>
    %c0_9 = arith.constant 0 : index
    %c0_10 = arith.constant 0 : index
    %24 = vector.load %arg4[%c0_9, %c0_10] : memref<256x128xf32, #tpu.memory_space<vmem>>, vector<256x128xf32>
    %cst_11 = arith.constant dense<0.000000e+00> : vector<128x128xf32>
    %25 = tpu.matmul %23, %24, %cst_11 {dimension_numbers = #tpu.dot_dimension_numbers<[1], [0], [0], [1], [0, 0, 1, 1], [], []>} : vector<128x256xf32>, vector<256x128xf32>, vector<128x128xf32> -> vector<128x128xf32>
    %cst_12 = arith.constant 0.000000e+00 : f32
    %26 = vector.broadcast %cst_12 : f32 to vector<128x128xf32>
    %27 = arith.cmpf ogt, %25, %26 : vector<128x128xf32>
    %28 = math.exp %25 : vector<128x128xf32>
    %cst_13 = arith.constant 1.000000e+00 : f32
    %29 = vector.broadcast %cst_13 : f32 to vector<128x128xf32>
    %30 = arith.subf %28, %29 : vector<128x128xf32>
    %31 = arith.select %27, %25, %30 : vector<128x128xi1>, vector<128x128xf32>
    %c0_14 = arith.constant 0 : index
    %c0_15 = arith.constant 0 : index
    %32 = vector.load %arg5[%c0_14, %c0_15] : memref<128x128xf32, #tpu.memory_space<vmem>>, vector<128x128xf32>
    %cst_16 = arith.constant dense<0.000000e+00> : vector<128x128xf32>
    %33 = tpu.matmul %31, %32, %cst_16 {dimension_numbers = #tpu.dot_dimension_numbers<[1], [0], [0], [1], [0, 0, 1, 1], [], []>} : vector<128x128xf32>, vector<128x128xf32>, vector<128x128xf32> -> vector<128x128xf32>
    %c0_17 = arith.constant 0 : index
    %c0_18 = arith.constant 0 : index
    %34 = vector.load %arg7[%c0_17, %c0_18] : memref<128x128xf32, #tpu.memory_space<vmem>>, vector<128x128xf32>
    tpu.vector_store %arg7[%c0_17, %c0_18], %33 {strides = array<i32>} : memref<128x128xf32, #tpu.memory_space<vmem>>, vector<128x128xf32>,
    %c0_19 = arith.constant 0 : index
    %c0_20 = arith.constant 0 : index
    %35 = vector.load %arg6[%c0_19, %c0_20] : memref<128x128xf32, #tpu.memory_space<vmem>>, vector<128x128xf32>
    %36 = arith.subf %35, %33 : vector<128x128xf32>
    %37 = arith.mulf %36, %36 : vector<128x128xf32>
    %38 = vector.shape_cast %37 : vector<128x128xf32> to vector<1x128x128xf32>
    %cst_21 = arith.constant dense<0.000000e+00> : vector<1xf32>
    %39 = vector.multi_reduction <add>, %38, %cst_21 [1, 2] : vector<1x128x128xf32> to vector<1xf32>
    %40 = vector.shape_cast %39 : vector<1xf32> to vector<1x1x1xf32>
    %41 = vector.extract %40[0, 0, 0] : f32 from vector<1x1x1xf32>
    %c0_i32 = arith.constant 0 : i32
    %42 = arith.cmpi eq, %arg0, %c0_i32 : i32
    %43 = arith.extui %42 : i1 to i32
    %c0_i32_22 = arith.constant 0 : i32
    %44 = arith.cmpi ne, %43, %c0_i32_22 : i32
    scf.if %44 {
      %cst_26 = arith.constant 0.000000e+00 : f32
      %c0_27 = arith.constant 0 : index
      %51 = memref.load %arg9[%c0_27] : memref<1xf32, #tpu.memory_space<smem>>
      memref.store %cst_26, %arg9[%c0_27] : memref<1xf32, #tpu.memory_space<smem>>
    } else {
    }
    %c0_23 = arith.constant 0 : index
    %45 = memref.load %arg9[%c0_23] : memref<1xf32, #tpu.memory_space<smem>>
    %46 = arith.addf %45, %41 : f32
    %c0_24 = arith.constant 0 : index
    %47 = memref.load %arg9[%c0_24] : memref<1xf32, #tpu.memory_space<smem>>
    memref.store %46, %arg9[%c0_24] : memref<1xf32, #tpu.memory_space<smem>>
    %c1_i32 = arith.constant 1 : i32
    %48 = arith.cmpi eq, %arg0, %c1_i32 : i32
    %49 = arith.extui %48 : i1 to i32
    %c0_i32_25 = arith.constant 0 : i32
    %50 = arith.cmpi ne, %49, %c0_i32_25 : i32
    scf.if %50 {
      %c0_26 = arith.constant 0 : index
      %51 = memref.load %arg9[%c0_26] : memref<1xf32, #tpu.memory_space<smem>>
      %cst_27 = arith.constant 1.04166669E-4 : f32
      %52 = arith.mulf %51, %cst_27 : f32
      %c0_28 = arith.constant 0 : index
      %c0_29 = arith.constant 0 : index
      %53 = memref.load %arg8[%c0_28, %c0_29] : memref<1x1xf32, #tpu.memory_space<smem>>
      memref.store %52, %arg8[%c0_28, %c0_29] : memref<1x1xf32, #tpu.memory_space<smem>>
    } else {
    }
    return
  }
  func.func @transform_0(%arg0: i32) -> (i32, i32) {
    %c0_i32 = arith.constant 0 : i32
    %c0_i32_0 = arith.constant 0 : i32
    return %arg0, %c0_i32 : i32, i32
  }
  func.func @transform_1(%arg0: i32) -> (i32, i32) {
    %c0_i32 = arith.constant 0 : i32
    %c0_i32_0 = arith.constant 0 : i32
    return %arg0, %c0_i32 : i32, i32
  }
  func.func @transform_2(%arg0: i32) -> (i32, i32) {
    %c0_i32 = arith.constant 0 : i32
    %c0_i32_0 = arith.constant 0 : i32
    %c0_i32_1 = arith.constant 0 : i32
    return %c0_i32, %c0_i32_0 : i32, i32
  }
  func.func @transform_3(%arg0: i32) -> (i32, i32) {
    %c0_i32 = arith.constant 0 : i32
    %c0_i32_0 = arith.constant 0 : i32
    %c0_i32_1 = arith.constant 0 : i32
    return %c0_i32, %c0_i32_0 : i32, i32
  }
  func.func @transform_4(%arg0: i32) -> (i32, i32) {
    %c0_i32 = arith.constant 0 : i32
    %c0_i32_0 = arith.constant 0 : i32
    %c0_i32_1 = arith.constant 0 : i32
    return %c0_i32, %c0_i32_0 : i32, i32
  }
  func.func @transform_5(%arg0: i32) -> (i32, i32) {
    %c0_i32 = arith.constant 0 : i32
    %c0_i32_0 = arith.constant 0 : i32
    return %arg0, %c0_i32 : i32, i32
  }
  func.func @transform_6(%arg0: i32) -> (i32, i32) {
    %c0_i32 = arith.constant 0 : i32
    %c0_i32_0 = arith.constant 0 : i32
    return %arg0, %c0_i32 : i32, i32
  }
  func.func @transform_7(%arg0: i32) -> (i32, i32) {
    %c0_i32 = arith.constant 0 : i32
    %c0_i32_0 = arith.constant 0 : i32
    %c0_i32_1 = arith.constant 0 : i32
    return %c0_i32, %c0_i32_0 : i32, i32
  }
}

</mosaic_0001>

<llo_original>
// kernel: passage_forward.3
$region0: #{passage_forward.3}
  #allocation0 [shape = 'u32[]', space=smem, size = 0x4, offset = 0x4, fixed_abs, tag = 'smem constant byte address 0x4 - core index']
  #allocation1 [shape = 'u32[144,128]{1,0:T(1,128)}', space=vmem, size = 0x12000, scoped, tag = 'internal scratch']
  %s0 = inlined_call_operand.hbm [shape: f32[256,128], index: 0, kind: input, shape index: {}]
  %s1 = inlined_call_operand.hbm [shape: f32[128,128], index: 1, kind: input, shape index: {}]
  %s2 = inlined_call_operand.hbm [shape: f32[8,128], index: 2, kind: input, shape index: {}]
  %s3 = inlined_call_operand.hbm [shape: f32[1,128], index: 3, kind: input, shape index: {}]
  %s4 = inlined_call_operand.hbm [shape: f32[256,128], index: 4, kind: output, shape index: {0}]
  %s5 = inlined_call_operand.hbm [shape: f32[8,256], index: 5, kind: output, shape index: {1}]
  %s6 = inlined_call_operand.hbm [shape: f32[256,1], index: 6, kind: output, shape index: {2}]
  %7 = xla_tuple %s4, %s5, %s6
  %s8 = sld [smem:[#allocation0]]
  $region81: #{passage_forward.3} parent=0
    _
  %s10 = ssub.s32 1, %s8
  %s11 = scalar_select 0, %s10, %s8
  $region1: #{passage_forward.3} parent=0
    #allocation2 [shape = 'u8[131072]{0}', space=vmem, size = 0x20000, scoped, tag = 'input window, operand 0']
    #allocation3 [shape = 's32[2]{0}', space=sflag, size = 0x8, scoped, tag = 'scoped memory for passage_forward.3']
    #allocation4 [shape = 's32[2]{0}', space=sflag, size = 0x8, scoped, tag = 'scoped memory for passage_forward.3']
    #allocation5 [shape = 'u8[65536]{0}', space=vmem, size = 0x10000, scoped, tag = 'input window, operand 1, single buffered']
    #allocation6 [shape = 's32[1]{0}', space=sflag, size = 0x4, scoped, tag = 'scoped memory for passage_forward.3']
    #allocation7 [shape = 'u8[4096]{0}', space=vmem, size = 0x1000, scoped, tag = 'input window, operand 2, single buffered']
    #allocation8 [shape = 'u8[512]{0}', space=vmem, size = 0x400, scoped, tag = 'input window, operand 3, single buffered']
    #allocation9 [shape = 's32[1]{0}', space=sflag, size = 0x4, scoped, tag = 'scoped memory for passage_forward.3']
    #allocation10 [shape = 'u8[131072]{0}', space=vmem, size = 0x20000, scoped, tag = 'output window, operand 0']
    #allocation11 [shape = 'u8[8192]{0}', space=vmem, size = 0x2000, scoped, tag = 'output window, operand 1']
    #allocation12 [shape = 's32[2]{0}', space=sflag, size = 0x8, scoped, tag = 'scoped memory for passage_forward.3']
    #allocation13 [shape = 'u8[131072]{0}', space=vmem, size = 0x20000, scoped, tag = 'output window, operand 2']
    %12 = vsyncpa [#allocation3], 0
    %s13 = scalar_lea.sflag [#allocation3], 1
    %14 = vsyncpa %s13, 0
    %15 = vsyncpa [#allocation6], 0
    %16 = vsyncpa [#allocation9], 0
    %17 = vsyncpa [#allocation4], 0
    %s18 = scalar_lea.sflag [#allocation4], 1
    %19 = vsyncpa %s18, 0
    %20 = vsyncpa [#allocation12], 0
    %s21 = scalar_lea.sflag [#allocation12], 1
    %22 = vsyncpa %s21, 0
    loop: start=0, step=1, limit=4
    $region2: #{passage_forward.3} parent=1 // loop_pre_header
      _
    $region3: #{passage_forward.3} parent=1 // loop_header
      %s24 = sphi 0, %s28
      %p25 = scmp.ge.s32.totalorder %s24, 4
      %s34 = sphi 0, %s36
      %s37 = sphi 0, %s34
      %s38 = sphi 0, %s37
      %s54 = sphi 0, %s38
      %s58 = sphi 0, %s58
      %s60 = sphi 0, %s58
      %s61 = sphi 0, %s60
      %s75 = sphi 0, %s61
      %s79 = sphi 0, %s79
      %s81 = sphi 0, %s79
      %s82 = sphi 0, %s81
      %s96 = sphi 0, %s82
      %s100 = sphi 0, %s100
      %s102 = sphi 0, %s100
      %s103 = sphi 0, %s102
      %s117 = sphi 0, %s103
      %s123 = sphi 0, %s125
      %s126 = sphi 0, %s123
      %s127 = sphi 0, %s126
      %s143 = sphi 0, %s127
      %s149 = sphi 0, %s151
      %s152 = sphi 0, %s149
      %s153 = sphi 0, %s152
      %s169 = sphi 0, %s153
      %s175 = sphi 0, %s177
      %s178 = sphi 0, %s175
      %s179 = sphi 0, %s178
      %s195 = sphi 0, %s179
    $region4: #{passage_forward.3} parent=1 // loop_header_branch
      %27 = sbr.rel (%p25) target = $region8
    $region5: #{passage_forward.3} parent=1 // loop_body
      %s29 = ssub.s32 %s24, 1
      %s30 = ssub.s32 %s24, 2
      %s31 = sadd.s32 %s24, 1
      %s32 = ssub.s32 %s24, %s31
      %p33 = scmp.eq.s32.totalorder %s32, 0
      %s35 = sadd.s32 %s34, 1
      %s36 = scalar_select %p33, %s34, %s35
      %p39 = pneg %p33
      %p40 = scmp.eq.s32.totalorder %s24, 1
      %p41 = por %p39, %p40
      %p42 = scmp.ne.s32.totalorder %s34, %s37
      %p43 = scmp.eq.s32.totalorder %s24, 0
      %p44 = por %p42, %p43
      %p45 = scmp.ne.s32.totalorder %s34, %s37
      %p46 = scmp.eq.s32.totalorder %s29, 1
      %p47 = por %p45, %p46
      %p48 = scmp.ne.s32.totalorder %s37, %s38
      %p49 = scmp.eq.s32.totalorder %s29, 0
      %p50 = por %p48, %p49
      %p51 = scmp.ne.s32.totalorder %s37, %s38
      %p52 = scmp.eq.s32.totalorder %s30, 1
      %p53 = por %p51, %p52
      %p55 = scmp.ne.s32.totalorder %s38, %s54
      %p56 = scmp.eq.s32.totalorder %s30, 0
      %p57 = por %p55, %p56
      %s59 = sadd.s32 %s58, 1
      %p62 = scmp.eq.s32.totalorder %s24, 1
      %p63 = scmp.ne.s32.totalorder %s58, %s60
      %p64 = scmp.eq.s32.totalorder %s24, 0
      %p65 = por %p63, %p64
      %p66 = scmp.ne.s32.totalorder %s58, %s60
      %p67 = scmp.eq.s32.totalorder %s29, 1
      %p68 = por %p66, %p67
      %p69 = scmp.ne.s32.totalorder %s60, %s61
      %p70 = scmp.eq.s32.totalorder %s29, 0
      %p71 = por %p69, %p70
      %p72 = scmp.ne.s32.totalorder %s60, %s61
      %p73 = scmp.eq.s32.totalorder %s30, 1
      %p74 = por %p72, %p73
      %p76 = scmp.ne.s32.totalorder %s61, %s75
      %p77 = scmp.eq.s32.totalorder %s30, 0
      %p78 = por %p76, %p77
      %s80 = sadd.s32 %s79, 1
      %p83 = scmp.eq.s32.totalorder %s24, 1
      %p84 = scmp.ne.s32.totalorder %s79, %s81
      %p85 = scmp.eq.s32.totalorder %s24, 0
      %p86 = por %p84, %p85
      %p87 = scmp.ne.s32.totalorder %s79, %s81
      %p88 = scmp.eq.s32.totalorder %s29, 1
      %p89 = por %p87, %p88
      %p90 = scmp.ne.s32.totalorder %s81, %s82
      %p91 = scmp.eq.s32.totalorder %s29, 0
      %p92 = por %p90, %p91
      %p93 = scmp.ne.s32.totalorder %s81, %s82
      %p94 = scmp.eq.s32.totalorder %s30, 1
      %p95 = por %p93, %p94
      %p97 = scmp.ne.s32.totalorder %s82, %s96
      %p98 = scmp.eq.s32.totalorder %s30, 0
      %p99 = por %p97, %p98
      %s101 = sadd.s32 %s100, 1
      %p104 = scmp.eq.s32.totalorder %s24, 1
      %p105 = scmp.ne.s32.totalorder %s100, %s102
      %p106 = scmp.eq.s32.totalorder %s24, 0
      %p107 = por %p105, %p106
      %p108 = scmp.ne.s32.totalorder %s100, %s102
      %p109 = scmp.eq.s32.totalorder %s29, 1
      %p110 = por %p108, %p109
      %p111 = scmp.ne.s32.totalorder %s102, %s103
      %p112 = scmp.eq.s32.totalorder %s29, 0
      %p113 = por %p111, %p112
      %p114 = scmp.ne.s32.totalorder %s102, %s103
      %p115 = scmp.eq.s32.totalorder %s30, 1
      %p116 = por %p114, %p115
      %p118 = scmp.ne.s32.totalorder %s103, %s117
      %p119 = scmp.eq.s32.totalorder %s30, 0
      %p120 = por %p118, %p119
      %s121 = ssub.s32 %s24, %s31
      %p122 = scmp.eq.s32.totalorder %s121, 0
      %s124 = sadd.s32 %s123, 1
      %s125 = scalar_select %p122, %s123, %s124
      %p128 = pneg %p122
      %p129 = scmp.eq.s32.totalorder %s24, 1
      %p130 = por %p128, %p129
      %p131 = scmp.ne.s32.totalorder %s123, %s126
      %p132 = scmp.eq.s32.totalorder %s24, 0
      %p133 = por %p131, %p132
      %p134 = scmp.ne.s32.totalorder %s123, %s126
      %p135 = scmp.eq.s32.totalorder %s29, 1
      %p136 = por %p134, %p135
      %p137 = scmp.ne.s32.totalorder %s126, %s127
      %p138 = scmp.eq.s32.totalorder %s29, 0
      %p139 = por %p137, %p138
      %p140 = scmp.ne.s32.totalorder %s126, %s127
      %p141 = scmp.eq.s32.totalorder %s30, 1
      %p142 = por %p140, %p141
      %p144 = scmp.ne.s32.totalorder %s127, %s143
      %p145 = scmp.eq.s32.totalorder %s30, 0
      %p146 = por %p144, %p145
      %s147 = ssub.s32 %s24, %s31
      %p148 = scmp.eq.s32.totalorder %s147, 0
      %s150 = sadd.s32 %s149, 1
      %s151 = scalar_select %p148, %s149, %s150
      %p154 = pneg %p148
      %p155 = scmp.eq.s32.totalorder %s24, 1
      %p156 = por %p154, %p155
      %p157 = scmp.ne.s32.totalorder %s149, %s152
      %p158 = scmp.eq.s32.totalorder %s24, 0
      %p159 = por %p157, %p158
      %p160 = scmp.ne.s32.totalorder %s149, %s152
      %p161 = scmp.eq.s32.totalorder %s29, 1
      %p162 = por %p160, %p161
      %p163 = scmp.ne.s32.totalorder %s152, %s153
      %p164 = scmp.eq.s32.totalorder %s29, 0
      %p165 = por %p163, %p164
      %p166 = scmp.ne.s32.totalorder %s152, %s153
      %p167 = scmp.eq.s32.totalorder %s30, 1
      %p168 = por %p166, %p167
      %p170 = scmp.ne.s32.totalorder %s153, %s169
      %p171 = scmp.eq.s32.totalorder %s30, 0
      %p172 = por %p170, %p171
      %s173 = ssub.s32 %s24, %s31
      %p174 = scmp.eq.s32.totalorder %s173, 0
      %s176 = sadd.s32 %s175, 1
      %s177 = scalar_select %p174, %s175, %s176
      %p180 = pneg %p174
      %p181 = scmp.eq.s32.totalorder %s24, 1
      %p182 = por %p180, %p181
      %p183 = scmp.ne.s32.totalorder %s175, %s178
      %p184 = scmp.eq.s32.totalorder %s24, 0
      %p185 = por %p183, %p184
      %p186 = scmp.ne.s32.totalorder %s175, %s178
      %p187 = scmp.eq.s32.totalorder %s29, 1
      %p188 = por %p186, %p187
      %p189 = scmp.ne.s32.totalorder %s178, %s179
      %p190 = scmp.eq.s32.totalorder %s29, 0
      %p191 = por %p189, %p190
      %p192 = scmp.ne.s32.totalorder %s178, %s179
      %p193 = scmp.eq.s32.totalorder %s30, 1
      %p194 = por %p192, %p193
      %p196 = scmp.ne.s32.totalorder %s179, %s195
      %p197 = scmp.eq.s32.totalorder %s30, 0
      %p198 = por %p196, %p197
      %p199 = scmp.le.s32.totalorder 1, %s24
      %p200 = scmp.lt.s32.totalorder %s24, 3
      %p201 = pnand %p199, %p200
      %p202 = pneg %p201
      // Predicated region
      $region9: #{passage_forward.3} parent=5 // pred_check
        _
      $region10: #{passage_forward.3} parent=5 // pred_check_branch
        %204 = sbr.rel (%p201) target = $region12
      $region11: #{passage_forward.3} parent=5 // pred_region
        %s205 = ssub.s32 %s24, 1
        // Predicated region
        $region13: #{passage_forward.3} parent=11 // pred_check
          %p206 = pneg %p71
        $region14: #{passage_forward.3} parent=11 // pred_check_branch
          %208 = sbr.rel (%p206) target = $region16
        $region15: #{passage_forward.3} parent=11 // pred_region
          %s210 = ssub.s32 2048, 2048
          %211 = vsyncadd [#allocation6], %s210
          %s212 = sshll.u32 [#allocation5], 4
          %s213 = int_to_ptr.vmem [resolvable:$true] %s212
          %218 = dma.hbm_to_vmem [thread:$0]  %s1, 2048, %s213, [#allocation6], 128, 128, 8
        $region16: #{passage_forward.3} parent=11 // pred_fallthru
          _
        // Predicated region
        $region17: #{passage_forward.3} parent=11 // pred_check
          %p219 = pneg %p92
        $region18: #{passage_forward.3} parent=11 // pred_check_branch
          %221 = sbr.rel (%p219) target = $region20
        $region19: #{passage_forward.3} parent=11 // pred_region
          %s223 = ssub.s32 128, 128
          %224 = vsyncadd [#allocation6], %s223
          %s226 = sshll.u32 [#allocation7], 4
          %s227 = int_to_ptr.vmem [resolvable:$true] %s226
          %229 = dma.hbm_to_vmem [thread:$0]  %s2, 128, %s227, [#allocation6]
        $region20: #{passage_forward.3} parent=11 // pred_fallthru
          _
        // Predicated region
        $region21: #{passage_forward.3} parent=11 // pred_check
          %p230 = pneg %p113
        $region22: #{passage_forward.3} parent=11 // pred_check_branch
          %232 = sbr.rel (%p230) target = $region24
        $region23: #{passage_forward.3} parent=11 // pred_region
          %s234 = ssub.s32 16, 16
          %235 = vsyncadd [#allocation9], %s234
          %s237 = sshll.u32 [#allocation8], 4
          %s238 = int_to_ptr.vmem [resolvable:$true] %s237
          %240 = dma.hbm_to_vmem [thread:$0]  %s3, 16, %s238, [#allocation9]
        $region24: #{passage_forward.3} parent=11 // pred_fallthru
          _
      $region12: #{passage_forward.3} parent=5 // pred_fallthru
        _
      %p241 = scmp.lt.s32.totalorder %s24, 2
      // Predicated region
      $region25: #{passage_forward.3} parent=5 // pred_check
        %p242 = pneg %p241
      $region26: #{passage_forward.3} parent=5 // pred_check_branch
        %244 = sbr.rel (%p242) target = $region28
      $region27: #{passage_forward.3} parent=5 // pred_region
        // Predicated region
        $region29: #{passage_forward.3} parent=27 // pred_check
          %p245 = pneg %p44
        $region30: #{passage_forward.3} parent=27 // pred_check_branch
          %247 = sbr.rel (%p245) target = $region32
        $region31: #{passage_forward.3} parent=27 // pred_region
          %s248 = sand.u32 %s34, 1
          %s249 = scalar_lea.sflag [#allocation3], %s248
          %s250 = sand.u32 %s34, 1
          %s251 = smul.addr %s250, 128
          %s252 = scalar_lea.vmem [#allocation2], %s251
          %s253 = smul.u32 16, %s24
          %s255 = ssub.s32 2048, 2048
          %256 = vsyncadd %s249, %s255
          %s257 = smul.addr %s253, 128
          %s258 = scalar_lea.hbm %s0, %s257
          %s259 = sshll.u32 %s252, 4
          %s260 = int_to_ptr.vmem [resolvable:$true] %s259
          %265 = dma.hbm_to_vmem [thread:$0]  %s258, 2048, %s260, %s249, 128, 128, 8
        $region32: #{passage_forward.3} parent=27 // pred_fallthru
          _
      $region28: #{passage_forward.3} parent=5 // pred_fallthru
        _
      %p266 = scmp.le.s32.totalorder 1, %s24
      %p267 = scmp.lt.s32.totalorder %s24, 3
      %p268 = pnand %p266, %p267
      %p269 = pneg %p268
      // Predicated region
      $region33: #{passage_forward.3} parent=5 // pred_check
        _
      $region34: #{passage_forward.3} parent=5 // pred_check_branch
        %271 = sbr.rel (%p268) target = $region36
      $region35: #{passage_forward.3} parent=5 // pred_region
        %s272 = ssub.s32 %s24, 1
        %s273 = sand.u32 %s37, 1
        %s274 = scalar_lea.sflag [#allocation3], %s273
        %s275 = sand.u32 %s37, 1
        %s276 = smul.addr %s275, 128
        %s277 = scalar_lea.vmem [#allocation2], %s276
        // Predicated region
        $region37: #{passage_forward.3} parent=35 // pred_check
          %p278 = pneg %p50
        $region38: #{passage_forward.3} parent=35 // pred_check_branch
          %280 = sbr.rel (%p278) target = $region40
        $region39: #{passage_forward.3} parent=35 // pred_region
          %281 = dma.done %s274, 2048
        $region40: #{passage_forward.3} parent=35 // pred_fallthru
          _
        // Predicated region
        $region41: #{passage_forward.3} parent=35 // pred_check
          %p282 = pneg %p71
        $region42: #{passage_forward.3} parent=35 // pred_check_branch
          %284 = sbr.rel (%p282) target = $region44
        $region43: #{passage_forward.3} parent=35 // pred_region
          %285 = dma.done [#allocation6], 2048
        $region44: #{passage_forward.3} parent=35 // pred_fallthru
          _
        // Predicated region
        $region45: #{passage_forward.3} parent=35 // pred_check
          %p286 = pneg %p92
        $region46: #{passage_forward.3} parent=35 // pred_check_branch
          %288 = sbr.rel (%p286) target = $region48
        $region47: #{passage_forward.3} parent=35 // pred_region
          %289 = dma.done [#allocation6], 128
        $region48: #{passage_forward.3} parent=35 // pred_fallthru
          _
        // Predicated region
        $region49: #{passage_forward.3} parent=35 // pred_check
          %p290 = pneg %p113
        $region50: #{passage_forward.3} parent=35 // pred_check_branch
          %292 = sbr.rel (%p290) target = $region52
        $region51: #{passage_forward.3} parent=35 // pred_region
          %293 = dma.done [#allocation9], 16
        $region52: #{passage_forward.3} parent=35 // pred_fallthru
          _
        %s294 = sand.u32 %s37, 1
        %s295 = scalar_lea.sflag [#allocation3], %s294
        %s296 = sand.u32 %s37, 1
        %s297 = smul.addr %s296, 128
        %s298 = scalar_lea.vmem [#allocation2], %s297
        %p299 = pneg %p50
        %p300 = pneg %p47
        %p301 = pneg %p71
        %p302 = pneg %p68
        %p303 = pneg %p92
        %p304 = pneg %p89
        %p305 = pneg %p113
        %p306 = pneg %p110
        %p307 = pneg %p139
        %p308 = pneg %p136
        %s309 = sand.u32 %s126, 1
        %s310 = scalar_lea.sflag [#allocation4], %s309
        %s311 = sand.u32 %s126, 1
        %s312 = smul.addr %s311, 128
        %s313 = scalar_lea.vmem [#allocation10], %s312
        %p314 = pneg %p165
        %p315 = pneg %p162
        %s316 = sand.u32 %s29, 1
        %s317 = scalar_lea.sflag [#allocation12], %s316
        %s318 = sand.u32 %s152, 1
        %s319 = smul.addr %s318, 8
        %s320 = scalar_lea.vmem [#allocation11], %s319
        %p321 = pneg %p191
        %p322 = pneg %p188
        %s323 = sand.u32 %s29, 1
        %s324 = scalar_lea.sflag [#allocation12], %s323
        %s325 = sand.u32 %s178, 1
        %s326 = smul.addr %s325, 128
        %s327 = scalar_lea.vmem [#allocation13], %s326
        %s328 = smul.u32 16, %s29
        %s329 = smul.u32 16, %s29
        %s330 = smul.u32 16, %s29
        %v331 = vld [vmem:[%s277] sm:$0xff]
        %v332 = vld [vmem:[%s277 + $0x8] sm:$0xff]
        %v333 = vld [vmem:[%s277 + $0x10] sm:$0xff]
        %v334 = vld [vmem:[%s277 + $0x18] sm:$0xff]
        %v335 = vld [vmem:[%s277 + $0x20] sm:$0xff]
        %v336 = vld [vmem:[%s277 + $0x28] sm:$0xff]
        %v337 = vld [vmem:[%s277 + $0x30] sm:$0xff]
        %v338 = vld [vmem:[%s277 + $0x38] sm:$0xff]
        %v339 = vld [vmem:[%s277 + $0x40] sm:$0xff]
        %v340 = vld [vmem:[%s277 + $0x48] sm:$0xff]
        %v341 = vld [vmem:[%s277 + $0x50] sm:$0xff]
        %v342 = vld [vmem:[%s277 + $0x58] sm:$0xff]
        %v343 = vld [vmem:[%s277 + $0x60] sm:$0xff]
        %v344 = vld [vmem:[%s277 + $0x68] sm:$0xff]
        %v345 = vld [vmem:[%s277 + $0x70] sm:$0xff]
        %v346 = vld [vmem:[%s277 + $0x78] sm:$0xff]
        %v347 = vld [vmem:[#allocation5] sm:$0xff]
        %v348 = vld [vmem:[#allocation5 + $0x8] sm:$0xff]
        %v349 = vld [vmem:[#allocation5 + $0x10] sm:$0xff]
        %v350 = vld [vmem:[#allocation5 + $0x18] sm:$0xff]
        %v351 = vld [vmem:[#allocation5 + $0x20] sm:$0xff]
        %v352 = vld [vmem:[#allocation5 + $0x28] sm:$0xff]
        %v353 = vld [vmem:[#allocation5 + $0x30] sm:$0xff]
        %v354 = vld [vmem:[#allocation5 + $0x38] sm:$0xff]
        %v355 = vld [vmem:[#allocation5 + $0x40] sm:$0xff]
        %v356 = vld [vmem:[#allocation5 + $0x48] sm:$0xff]
        %v357 = vld [vmem:[#allocation5 + $0x50] sm:$0xff]
        %v358 = vld [vmem:[#allocation5 + $0x58] sm:$0xff]
        %v359 = vld [vmem:[#allocation5 + $0x60] sm:$0xff]
        %v360 = vld [vmem:[#allocation5 + $0x68] sm:$0xff]
        %v361 = vld [vmem:[#allocation5 + $0x70] sm:$0xff]
        %v362 = vld [vmem:[#allocation5 + $0x78] sm:$0xff]
        %363 = vmatprep.subr.mxu0 0.0
        %364 = vmatpush1.msra.mxu0 %v347
        %365 = vmatprep.subr.mxu0 0.0
        %366 = vmatpush1.msra.mxu0 %v348
        %367 = vmatprep.subr.mxu0 0.0
        %368 = vmatpush1.msra.mxu0 %v349
        %369 = vmatprep.subr.mxu0 0.0
        %370 = vmatpush1.msra.mxu0 %v350
        %371 = vmatprep.subr.mxu0 0.0
        %372 = vmatpush1.msra.mxu0 %v351
        %373 = vmatprep.subr.mxu0 0.0
        %374 = vmatpush1.msra.mxu0 %v352
        %375 = vmatprep.subr.mxu0 0.0
        %376 = vmatpush1.msra.mxu0 %v353
        %377 = vmatprep.subr.mxu0 0.0
        %378 = vmatpush1.msra.mxu0 %v354
        %379 = vmatprep.subr.mxu0 0.0
        %380 = vmatpush1.msra.mxu0 %v355
        %381 = vmatprep.subr.mxu0 0.0
        %382 = vmatpush1.msra.mxu0 %v356
        %383 = vmatprep.subr.mxu0 0.0
        %384 = vmatpush1.msra.mxu0 %v357
        %385 = vmatprep.subr.mxu0 0.0
        %386 = vmatpush1.msra.mxu0 %v358
        %387 = vmatprep.subr.mxu0 0.0
        %388 = vmatpush1.msra.mxu0 %v359
        %389 = vmatprep.subr.mxu0 0.0
        %390 = vmatpush1.msra.mxu0 %v360
        %391 = vmatprep.subr.mxu0 0.0
        %392 = vmatpush1.msra.mxu0 %v361
        %393 = vmatprep.subr.mxu0 0.0
        %394 = vmatpush1.msra.mxu0 %v362
        %395 = vmatprep.subr.mxu0 0.0
        %396 = vmatpush1.msra.mxu0 0.0
        %397 = vmatprep.subr.mxu0 0.0
        %398 = vmatpush1.msra.mxu0 0.0
        %399 = vmatprep.subr.mxu0 0.0
        %400 = vmatpush1.msra.mxu0 0.0
        %401 = vmatprep.subr.mxu0 0.0
        %402 = vmatpush1.msra.mxu0 0.0
        %403 = vmatprep.subr.mxu0 0.0
        %404 = vmatpush1.msra.mxu0 0.0
        %405 = vmatprep.subr.mxu0 0.0
        %406 = vmatpush1.msra.mxu0 0.0
        %407 = vmatprep.subr.mxu0 0.0
        %408 = vmatpush1.msra.mxu0 0.0
        %409 = vmatprep.subr.mxu0 0.0
        %410 = vmatpush1.msra.mxu0 0.0
        %411 = vmatprep.subr.mxu0 0.0
        %412 = vmatpush1.msra.mxu0 0.0
        %413 = vmatprep.subr.mxu0 0.0
        %414 = vmatpush1.msra.mxu0 0.0
        %415 = vmatprep.subr.mxu0 0.0
        %416 = vmatpush1.msra.mxu0 0.0
        %417 = vmatprep.subr.mxu0 0.0
        %418 = vmatpush1.msra.mxu0 0.0
        %419 = vmatprep.subr.mxu0 0.0
        %420 = vmatpush1.msra.mxu0 0.0
        %421 = vmatprep.subr.mxu0 0.0
        %422 = vmatpush1.msra.mxu0 0.0
        %423 = vmatprep.subr.mxu0 0.0
        %424 = vmatpush1.msra.mxu0 0.0
        %425 = vmatprep.subr.mxu0 0.0
        %426 = vmatpush1.msra.mxu0 0.0
        %427 = vmatprep.mubr.f32.mxu0 0.0
        %428 = vmatmul.mubr.f32.gmra.mrb[0].mxu0 %v331
        %v429 = vpop.f32.mrb[0].mxu0
        %v430 = vadd.f32 0.0, %v429
        %v431 = vpop.f32.mrb[0].mxu0
        %432 = vmatprep.mubr.f32.mxu0 0.0
        %433 = vmatmul.mubr.f32.gmra.mrb[0].mxu0 %v332
        %v434 = vpop.f32.mrb[0].mxu0
        %v435 = vadd.f32 0.0, %v434
        %v436 = vpop.f32.mrb[0].mxu0
        %437 = vmatprep.mubr.f32.mxu0 0.0
        %438 = vmatmul.mubr.f32.gmra.mrb[0].mxu0 %v333
        %v439 = vpop.f32.mrb[0].mxu0
        %v440 = vadd.f32 0.0, %v439
        %v441 = vpop.f32.mrb[0].mxu0
        %442 = vmatprep.mubr.f32.mxu0 0.0
        %443 = vmatmul.mubr.f32.gmra.mrb[0].mxu0 %v334
        %v444 = vpop.f32.mrb[0].mxu0
        %v445 = vadd.f32 0.0, %v444
        %v446 = vpop.f32.mrb[0].mxu0
        %447 = vmatprep.mubr.f32.mxu0 0.0
        %448 = vmatmul.mubr.f32.gmra.mrb[0].mxu0 %v335
        %v449 = vpop.f32.mrb[0].mxu0
        %v450 = vadd.f32 0.0, %v449
        %v451 = vpop.f32.mrb[0].mxu0
        %452 = vmatprep.mubr.f32.mxu0 0.0
        %453 = vmatmul.mubr.f32.gmra.mrb[0].mxu0 %v336
        %v454 = vpop.f32.mrb[0].mxu0
        %v455 = vadd.f32 0.0, %v454
        %v456 = vpop.f32.mrb[0].mxu0
        %457 = vmatprep.mubr.f32.mxu0 0.0
        %458 = vmatmul.mubr.f32.gmra.mrb[0].mxu0 %v337
        %v459 = vpop.f32.mrb[0].mxu0
        %v460 = vadd.f32 0.0, %v459
        %v461 = vpop.f32.mrb[0].mxu0
        %462 = vmatprep.mubr.f32.mxu0 0.0
        %463 = vmatmul.mubr.f32.gmra.mrb[0].mxu0 %v338
        %v464 = vpop.f32.mrb[0].mxu0
        %v465 = vadd.f32 0.0, %v464
        %v466 = vpop.f32.mrb[0].mxu0
        %467 = vmatprep.mubr.f32.mxu0 0.0
        %468 = vmatmul.mubr.f32.gmra.mrb[0].mxu0 %v339
        %v469 = vpop.f32.mrb[0].mxu0
        %v470 = vadd.f32 0.0, %v469
        %v471 = vpop.f32.mrb[0].mxu0
        %472 = vmatprep.mubr.f32.mxu0 0.0
        %473 = vmatmul.mubr.f32.gmra.mrb[0].mxu0 %v340
        %v474 = vpop.f32.mrb[0].mxu0
        %v475 = vadd.f32 0.0, %v474
        %v476 = vpop.f32.mrb[0].mxu0
        %477 = vmatprep.mubr.f32.mxu0 0.0
        %478 = vmatmul.mubr.f32.gmra.mrb[0].mxu0 %v341
        %v479 = vpop.f32.mrb[0].mxu0
        %v480 = vadd.f32 0.0, %v479
        %v481 = vpop.f32.mrb[0].mxu0
        %482 = vmatprep.mubr.f32.mxu0 0.0
        %483 = vmatmul.mubr.f32.gmra.mrb[0].mxu0 %v342
        %v484 = vpop.f32.mrb[0].mxu0
        %v485 = vadd.f32 0.0, %v484
        %v486 = vpop.f32.mrb[0].mxu0
        %487 = vmatprep.mubr.f32.mxu0 0.0
        %488 = vmatmul.mubr.f32.gmra.mrb[0].mxu0 %v343
        %v489 = vpop.f32.mrb[0].mxu0
        %v490 = vadd.f32 0.0, %v489
        %v491 = vpop.f32.mrb[0].mxu0
        %492 = vmatprep.mubr.f32.mxu0 0.0
        %493 = vmatmul.mubr.f32.gmra.mrb[0].mxu0 %v344
        %v494 = vpop.f32.mrb[0].mxu0
        %v495 = vadd.f32 0.0, %v494
        %v496 = vpop.f32.mrb[0].mxu0
        %497 = vmatprep.mubr.f32.mxu0 0.0
        %498 = vmatmul.mubr.f32.gmra.mrb[0].mxu0 %v345
        %v499 = vpop.f32.mrb[0].mxu0
        %v500 = vadd.f32 0.0, %v499
        %v501 = vpop.f32.mrb[0].mxu0
        %502 = vmatprep.mubr.f32.mxu0 0.0
        %503 = vmatmul.mubr.f32.gmra.mrb[0].mxu0 %v346
        %v504 = vpop.f32.mrb[0].mxu0
        %v505 = vadd.f32 0.0, %v504
        %v506 = vpop.f32.mrb[0].mxu0
        %507 = vdwg.mxu0
        %508 = vst [vmem:[%s313] sm:$0xff] %v430
        %509 = vst [vmem:[%s313 + $0x8] sm:$0xff] %v435
        %510 = vst [vmem:[%s313 + $0x10] sm:$0xff] %v440
        %511 = vst [vmem:[%s313 + $0x18] sm:$0xff] %v445
        %512 = vst [vmem:[%s313 + $0x20] sm:$0xff] %v450
        %513 = vst [vmem:[%s313 + $0x28] sm:$0xff] %v455
        %514 = vst [vmem:[%s313 + $0x30] sm:$0xff] %v460
        %515 = vst [vmem:[%s313 + $0x38] sm:$0xff] %v465
        %516 = vst [vmem:[%s313 + $0x40] sm:$0xff] %v470
        %517 = vst [vmem:[%s313 + $0x48] sm:$0xff] %v475
        %518 = vst [vmem:[%s313 + $0x50] sm:$0xff] %v480
        %519 = vst [vmem:[%s313 + $0x58] sm:$0xff] %v485
        %520 = vst [vmem:[%s313 + $0x60] sm:$0xff] %v490
        %521 = vst [vmem:[%s313 + $0x68] sm:$0xff] %v495
        %522 = vst [vmem:[%s313 + $0x70] sm:$0xff] %v500
        %523 = vst [vmem:[%s313 + $0x78] sm:$0xff] %v505
        %v524 = vld [vmem:[#allocation7] sm:$0xff]
        %525 = vmatprep.subr.mxu0 0.0
        %526 = vmatpush1.xpose.msra.mxu0 %v430
        %527 = vmatprep.subr.mxu0 0.0
        %528 = vmatpush1.xpose.msra.mxu0 %v435
        %529 = vmatprep.subr.mxu0 0.0
        %530 = vmatpush1.xpose.msra.mxu0 %v440
        %531 = vmatprep.subr.mxu0 0.0
        %532 = vmatpush1.xpose.msra.mxu0 %v445
        %533 = vmatprep.subr.mxu0 0.0
        %534 = vmatpush1.xpose.msra.mxu0 %v450
        %535 = vmatprep.subr.mxu0 0.0
        %536 = vmatpush1.xpose.msra.mxu0 %v455
        %537 = vmatprep.subr.mxu0 0.0
        %538 = vmatpush1.xpose.msra.mxu0 %v460
        %539 = vmatprep.subr.mxu0 0.0
        %540 = vmatpush1.xpose.msra.mxu0 %v465
        %541 = vmatprep.subr.mxu0 0.0
        %542 = vmatpush1.xpose.msra.mxu0 %v470
        %543 = vmatprep.subr.mxu0 0.0
        %544 = vmatpush1.xpose.msra.mxu0 %v475
        %545 = vmatprep.subr.mxu0 0.0
        %546 = vmatpush1.xpose.msra.mxu0 %v480
        %547 = vmatprep.subr.mxu0 0.0
        %548 = vmatpush1.xpose.msra.mxu0 %v485
        %549 = vmatprep.subr.mxu0 0.0
        %550 = vmatpush1.xpose.msra.mxu0 %v490
        %551 = vmatprep.subr.mxu0 0.0
        %552 = vmatpush1.xpose.msra.mxu0 %v495
        %553 = vmatprep.subr.mxu0 0.0
        %554 = vmatpush1.xpose.msra.mxu0 %v500
        %555 = vmatprep.subr.mxu0 0.0
        %556 = vmatpush1.xpose.msra.mxu0 %v505
        %557 = vmatprep.subr.mxu0 0.0
        %558 = vmatpush1.xpose.msra.mxu0 0.0
        %559 = vmatprep.subr.mxu0 0.0
        %560 = vmatpush1.xpose.msra.mxu0 0.0
        %561 = vmatprep.subr.mxu0 0.0
        %562 = vmatpush1.xpose.msra.mxu0 0.0
        %563 = vmatprep.subr.mxu0 0.0
        %564 = vmatpush1.xpose.msra.mxu0 0.0
        %565 = vmatprep.subr.mxu0 0.0
        %566 = vmatpush1.xpose.msra.mxu0 0.0
        %567 = vmatprep.subr.mxu0 0.0
        %568 = vmatpush1.xpose.msra.mxu0 0.0
        %569 = vmatprep.subr.mxu0 0.0
        %570 = vmatpush1.xpose.msra.mxu0 0.0
        %571 = vmatprep.subr.mxu0 0.0
        %572 = vmatpush1.xpose.msra.mxu0 0.0
        %573 = vmatprep.subr.mxu0 0.0
        %574 = vmatpush1.xpose.msra.mxu0 0.0
        %575 = vmatprep.subr.mxu0 0.0
        %576 = vmatpush1.xpose.msra.mxu0 0.0
        %577 = vmatprep.subr.mxu0 0.0
        %578 = vmatpush1.xpose.msra.mxu0 0.0
        %579 = vmatprep.subr.mxu0 0.0
        %580 = vmatpush1.xpose.msra.mxu0 0.0
        %581 = vmatprep.subr.mxu0 0.0
        %582 = vmatpush1.xpose.msra.mxu0 0.0
        %583 = vmatprep.subr.mxu0 0.0
        %584 = vmatpush1.xpose.msra.mxu0 0.0
        %585 = vmatprep.subr.mxu0 0.0
        %586 = vmatpush1.xpose.msra.mxu0 0.0
        %587 = vmatprep.subr.mxu0 0.0
        %588 = vmatpush1.xpose.msra.mxu0 0.0
        %589 = vmatprep.mubr.f32.mxu0 0.0
        %590 = vmatmul.mubr.f32.gmra.mrb[0].mxu0 %v524
        %v591 = vpop.f32.mrb[0].mxu0
        %v592 = vadd.f32 0.0, %v591
        %v593 = vpop.f32.mrb[0].mxu0
        %594 = vdwg.mxu0
        %595 = vst [vmem:[%s320] sm:$0xff] %v592
        %v596 = vld [vmem:[#allocation8] sm:$0x1]
        %v598 = vlaneseq
        %v599 = vshrl.u32 %v598, 7
        %v600 = vsub.s32 0, %v599
        %v601 = vrot.slane %v596, %v600
        %v603 = vmul.f32 %v430, %v601
        %v604 = vmul.f32 %v435, %v601
        %v605 = vmul.f32 %v440, %v601
        %v606 = vmul.f32 %v445, %v601
        %v607 = vmul.f32 %v450, %v601
        %v608 = vmul.f32 %v455, %v601
        %v609 = vmul.f32 %v460, %v601
        %v610 = vmul.f32 %v465, %v601
        %v611 = vmul.f32 %v470, %v601
        %v612 = vmul.f32 %v475, %v601
        %v613 = vmul.f32 %v480, %v601
        %v614 = vmul.f32 %v485, %v601
        %v615 = vmul.f32 %v490, %v601
        %v616 = vmul.f32 %v495, %v601
        %v617 = vmul.f32 %v500, %v601
        %v618 = vmul.f32 %v505, %v601
        %619 = vadd.xlane.f32.xlu0 %v603
        %v620 = vpop.xlane.xlu0 %619
        %621 = vadd.xlane.f32.xlu0 %v604
        %v622 = vpop.xlane.xlu0 %621
        %623 = vadd.xlane.f32.xlu0 %v605
        %v624 = vpop.xlane.xlu0 %623
        %625 = vadd.xlane.f32.xlu0 %v606
        %v626 = vpop.xlane.xlu0 %625
        %627 = vadd.xlane.f32.xlu0 %v607
        %v628 = vpop.xlane.xlu0 %627
        %629 = vadd.xlane.f32.xlu0 %v608
        %v630 = vpop.xlane.xlu0 %629
        %631 = vadd.xlane.f32.xlu0 %v609
        %v632 = vpop.xlane.xlu0 %631
        %633 = vadd.xlane.f32.xlu0 %v610
        %v634 = vpop.xlane.xlu0 %633
        %635 = vadd.xlane.f32.xlu0 %v611
        %v636 = vpop.xlane.xlu0 %635
        %637 = vadd.xlane.f32.xlu0 %v612
        %v638 = vpop.xlane.xlu0 %637
        %639 = vadd.xlane.f32.xlu0 %v613
        %v640 = vpop.xlane.xlu0 %639
        %641 = vadd.xlane.f32.xlu0 %v614
        %v642 = vpop.xlane.xlu0 %641
        %643 = vadd.xlane.f32.xlu0 %v615
        %v644 = vpop.xlane.xlu0 %643
        %645 = vadd.xlane.f32.xlu0 %v616
        %v646 = vpop.xlane.xlu0 %645
        %647 = vadd.xlane.f32.xlu0 %v617
        %v648 = vpop.xlane.xlu0 %647
        %649 = vadd.xlane.f32.xlu0 %v618
        %v650 = vpop.xlane.xlu0 %649
        %vm651 = vcmask 7168
        %652 = vst.msk [vmem:[%s327] sm:$0xff] %vm651, %v620
        %653 = vst.msk [vmem:[%s327 + $0x8] sm:$0xff] %vm651, %v622
        %654 = vst.msk [vmem:[%s327 + $0x10] sm:$0xff] %vm651, %v624
        %655 = vst.msk [vmem:[%s327 + $0x18] sm:$0xff] %vm651, %v626
        %656 = vst.msk [vmem:[%s327 + $0x20] sm:$0xff] %vm651, %v628
        %657 = vst.msk [vmem:[%s327 + $0x28] sm:$0xff] %vm651, %v630
        %658 = vst.msk [vmem:[%s327 + $0x30] sm:$0xff] %vm651, %v632
        %659 = vst.msk [vmem:[%s327 + $0x38] sm:$0xff] %vm651, %v634
        %660 = vst.msk [vmem:[%s327 + $0x40] sm:$0xff] %vm651, %v636
        %661 = vst.msk [vmem:[%s327 + $0x48] sm:$0xff] %vm651, %v638
        %662 = vst.msk [vmem:[%s327 + $0x50] sm:$0xff] %vm651, %v640
        %663 = vst.msk [vmem:[%s327 + $0x58] sm:$0xff] %vm651, %v642
        %664 = vst.msk [vmem:[%s327 + $0x60] sm:$0xff] %vm651, %v644
        %665 = vst.msk [vmem:[%s327 + $0x68] sm:$0xff] %vm651, %v646
        %666 = vst.msk [vmem:[%s327 + $0x70] sm:$0xff] %vm651, %v648
        %667 = vst.msk [vmem:[%s327 + $0x78] sm:$0xff] %vm651, %v650
        %s668 = sand.u32 %s126, 1
        %s669 = scalar_lea.sflag [#allocation4], %s668
        %s670 = sand.u32 %s126, 1
        %s671 = smul.addr %s670, 128
        %s672 = scalar_lea.vmem [#allocation10], %s671
        %s673 = sand.u32 %s29, 1
        %s674 = scalar_lea.sflag [#allocation12], %s673
        %s675 = sand.u32 %s152, 1
        %s676 = smul.addr %s675, 8
        %s677 = scalar_lea.vmem [#allocation11], %s676
        %s678 = sand.u32 %s29, 1
        %s679 = scalar_lea.sflag [#allocation12], %s678
        %s680 = sand.u32 %s178, 1
        %s681 = smul.addr %s680, 128
        %s682 = scalar_lea.vmem [#allocation13], %s681
        // Predicated region
        $region53: #{passage_forward.3} parent=35 // pred_check
          %p683 = pneg %p136
        $region54: #{passage_forward.3} parent=35 // pred_check_branch
          %685 = sbr.rel (%p683) target = $region56
        $region55: #{passage_forward.3} parent=35 // pred_region
          %s686 = smul.u32 16, %s29
          %s688 = ssub.s32 2048, 2048
          %689 = vsyncadd %s669, %s688
          %s690 = smul.addr %s686, 128
          %s691 = scalar_lea.hbm %s4, %s690
          %s692 = sshll.u32 %s672, 4
          %s693 = int_to_ptr.vmem [resolvable:$true] %s692
          %698 = dma.vmem_to_hbm [thread:$0]  %s693, 2048, %s691, %s669, 128, 128, 8
        $region56: #{passage_forward.3} parent=35 // pred_fallthru
          _
        // Predicated region
        $region57: #{passage_forward.3} parent=35 // pred_check
          %p699 = pneg %p162
        $region58: #{passage_forward.3} parent=35 // pred_check_branch
          %701 = sbr.rel (%p699) target = $region60
        $region59: #{passage_forward.3} parent=35 // pred_region
          %s703 = ssub.s32 128, 128
          %704 = vsyncadd %s674, %s703
          %s705 = smul.addr %s29, 128
          %s706 = scalar_lea.hbm %s5, %s705
          %s708 = sshll.u32 %s677, 4
          %s709 = int_to_ptr.vmem [resolvable:$true] %s708
          %711 = dma.vmem_to_hbm [thread:$0]  %s709, 128, %s706, %s674
        $region60: #{passage_forward.3} parent=35 // pred_fallthru
          _
        // Predicated region
        $region61: #{passage_forward.3} parent=35 // pred_check
          %p712 = pneg %p188
        $region62: #{passage_forward.3} parent=35 // pred_check_branch
          %714 = sbr.rel (%p712) target = $region64
        $region63: #{passage_forward.3} parent=35 // pred_region
          %s715 = smul.u32 16, %s29
          %s717 = ssub.s32 2048, 2048
          %718 = vsyncadd %s679, %s717
          %s719 = smul.addr %s715, 128
          %s720 = scalar_lea.hbm %s6, %s719
          %s721 = sshll.u32 %s682, 4
          %s722 = int_to_ptr.vmem [resolvable:$true] %s721
          %727 = dma.vmem_to_hbm [thread:$0]  %s722, 2048, %s720, %s679, 128, 128, 8
        $region64: #{passage_forward.3} parent=35 // pred_fallthru
          _
      $region36: #{passage_forward.3} parent=5 // pred_fallthru
        _
      %p728 = scmp.le.s32.totalorder 2, %s24
      // Predicated region
      $region65: #{passage_forward.3} parent=5 // pred_check
        %p729 = pneg %p728
      $region66: #{passage_forward.3} parent=5 // pred_check_branch
        %731 = sbr.rel (%p729) target = $region68
      $region67: #{passage_forward.3} parent=5 // pred_region
        %s732 = ssub.s32 %s24, 2
        // Predicated region
        $region69: #{passage_forward.3} parent=67 // pred_check
          %p733 = pneg %p142
        $region70: #{passage_forward.3} parent=67 // pred_check_branch
          %735 = sbr.rel (%p733) target = $region72
        $region71: #{passage_forward.3} parent=67 // pred_region
          %s736 = sand.u32 %s127, 1
          %s737 = scalar_lea.sflag [#allocation4], %s736
          %s738 = sand.u32 %s127, 1
          %s739 = smul.addr %s738, 128
          %s740 = scalar_lea.vmem [#allocation10], %s739
          %741 = dma.done %s737, 2048
        $region72: #{passage_forward.3} parent=67 // pred_fallthru
          _
        // Predicated region
        $region73: #{passage_forward.3} parent=67 // pred_check
          %p742 = pneg %p168
        $region74: #{passage_forward.3} parent=67 // pred_check_branch
          %744 = sbr.rel (%p742) target = $region76
        $region75: #{passage_forward.3} parent=67 // pred_region
          %s745 = sand.u32 %s30, 1
          %s746 = scalar_lea.sflag [#allocation12], %s745
          %s747 = sand.u32 %s153, 1
          %s748 = smul.addr %s747, 8
          %s749 = scalar_lea.vmem [#allocation11], %s748
          %750 = dma.done %s746, 128
        $region76: #{passage_forward.3} parent=67 // pred_fallthru
          _
        // Predicated region
        $region77: #{passage_forward.3} parent=67 // pred_check
          %p751 = pneg %p194
        $region78: #{passage_forward.3} parent=67 // pred_check_branch
          %753 = sbr.rel (%p751) target = $region80
        $region79: #{passage_forward.3} parent=67 // pred_region
          %s754 = sand.u32 %s30, 1
          %s755 = scalar_lea.sflag [#allocation12], %s754
          %s756 = sand.u32 %s179, 1
          %s757 = smul.addr %s756, 128
          %s758 = scalar_lea.vmem [#allocation13], %s757
          %759 = dma.done %s755, 2048
        $region80: #{passage_forward.3} parent=67 // pred_fallthru
          _
      $region68: #{passage_forward.3} parent=5 // pred_fallthru
        _
    $region6: #{passage_forward.3} parent=1 // loop_footer
      %s28 = sadd.s32 1, %s24
    $region7: #{passage_forward.3} parent=1 // loop_footer_branch
      %23 = sbr.rel target = $region3
    $region8: #{passage_forward.3} parent=1 // loop_exit
      _
    %760 = vsyncpa [#allocation3], 1
    %s761 = scalar_lea.sflag [#allocation3], 1
    %762 = vsyncpa %s761, 1
    %763 = vsyncpa [#allocation6], 1
    %764 = vsyncpa [#allocation9], 1
    %765 = vsyncpa [#allocation4], 1
    %s766 = scalar_lea.sflag [#allocation4], 1
    %767 = vsyncpa %s766, 1
    %768 = vsyncpa [#allocation12], 1
    %s769 = scalar_lea.sflag [#allocation12], 1
    %770 = vsyncpa %s769, 1

// kernel: passage_forward.4
$region0: #{passage_forward.4}
  #allocation0 [shape = 'u32[]', space=smem, size = 0x4, offset = 0x4, fixed_abs, tag = 'smem constant byte address 0x4 - core index']
  #allocation1 [shape = 'u32[144,128]{1,0:T(1,128)}', space=vmem, size = 0x12000, scoped, tag = 'internal scratch']
  %s0 = inlined_call_operand.hbm [shape: s8[256,256], index: 0, kind: input, shape index: {}]
  %s1 = inlined_call_operand.hbm [shape: f32[256,1], index: 1, kind: input, shape index: {}]
  %s2 = inlined_call_operand.hbm [shape: f32[8,256], index: 2, kind: input, shape index: {}]
  %s3 = inlined_call_operand.hbm [shape: f32[256,128], index: 3, kind: input, shape index: {}]
  %s4 = inlined_call_operand.hbm [shape: f32[128,128], index: 4, kind: input, shape index: {}]
  %s5 = inlined_call_operand.hbm [shape: f32[128,128], index: 5, kind: input, shape index: {}]
  %s6 = inlined_call_operand.hbm [shape: f32[256,128], index: 6, kind: output, shape index: {0}]
  %s7 = inlined_call_operand.hbm [shape: f32[256,128], index: 7, kind: output, shape index: {1}]
  %8 = xla_tuple %s6, %s7
  %s9 = sld [smem:[#allocation0]]
  $region89: #{passage_forward.4} parent=0
    _
  %s11 = ssub.s32 1, %s9
  %s12 = scalar_select 0, %s11, %s9
  $region1: #{passage_forward.4} parent=0
    #allocation2 [shape = 'u8[65536]{0}', space=vmem, size = 0x10000, scoped, tag = 'input window, operand 0']
    #allocation3 [shape = 's32[2]{0}', space=sflag, size = 0x8, scoped, tag = 'scoped memory for passage_forward.4']
    #allocation4 [shape = 's32[2]{0}', space=sflag, size = 0x8, scoped, tag = 'scoped memory for passage_forward.4']
    #allocation5 [shape = 'u8[131072]{0}', space=vmem, size = 0x20000, scoped, tag = 'input window, operand 1']
    #allocation6 [shape = 's32[2]{0}', space=sflag, size = 0x8, scoped, tag = 'scoped memory for passage_forward.4']
    #allocation7 [shape = 'u8[8192]{0}', space=vmem, size = 0x2000, scoped, tag = 'input window, operand 2, single buffered']
    #allocation8 [shape = 'u8[131072]{0}', space=vmem, size = 0x20000, scoped, tag = 'input window, operand 3, single buffered']
    #allocation9 [shape = 's32[1]{0}', space=sflag, size = 0x4, scoped, tag = 'scoped memory for passage_forward.4']
    #allocation10 [shape = 'u8[65536]{0}', space=vmem, size = 0x10000, scoped, tag = 'input window, operand 4, single buffered']
    #allocation11 [shape = 'u8[65536]{0}', space=vmem, size = 0x10000, scoped, tag = 'input window, operand 5, single buffered']
    #allocation12 [shape = 's32[1]{0}', space=sflag, size = 0x4, scoped, tag = 'scoped memory for passage_forward.4']
    #allocation13 [shape = 'u8[131072]{0}', space=vmem, size = 0x20000, scoped, tag = 'output window, operand 0']
    #allocation14 [shape = 'u8[131072]{0}', space=vmem, size = 0x20000, scoped, tag = 'output window, operand 1']
    #allocation15 [shape = 's32[2]{0}', space=sflag, size = 0x8, scoped, tag = 'scoped memory for passage_forward.4']
    %13 = vsyncpa [#allocation3], 0
    %s14 = scalar_lea.sflag [#allocation3], 1
    %15 = vsyncpa %s14, 0
    %16 = vsyncpa [#allocation6], 0
    %s17 = scalar_lea.sflag [#allocation6], 1
    %18 = vsyncpa %s17, 0
    %19 = vsyncpa [#allocation9], 0
    %20 = vsyncpa [#allocation12], 0
    %21 = vsyncpa [#allocation4], 0
    %s22 = scalar_lea.sflag [#allocation4], 1
    %23 = vsyncpa %s22, 0
    %24 = vsyncpa [#allocation15], 0
    %s25 = scalar_lea.sflag [#allocation15], 1
    %26 = vsyncpa %s25, 0
    loop: start=0, step=1, limit=4
    $region2: #{passage_forward.4} parent=1 // loop_pre_header
      _
    $region3: #{passage_forward.4} parent=1 // loop_header
      %s28 = sphi 0, %s32
      %p29 = scmp.ge.s32.totalorder %s28, 4
      %s38 = sphi 0, %s40
      %s41 = sphi 0, %s38
      %s42 = sphi 0, %s41
      %s58 = sphi 0, %s42
      %s64 = sphi 0, %s66
      %s67 = sphi 0, %s64
      %s68 = sphi 0, %s67
      %s84 = sphi 0, %s68
      %s88 = sphi 0, %s88
      %s90 = sphi 0, %s88
      %s91 = sphi 0, %s90
      %s105 = sphi 0, %s91
      %s109 = sphi 0, %s109
      %s111 = sphi 0, %s109
      %s112 = sphi 0, %s111
      %s126 = sphi 0, %s112
      %s130 = sphi 0, %s130
      %s132 = sphi 0, %s130
      %s133 = sphi 0, %s132
      %s147 = sphi 0, %s133
      %s151 = sphi 0, %s151
      %s153 = sphi 0, %s151
      %s154 = sphi 0, %s153
      %s168 = sphi 0, %s154
      %s174 = sphi 0, %s176
      %s177 = sphi 0, %s174
      %s178 = sphi 0, %s177
      %s194 = sphi 0, %s178
      %s200 = sphi 0, %s202
      %s203 = sphi 0, %s200
      %s204 = sphi 0, %s203
      %s220 = sphi 0, %s204
    $region4: #{passage_forward.4} parent=1 // loop_header_branch
      %31 = sbr.rel (%p29) target = $region8
    $region5: #{passage_forward.4} parent=1 // loop_body
      %s33 = ssub.s32 %s28, 1
      %s34 = ssub.s32 %s28, 2
      %s35 = sadd.s32 %s28, 1
      %s36 = ssub.s32 %s28, %s35
      %p37 = scmp.eq.s32.totalorder %s36, 0
      %s39 = sadd.s32 %s38, 1
      %s40 = scalar_select %p37, %s38, %s39
      %p43 = pneg %p37
      %p44 = scmp.eq.s32.totalorder %s28, 1
      %p45 = por %p43, %p44
      %p46 = scmp.ne.s32.totalorder %s38, %s41
      %p47 = scmp.eq.s32.totalorder %s28, 0
      %p48 = por %p46, %p47
      %p49 = scmp.ne.s32.totalorder %s38, %s41
      %p50 = scmp.eq.s32.totalorder %s33, 1
      %p51 = por %p49, %p50
      %p52 = scmp.ne.s32.totalorder %s41, %s42
      %p53 = scmp.eq.s32.totalorder %s33, 0
      %p54 = por %p52, %p53
      %p55 = scmp.ne.s32.totalorder %s41, %s42
      %p56 = scmp.eq.s32.totalorder %s34, 1
      %p57 = por %p55, %p56
      %p59 = scmp.ne.s32.totalorder %s42, %s58
      %p60 = scmp.eq.s32.totalorder %s34, 0
      %p61 = por %p59, %p60
      %s62 = ssub.s32 %s28, %s35
      %p63 = scmp.eq.s32.totalorder %s62, 0
      %s65 = sadd.s32 %s64, 1
      %s66 = scalar_select %p63, %s64, %s65
      %p69 = pneg %p63
      %p70 = scmp.eq.s32.totalorder %s28, 1
      %p71 = por %p69, %p70
      %p72 = scmp.ne.s32.totalorder %s64, %s67
      %p73 = scmp.eq.s32.totalorder %s28, 0
      %p74 = por %p72, %p73
      %p75 = scmp.ne.s32.totalorder %s64, %s67
      %p76 = scmp.eq.s32.totalorder %s33, 1
      %p77 = por %p75, %p76
      %p78 = scmp.ne.s32.totalorder %s67, %s68
      %p79 = scmp.eq.s32.totalorder %s33, 0
      %p80 = por %p78, %p79
      %p81 = scmp.ne.s32.totalorder %s67, %s68
      %p82 = scmp.eq.s32.totalorder %s34, 1
      %p83 = por %p81, %p82
      %p85 = scmp.ne.s32.totalorder %s68, %s84
      %p86 = scmp.eq.s32.totalorder %s34, 0
      %p87 = por %p85, %p86
      %s89 = sadd.s32 %s88, 1
      %p92 = scmp.eq.s32.totalorder %s28, 1
      %p93 = scmp.ne.s32.totalorder %s88, %s90
      %p94 = scmp.eq.s32.totalorder %s28, 0
      %p95 = por %p93, %p94
      %p96 = scmp.ne.s32.totalorder %s88, %s90
      %p97 = scmp.eq.s32.totalorder %s33, 1
      %p98 = por %p96, %p97
      %p99 = scmp.ne.s32.totalorder %s90, %s91
      %p100 = scmp.eq.s32.totalorder %s33, 0
      %p101 = por %p99, %p100
      %p102 = scmp.ne.s32.totalorder %s90, %s91
      %p103 = scmp.eq.s32.totalorder %s34, 1
      %p104 = por %p102, %p103
      %p106 = scmp.ne.s32.totalorder %s91, %s105
      %p107 = scmp.eq.s32.totalorder %s34, 0
      %p108 = por %p106, %p107
      %s110 = sadd.s32 %s109, 1
      %p113 = scmp.eq.s32.totalorder %s28, 1
      %p114 = scmp.ne.s32.totalorder %s109, %s111
      %p115 = scmp.eq.s32.totalorder %s28, 0
      %p116 = por %p114, %p115
      %p117 = scmp.ne.s32.totalorder %s109, %s111
      %p118 = scmp.eq.s32.totalorder %s33, 1
      %p119 = por %p117, %p118
      %p120 = scmp.ne.s32.totalorder %s111, %s112
      %p121 = scmp.eq.s32.totalorder %s33, 0
      %p122 = por %p120, %p121
      %p123 = scmp.ne.s32.totalorder %s111, %s112
      %p124 = scmp.eq.s32.totalorder %s34, 1
      %p125 = por %p123, %p124
      %p127 = scmp.ne.s32.totalorder %s112, %s126
      %p128 = scmp.eq.s32.totalorder %s34, 0
      %p129 = por %p127, %p128
      %s131 = sadd.s32 %s130, 1
      %p134 = scmp.eq.s32.totalorder %s28, 1
      %p135 = scmp.ne.s32.totalorder %s130, %s132
      %p136 = scmp.eq.s32.totalorder %s28, 0
      %p137 = por %p135, %p136
      %p138 = scmp.ne.s32.totalorder %s130, %s132
      %p139 = scmp.eq.s32.totalorder %s33, 1
      %p140 = por %p138, %p139
      %p141 = scmp.ne.s32.totalorder %s132, %s133
      %p142 = scmp.eq.s32.totalorder %s33, 0
      %p143 = por %p141, %p142
      %p144 = scmp.ne.s32.totalorder %s132, %s133
      %p145 = scmp.eq.s32.totalorder %s34, 1
      %p146 = por %p144, %p145
      %p148 = scmp.ne.s32.totalorder %s133, %s147
      %p149 = scmp.eq.s32.totalorder %s34, 0
      %p150 = por %p148, %p149
      %s152 = sadd.s32 %s151, 1
      %p155 = scmp.eq.s32.totalorder %s28, 1
      %p156 = scmp.ne.s32.totalorder %s151, %s153
      %p157 = scmp.eq.s32.totalorder %s28, 0
      %p158 = por %p156, %p157
      %p159 = scmp.ne.s32.totalorder %s151, %s153
      %p160 = scmp.eq.s32.totalorder %s33, 1
      %p161 = por %p159, %p160
      %p162 = scmp.ne.s32.totalorder %s153, %s154
      %p163 = scmp.eq.s32.totalorder %s33, 0
      %p164 = por %p162, %p163
      %p165 = scmp.ne.s32.totalorder %s153, %s154
      %p166 = scmp.eq.s32.totalorder %s34, 1
      %p167 = por %p165, %p166
      %p169 = scmp.ne.s32.totalorder %s154, %s168
      %p170 = scmp.eq.s32.totalorder %s34, 0
      %p171 = por %p169, %p170
      %s172 = ssub.s32 %s28, %s35
      %p173 = scmp.eq.s32.totalorder %s172, 0
      %s175 = sadd.s32 %s174, 1
      %s176 = scalar_select %p173, %s174, %s175
      %p179 = pneg %p173
      %p180 = scmp.eq.s32.totalorder %s28, 1
      %p181 = por %p179, %p180
      %p182 = scmp.ne.s32.totalorder %s174, %s177
      %p183 = scmp.eq.s32.totalorder %s28, 0
      %p184 = por %p182, %p183
      %p185 = scmp.ne.s32.totalorder %s174, %s177
      %p186 = scmp.eq.s32.totalorder %s33, 1
      %p187 = por %p185, %p186
      %p188 = scmp.ne.s32.totalorder %s177, %s178
      %p189 = scmp.eq.s32.totalorder %s33, 0
      %p190 = por %p188, %p189
      %p191 = scmp.ne.s32.totalorder %s177, %s178
      %p192 = scmp.eq.s32.totalorder %s34, 1
      %p193 = por %p191, %p192
      %p195 = scmp.ne.s32.totalorder %s178, %s194
      %p196 = scmp.eq.s32.totalorder %s34, 0
      %p197 = por %p195, %p196
      %s198 = ssub.s32 %s28, %s35
      %p199 = scmp.eq.s32.totalorder %s198, 0
      %s201 = sadd.s32 %s200, 1
      %s202 = scalar_select %p199, %s200, %s201
      %p205 = pneg %p199
      %p206 = scmp.eq.s32.totalorder %s28, 1
      %p207 = por %p205, %p206
      %p208 = scmp.ne.s32.totalorder %s200, %s203
      %p209 = scmp.eq.s32.totalorder %s28, 0
      %p210 = por %p208, %p209
      %p211 = scmp.ne.s32.totalorder %s200, %s203
      %p212 = scmp.eq.s32.totalorder %s33, 1
      %p213 = por %p211, %p212
      %p214 = scmp.ne.s32.totalorder %s203, %s204
      %p215 = scmp.eq.s32.totalorder %s33, 0
      %p216 = por %p214, %p215
      %p217 = scmp.ne.s32.totalorder %s203, %s204
      %p218 = scmp.eq.s32.totalorder %s34, 1
      %p219 = por %p217, %p218
      %p221 = scmp.ne.s32.totalorder %s204, %s220
      %p222 = scmp.eq.s32.totalorder %s34, 0
      %p223 = por %p221, %p222
      %p224 = scmp.le.s32.totalorder 1, %s28
      %p225 = scmp.lt.s32.totalorder %s28, 3
      %p226 = pnand %p224, %p225
      %p227 = pneg %p226
      // Predicated region
      $region9: #{passage_forward.4} parent=5 // pred_check
        _
      $region10: #{passage_forward.4} parent=5 // pred_check_branch
        %229 = sbr.rel (%p226) target = $region12
      $region11: #{passage_forward.4} parent=5 // pred_region
        %s230 = ssub.s32 %s28, 1
        // Predicated region
        $region13: #{passage_forward.4} parent=11 // pred_check
          %p231 = pneg %p101
        $region14: #{passage_forward.4} parent=11 // pred_check_branch
          %233 = sbr.rel (%p231) target = $region16
        $region15: #{passage_forward.4} parent=11 // pred_region
          %s235 = ssub.s32 256, 256
          %236 = vsyncadd [#allocation6], %s235
          %s238 = sshll.u32 [#allocation7], 4
          %s239 = int_to_ptr.vmem [resolvable:$true] %s238
          %241 = dma.hbm_to_vmem [thread:$0]  %s2, 256, %s239, [#allocation6]
        $region16: #{passage_forward.4} parent=11 // pred_fallthru
          _
        // Predicated region
        $region17: #{passage_forward.4} parent=11 // pred_check
          %p242 = pneg %p122
        $region18: #{passage_forward.4} parent=11 // pred_check_branch
          %244 = sbr.rel (%p242) target = $region20
        $region19: #{passage_forward.4} parent=11 // pred_region
          %s246 = ssub.s32 4096, 4096
          %247 = vsyncadd [#allocation9], %s246
          %s248 = sshll.u32 [#allocation8], 4
          %s249 = int_to_ptr.vmem [resolvable:$true] %s248
          %254 = dma.hbm_to_vmem [thread:$0]  %s3, 4096, %s249, [#allocation9], 128, 128, 8
        $region20: #{passage_forward.4} parent=11 // pred_fallthru
          _
        // Predicated region
        $region21: #{passage_forward.4} parent=11 // pred_check
          %p255 = pneg %p143
        $region22: #{passage_forward.4} parent=11 // pred_check_branch
          %257 = sbr.rel (%p255) target = $region24
        $region23: #{passage_forward.4} parent=11 // pred_region
          %s259 = ssub.s32 2048, 2048
          %260 = vsyncadd [#allocation9], %s259
          %s261 = sshll.u32 [#allocation10], 4
          %s262 = int_to_ptr.vmem [resolvable:$true] %s261
          %267 = dma.hbm_to_vmem [thread:$0]  %s4, 2048, %s262, [#allocation9], 128, 128, 8
        $region24: #{passage_forward.4} parent=11 // pred_fallthru
          _
        // Predicated region
        $region25: #{passage_forward.4} parent=11 // pred_check
          %p268 = pneg %p164
        $region26: #{passage_forward.4} parent=11 // pred_check_branch
          %270 = sbr.rel (%p268) target = $region28
        $region27: #{passage_forward.4} parent=11 // pred_region
          %s272 = ssub.s32 2048, 2048
          %273 = vsyncadd [#allocation12], %s272
          %s274 = sshll.u32 [#allocation11], 4
          %s275 = int_to_ptr.vmem [resolvable:$true] %s274
          %280 = dma.hbm_to_vmem [thread:$0]  %s5, 2048, %s275, [#allocation12], 128, 128, 8
        $region28: #{passage_forward.4} parent=11 // pred_fallthru
          _
      $region12: #{passage_forward.4} parent=5 // pred_fallthru
        _
      %p281 = scmp.lt.s32.totalorder %s28, 2
      // Predicated region
      $region29: #{passage_forward.4} parent=5 // pred_check
        %p282 = pneg %p281
      $region30: #{passage_forward.4} parent=5 // pred_check_branch
        %284 = sbr.rel (%p282) target = $region32
      $region31: #{passage_forward.4} parent=5 // pred_region
        // Predicated region
        $region33: #{passage_forward.4} parent=31 // pred_check
          %p285 = pneg %p48
        $region34: #{passage_forward.4} parent=31 // pred_check_branch
          %287 = sbr.rel (%p285) target = $region36
        $region35: #{passage_forward.4} parent=31 // pred_region
          %s288 = sand.u32 %s38, 1
          %s289 = scalar_lea.sflag [#allocation3], %s288
          %s290 = sand.u32 %s38, 1
          %s291 = smul.addr %s290, 64
          %s292 = scalar_lea.vmem [#allocation2], %s291
          %s293 = smul.u32 16, %s28
          %s295 = ssub.s32 1024, 1024
          %296 = vsyncadd %s289, %s295
          %s297 = smul.addr %s293, 2
          %s298 = smul.addr %s297, 32
          %s299 = scalar_lea.hbm %s0, %s298
          %s300 = sshll.u32 %s292, 4
          %s301 = int_to_ptr.vmem [resolvable:$true] %s300
          %306 = dma.hbm_to_vmem [thread:$0]  %s299, 1024, %s301, %s289, 64, 64, 4
        $region36: #{passage_forward.4} parent=31 // pred_fallthru
          _
        // Predicated region
        $region37: #{passage_forward.4} parent=31 // pred_check
          %p307 = pneg %p74
        $region38: #{passage_forward.4} parent=31 // pred_check_branch
          %309 = sbr.rel (%p307) target = $region40
        $region39: #{passage_forward.4} parent=31 // pred_region
          %s310 = sand.u32 %s28, 1
          %s311 = scalar_lea.sflag [#allocation6], %s310
          %s312 = sand.u32 %s64, 1
          %s313 = smul.addr %s312, 128
          %s314 = scalar_lea.vmem [#allocation5], %s313
          %s315 = smul.u32 16, %s28
          %s317 = ssub.s32 2048, 2048
          %318 = vsyncadd %s311, %s317
          %s319 = smul.addr %s315, 128
          %s320 = scalar_lea.hbm %s1, %s319
          %s321 = sshll.u32 %s314, 4
          %s322 = int_to_ptr.vmem [resolvable:$true] %s321
          %327 = dma.hbm_to_vmem [thread:$0]  %s320, 2048, %s322, %s311, 128, 128, 8
        $region40: #{passage_forward.4} parent=31 // pred_fallthru
          _
      $region32: #{passage_forward.4} parent=5 // pred_fallthru
        _
      %p328 = scmp.le.s32.totalorder 1, %s28
      %p329 = scmp.lt.s32.totalorder %s28, 3
      %p330 = pnand %p328, %p329
      %p331 = pneg %p330
      // Predicated region
      $region41: #{passage_forward.4} parent=5 // pred_check
        _
      $region42: #{passage_forward.4} parent=5 // pred_check_branch
        %333 = sbr.rel (%p330) target = $region44
      $region43: #{passage_forward.4} parent=5 // pred_region
        %s334 = ssub.s32 %s28, 1
        %s335 = sand.u32 %s41, 1
        %s336 = scalar_lea.sflag [#allocation3], %s335
        %s337 = sand.u32 %s41, 1
        %s338 = smul.addr %s337, 64
        %s339 = scalar_lea.vmem [#allocation2], %s338
        // Predicated region
        $region45: #{passage_forward.4} parent=43 // pred_check
          %p340 = pneg %p54
        $region46: #{passage_forward.4} parent=43 // pred_check_branch
          %342 = sbr.rel (%p340) target = $region48
        $region47: #{passage_forward.4} parent=43 // pred_region
          %343 = dma.done %s336, 1024
        $region48: #{passage_forward.4} parent=43 // pred_fallthru
          _
        %s344 = sand.u32 %s33, 1
        %s345 = scalar_lea.sflag [#allocation6], %s344
        %s346 = sand.u32 %s67, 1
        %s347 = smul.addr %s346, 128
        %s348 = scalar_lea.vmem [#allocation5], %s347
        // Predicated region
        $region49: #{passage_forward.4} parent=43 // pred_check
          %p349 = pneg %p80
        $region50: #{passage_forward.4} parent=43 // pred_check_branch
          %351 = sbr.rel (%p349) target = $region52
        $region51: #{passage_forward.4} parent=43 // pred_region
          %352 = dma.done %s345, 2048
        $region52: #{passage_forward.4} parent=43 // pred_fallthru
          _
        // Predicated region
        $region53: #{passage_forward.4} parent=43 // pred_check
          %p353 = pneg %p101
        $region54: #{passage_forward.4} parent=43 // pred_check_branch
          %355 = sbr.rel (%p353) target = $region56
        $region55: #{passage_forward.4} parent=43 // pred_region
          %356 = dma.done [#allocation6], 256
        $region56: #{passage_forward.4} parent=43 // pred_fallthru
          _
        // Predicated region
        $region57: #{passage_forward.4} parent=43 // pred_check
          %p357 = pneg %p122
        $region58: #{passage_forward.4} parent=43 // pred_check_branch
          %359 = sbr.rel (%p357) target = $region60
        $region59: #{passage_forward.4} parent=43 // pred_region
          %360 = dma.done [#allocation9], 4096
        $region60: #{passage_forward.4} parent=43 // pred_fallthru
          _
        // Predicated region
        $region61: #{passage_forward.4} parent=43 // pred_check
          %p361 = pneg %p143
        $region62: #{passage_forward.4} parent=43 // pred_check_branch
          %363 = sbr.rel (%p361) target = $region64
        $region63: #{passage_forward.4} parent=43 // pred_region
          %364 = dma.done [#allocation9], 2048
        $region64: #{passage_forward.4} parent=43 // pred_fallthru
          _
        // Predicated region
        $region65: #{passage_forward.4} parent=43 // pred_check
          %p365 = pneg %p164
        $region66: #{passage_forward.4} parent=43 // pred_check_branch
          %367 = sbr.rel (%p365) target = $region68
        $region67: #{passage_forward.4} parent=43 // pred_region
          %368 = dma.done [#allocation12], 2048
        $region68: #{passage_forward.4} parent=43 // pred_fallthru
          _
        %s369 = sand.u32 %s41, 1
        %s370 = scalar_lea.sflag [#allocation3], %s369
        %s371 = sand.u32 %s41, 1
        %s372 = smul.addr %s371, 64
        %s373 = scalar_lea.vmem [#allocation2], %s372
        %p374 = pneg %p54
        %p375 = pneg %p51
        %s376 = sand.u32 %s33, 1
        %s377 = scalar_lea.sflag [#allocation6], %s376
        %s378 = sand.u32 %s67, 1
        %s379 = smul.addr %s378, 128
        %s380 = scalar_lea.vmem [#allocation5], %s379
        %p381 = pneg %p80
        %p382 = pneg %p77
        %p383 = pneg %p101
        %p384 = pneg %p98
        %p385 = pneg %p122
        %p386 = pneg %p119
        %p387 = pneg %p143
        %p388 = pneg %p140
        %p389 = pneg %p164
        %p390 = pneg %p161
        %p391 = pneg %p190
        %p392 = pneg %p187
        %s393 = sand.u32 %s177, 1
        %s394 = scalar_lea.sflag [#allocation4], %s393
        %s395 = sand.u32 %s177, 1
        %s396 = smul.addr %s395, 128
        %s397 = scalar_lea.vmem [#allocation13], %s396
        %p398 = pneg %p216
        %p399 = pneg %p213
        %s400 = sand.u32 %s203, 1
        %s401 = scalar_lea.sflag [#allocation15], %s400
        %s402 = sand.u32 %s203, 1
        %s403 = smul.addr %s402, 128
        %s404 = scalar_lea.vmem [#allocation14], %s403
        %s405 = smul.u32 16, %s33
        %s406 = smul.u32 16, %s33
        %s407 = smul.u32 16, %s33
        %s408 = smul.u32 16, %s33
        %v409 = vld [vmem:[%s339] sm:$0xf]
        %v410 = vld [vmem:[%s339 + $0x4] sm:$0xf]
        %v411 = vld [vmem:[%s339 + $0x8] sm:$0xf]
        %v412 = vld [vmem:[%s339 + $0xc] sm:$0xf]
        %v413 = vld [vmem:[%s339 + $0x10] sm:$0xf]
        %v414 = vld [vmem:[%s339 + $0x14] sm:$0xf]
        %v415 = vld [vmem:[%s339 + $0x18] sm:$0xf]
        %v416 = vld [vmem:[%s339 + $0x1c] sm:$0xf]
        %v417 = vld [vmem:[%s339 + $0x20] sm:$0xf]
        %v418 = vld [vmem:[%s339 + $0x24] sm:$0xf]
        %v419 = vld [vmem:[%s339 + $0x28] sm:$0xf]
        %v420 = vld [vmem:[%s339 + $0x2c] sm:$0xf]
        %v421 = vld [vmem:[%s339 + $0x30] sm:$0xf]
        %v422 = vld [vmem:[%s339 + $0x34] sm:$0xf]
        %v423 = vld [vmem:[%s339 + $0x38] sm:$0xf]
        %v424 = vld [vmem:[%s339 + $0x3c] sm:$0xf]
        %v425 = vld [vmem:[%s348] sm:$0xff]
        %v426 = vld [vmem:[%s348 + $0x8] sm:$0xff]
        %v427 = vld [vmem:[%s348 + $0x10] sm:$0xff]
        %v428 = vld [vmem:[%s348 + $0x18] sm:$0xff]
        %v429 = vld [vmem:[%s348 + $0x20] sm:$0xff]
        %v430 = vld [vmem:[%s348 + $0x28] sm:$0xff]
        %v431 = vld [vmem:[%s348 + $0x30] sm:$0xff]
        %v432 = vld [vmem:[%s348 + $0x38] sm:$0xff]
        %v433 = vld [vmem:[%s348 + $0x40] sm:$0xff]
        %v434 = vld [vmem:[%s348 + $0x48] sm:$0xff]
        %v435 = vld [vmem:[%s348 + $0x50] sm:$0xff]
        %v436 = vld [vmem:[%s348 + $0x58] sm:$0xff]
        %v437 = vld [vmem:[%s348 + $0x60] sm:$0xff]
        %v438 = vld [vmem:[%s348 + $0x68] sm:$0xff]
        %v439 = vld [vmem:[%s348 + $0x70] sm:$0xff]
        %v440 = vld [vmem:[%s348 + $0x78] sm:$0xff]
        %v441 = vld [vmem:[#allocation7] ss:$8 sm:$0x3]
        %443 = vset.pattern.permute.xlu0 0
        %444 = vperm.xlu0 %443, %v425
        %v445 = vpop.permute.xlu0 %444
        %448 = vset.pattern.permute.xlu0 0
        %449 = vperm.xlu0 %448, %v426
        %v450 = vpop.permute.xlu0 %449
        %453 = vset.pattern.permute.xlu0 0
        %454 = vperm.xlu0 %453, %v427
        %v455 = vpop.permute.xlu0 %454
        %458 = vset.pattern.permute.xlu0 0
        %459 = vperm.xlu0 %458, %v428
        %v460 = vpop.permute.xlu0 %459
        %463 = vset.pattern.permute.xlu0 0
        %464 = vperm.xlu0 %463, %v429
        %v465 = vpop.permute.xlu0 %464
        %468 = vset.pattern.permute.xlu0 0
        %469 = vperm.xlu0 %468, %v430
        %v470 = vpop.permute.xlu0 %469
        %473 = vset.pattern.permute.xlu0 0
        %474 = vperm.xlu0 %473, %v431
        %v475 = vpop.permute.xlu0 %474
        %478 = vset.pattern.permute.xlu0 0
        %479 = vperm.xlu0 %478, %v432
        %v480 = vpop.permute.xlu0 %479
        %483 = vset.pattern.permute.xlu0 0
        %484 = vperm.xlu0 %483, %v433
        %v485 = vpop.permute.xlu0 %484
        %488 = vset.pattern.permute.xlu0 0
        %489 = vperm.xlu0 %488, %v434
        %v490 = vpop.permute.xlu0 %489
        %493 = vset.pattern.permute.xlu0 0
        %494 = vperm.xlu0 %493, %v435
        %v495 = vpop.permute.xlu0 %494
        %498 = vset.pattern.permute.xlu0 0
        %499 = vperm.xlu0 %498, %v436
        %v500 = vpop.permute.xlu0 %499
        %503 = vset.pattern.permute.xlu0 0
        %504 = vperm.xlu0 %503, %v437
        %v505 = vpop.permute.xlu0 %504
        %508 = vset.pattern.permute.xlu0 0
        %509 = vperm.xlu0 %508, %v438
        %v510 = vpop.permute.xlu0 %509
        %513 = vset.pattern.permute.xlu0 0
        %514 = vperm.xlu0 %513, %v439
        %v515 = vpop.permute.xlu0 %514
        %518 = vset.pattern.permute.xlu0 0
        %519 = vperm.xlu0 %518, %v440
        %v520 = vpop.permute.xlu0 %519
        %v523 = vlaneseq
        %v524 = vshrl.u32 %v523, 7
        %v525 = vsub.s32 0, %v524
        %v526 = vrot.slane %v441, %v525
        %v527 = vlaneseq
        %v528 = vshrl.u32 %v527, 7
        %v529 = vsub.s32 1, %v528
        %v530 = vrot.slane %v441, %v529
        %v533 = vadd.f32 %v445, %v526
        %v534 = vadd.f32 %v445, %v530
        %v535 = vadd.f32 %v450, %v526
        %v536 = vadd.f32 %v450, %v530
        %v537 = vadd.f32 %v455, %v526
        %v538 = vadd.f32 %v455, %v530
        %v539 = vadd.f32 %v460, %v526
        %v540 = vadd.f32 %v460, %v530
        %v541 = vadd.f32 %v465, %v526
        %v542 = vadd.f32 %v465, %v530
        %v543 = vadd.f32 %v470, %v526
        %v544 = vadd.f32 %v470, %v530
        %v545 = vadd.f32 %v475, %v526
        %v546 = vadd.f32 %v475, %v530
        %v547 = vadd.f32 %v480, %v526
        %v548 = vadd.f32 %v480, %v530
        %v549 = vadd.f32 %v485, %v526
        %v550 = vadd.f32 %v485, %v530
        %v551 = vadd.f32 %v490, %v526
        %v552 = vadd.f32 %v490, %v530
        %v553 = vadd.f32 %v495, %v526
        %v554 = vadd.f32 %v495, %v530
        %v555 = vadd.f32 %v500, %v526
        %v556 = vadd.f32 %v500, %v530
        %v557 = vadd.f32 %v505, %v526
        %v558 = vadd.f32 %v505, %v530
        %v559 = vadd.f32 %v510, %v526
        %v560 = vadd.f32 %v510, %v530
        %v561 = vadd.f32 %v515, %v526
        %v562 = vadd.f32 %v515, %v530
        %v563 = vadd.f32 %v520, %v526
        %v564 = vadd.f32 %v520, %v530
        %v565 = vmul.f32 %v533, 0.2
        %v566 = vmul.f32 %v534, 0.2
        %v567 = vmul.f32 %v535, 0.2
        %v568 = vmul.f32 %v536, 0.2
        %v569 = vmul.f32 %v537, 0.2
        %v570 = vmul.f32 %v538, 0.2
        %v571 = vmul.f32 %v539, 0.2
        %v572 = vmul.f32 %v540, 0.2
        %v573 = vmul.f32 %v541, 0.2
        %v574 = vmul.f32 %v542, 0.2
        %v575 = vmul.f32 %v543, 0.2
        %v576 = vmul.f32 %v544, 0.2
        %v577 = vmul.f32 %v545, 0.2
        %v578 = vmul.f32 %v546, 0.2
        %v579 = vmul.f32 %v547, 0.2
        %v580 = vmul.f32 %v548, 0.2
        %v581 = vmul.f32 %v549, 0.2
        %v582 = vmul.f32 %v550, 0.2
        %v583 = vmul.f32 %v551, 0.2
        %v584 = vmul.f32 %v552, 0.2
        %v585 = vmul.f32 %v553, 0.2
        %v586 = vmul.f32 %v554, 0.2
        %v587 = vmul.f32 %v555, 0.2
        %v588 = vmul.f32 %v556, 0.2
        %v589 = vmul.f32 %v557, 0.2
        %v590 = vmul.f32 %v558, 0.2
        %v591 = vmul.f32 %v559, 0.2
        %v592 = vmul.f32 %v560, 0.2
        %v593 = vmul.f32 %v561, 0.2
        %v594 = vmul.f32 %v562, 0.2
        %v595 = vmul.f32 %v563, 0.2
        %v596 = vmul.f32 %v564, 0.2
        %v597 = vmax.f32 %v533, %v565
        %v598 = vmax.f32 %v534, %v566
        %v599 = vmax.f32 %v535, %v567
        %v600 = vmax.f32 %v536, %v568
        %v601 = vmax.f32 %v537, %v569
        %v602 = vmax.f32 %v538, %v570
        %v603 = vmax.f32 %v539, %v571
        %v604 = vmax.f32 %v540, %v572
        %v605 = vmax.f32 %v541, %v573
        %v606 = vmax.f32 %v542, %v574
        %v607 = vmax.f32 %v543, %v575
        %v608 = vmax.f32 %v544, %v576
        %v609 = vmax.f32 %v545, %v577
        %v610 = vmax.f32 %v546, %v578
        %v611 = vmax.f32 %v547, %v579
        %v612 = vmax.f32 %v548, %v580
        %v613 = vmax.f32 %v549, %v581
        %v614 = vmax.f32 %v550, %v582
        %v615 = vmax.f32 %v551, %v583
        %v616 = vmax.f32 %v552, %v584
        %v617 = vmax.f32 %v553, %v585
        %v618 = vmax.f32 %v554, %v586
        %v619 = vmax.f32 %v555, %v587
        %v620 = vmax.f32 %v556, %v588
        %v621 = vmax.f32 %v557, %v589
        %v622 = vmax.f32 %v558, %v590
        %v623 = vmax.f32 %v559, %v591
        %v624 = vmax.f32 %v560, %v592
        %v625 = vmax.f32 %v561, %v593
        %v626 = vmax.f32 %v562, %v594
        %v627 = vmax.f32 %v563, %v595
        %v628 = vmax.f32 %v564, %v596
        %v629 = vunpack.c.0.s8 %v409
        %v630 = vunpack.c.1.s8 %v409
        %v631 = vunpack.c.0.s8 %v410
        %v632 = vunpack.c.1.s8 %v410
        %v633 = vunpack.c.0.s8 %v411
        %v634 = vunpack.c.1.s8 %v411
        %v635 = vunpack.c.0.s8 %v412
        %v636 = vunpack.c.1.s8 %v412
        %v637 = vunpack.c.0.s8 %v413
        %v638 = vunpack.c.1.s8 %v413
        %v639 = vunpack.c.0.s8 %v414
        %v640 = vunpack.c.1.s8 %v414
        %v641 = vunpack.c.0.s8 %v415
        %v642 = vunpack.c.1.s8 %v415
        %v643 = vunpack.c.0.s8 %v416
        %v644 = vunpack.c.1.s8 %v416
        %v645 = vunpack.c.0.s8 %v417
        %v646 = vunpack.c.1.s8 %v417
        %v647 = vunpack.c.0.s8 %v418
        %v648 = vunpack.c.1.s8 %v418
        %v649 = vunpack.c.0.s8 %v419
        %v650 = vunpack.c.1.s8 %v419
        %v651 = vunpack.c.0.s8 %v420
        %v652 = vunpack.c.1.s8 %v420
        %v653 = vunpack.c.0.s8 %v421
        %v654 = vunpack.c.1.s8 %v421
        %v655 = vunpack.c.0.s8 %v422
        %v656 = vunpack.c.1.s8 %v422
        %v657 = vunpack.c.0.s8 %v423
        %v658 = vunpack.c.1.s8 %v423
        %v659 = vunpack.c.0.s8 %v424
        %v660 = vunpack.c.1.s8 %v424
        %v661 = vcvt.s32.f32 %v629
        %v662 = vcvt.s32.f32 %v630
        %v663 = vcvt.s32.f32 %v631
        %v664 = vcvt.s32.f32 %v632
        %v665 = vcvt.s32.f32 %v633
        %v666 = vcvt.s32.f32 %v634
        %v667 = vcvt.s32.f32 %v635
        %v668 = vcvt.s32.f32 %v636
        %v669 = vcvt.s32.f32 %v637
        %v670 = vcvt.s32.f32 %v638
        %v671 = vcvt.s32.f32 %v639
        %v672 = vcvt.s32.f32 %v640
        %v673 = vcvt.s32.f32 %v641
        %v674 = vcvt.s32.f32 %v642
        %v675 = vcvt.s32.f32 %v643
        %v676 = vcvt.s32.f32 %v644
        %v677 = vcvt.s32.f32 %v645
        %v678 = vcvt.s32.f32 %v646
        %v679 = vcvt.s32.f32 %v647
        %v680 = vcvt.s32.f32 %v648
        %v681 = vcvt.s32.f32 %v649
        %v682 = vcvt.s32.f32 %v650
        %v683 = vcvt.s32.f32 %v651
        %v684 = vcvt.s32.f32 %v652
        %v685 = vcvt.s32.f32 %v653
        %v686 = vcvt.s32.f32 %v654
        %v687 = vcvt.s32.f32 %v655
        %v688 = vcvt.s32.f32 %v656
        %v689 = vcvt.s32.f32 %v657
        %v690 = vcvt.s32.f32 %v658
        %v691 = vcvt.s32.f32 %v659
        %v692 = vcvt.s32.f32 %v660
        %vm693 = vcmp.gt.f32.partialorder %v661, 0.0
        %vm694 = vcmp.gt.f32.partialorder %v662, 0.0
        %vm695 = vcmp.gt.f32.partialorder %v663, 0.0
        %vm696 = vcmp.gt.f32.partialorder %v664, 0.0
        %vm697 = vcmp.gt.f32.partialorder %v665, 0.0
        %vm698 = vcmp.gt.f32.partialorder %v666, 0.0
        %vm699 = vcmp.gt.f32.partialorder %v667, 0.0
        %vm700 = vcmp.gt.f32.partialorder %v668, 0.0
        %vm701 = vcmp.gt.f32.partialorder %v669, 0.0
        %vm702 = vcmp.gt.f32.partialorder %v670, 0.0
        %vm703 = vcmp.gt.f32.partialorder %v671, 0.0
        %vm704 = vcmp.gt.f32.partialorder %v672, 0.0
        %vm705 = vcmp.gt.f32.partialorder %v673, 0.0
        %vm706 = vcmp.gt.f32.partialorder %v674, 0.0
        %vm707 = vcmp.gt.f32.partialorder %v675, 0.0
        %vm708 = vcmp.gt.f32.partialorder %v676, 0.0
        %vm709 = vcmp.gt.f32.partialorder %v677, 0.0
        %vm710 = vcmp.gt.f32.partialorder %v678, 0.0
        %vm711 = vcmp.gt.f32.partialorder %v679, 0.0
        %vm712 = vcmp.gt.f32.partialorder %v680, 0.0
        %vm713 = vcmp.gt.f32.partialorder %v681, 0.0
        %vm714 = vcmp.gt.f32.partialorder %v682, 0.0
        %vm715 = vcmp.gt.f32.partialorder %v683, 0.0
        %vm716 = vcmp.gt.f32.partialorder %v684, 0.0
        %vm717 = vcmp.gt.f32.partialorder %v685, 0.0
        %vm718 = vcmp.gt.f32.partialorder %v686, 0.0
        %vm719 = vcmp.gt.f32.partialorder %v687, 0.0
        %vm720 = vcmp.gt.f32.partialorder %v688, 0.0
        %vm721 = vcmp.gt.f32.partialorder %v689, 0.0
        %vm722 = vcmp.gt.f32.partialorder %v690, 0.0
        %vm723 = vcmp.gt.f32.partialorder %v691, 0.0
        %vm724 = vcmp.gt.f32.partialorder %v692, 0.0
        %v725 = vsel %vm693, %v597, -1e+30
        %v726 = vsel %vm694, %v598, -1e+30
        %v727 = vsel %vm695, %v599, -1e+30
        %v728 = vsel %vm696, %v600, -1e+30
        %v729 = vsel %vm697, %v601, -1e+30
        %v730 = vsel %vm698, %v602, -1e+30
        %v731 = vsel %vm699, %v603, -1e+30
        %v732 = vsel %vm700, %v604, -1e+30
        %v733 = vsel %vm701, %v605, -1e+30
        %v734 = vsel %vm702, %v606, -1e+30
        %v735 = vsel %vm703, %v607, -1e+30
        %v736 = vsel %vm704, %v608, -1e+30
        %v737 = vsel %vm705, %v609, -1e+30
        %v738 = vsel %vm706, %v610, -1e+30
        %v739 = vsel %vm707, %v611, -1e+30
        %v740 = vsel %vm708, %v612, -1e+30
        %v741 = vsel %vm709, %v613, -1e+30
        %v742 = vsel %vm710, %v614, -1e+30
        %v743 = vsel %vm711, %v615, -1e+30
        %v744 = vsel %vm712, %v616, -1e+30
        %v745 = vsel %vm713, %v617, -1e+30
        %v746 = vsel %vm714, %v618, -1e+30
        %v747 = vsel %vm715, %v619, -1e+30
        %v748 = vsel %vm716, %v620, -1e+30
        %v749 = vsel %vm717, %v621, -1e+30
        %v750 = vsel %vm718, %v622, -1e+30
        %v751 = vsel %vm719, %v623, -1e+30
        %v752 = vsel %vm720, %v624, -1e+30
        %v753 = vsel %vm721, %v625, -1e+30
        %v754 = vsel %vm722, %v626, -1e+30
        %v755 = vsel %vm723, %v627, -1e+30
        %v756 = vsel %vm724, %v628, -1e+30
        %v757 = vmax.f32 %v725, %v726
        %758 = vmax.xlane.f32.xlu0 %v757
        %v759 = vpop.xlane.xlu0 %758
        %v760 = vmax.f32 %v727, %v728
        %761 = vmax.xlane.f32.xlu0 %v760
        %v762 = vpop.xlane.xlu0 %761
        %v763 = vmax.f32 %v729, %v730
        %764 = vmax.xlane.f32.xlu0 %v763
        %v765 = vpop.xlane.xlu0 %764
        %v766 = vmax.f32 %v731, %v732
        %767 = vmax.xlane.f32.xlu0 %v766
        %v768 = vpop.xlane.xlu0 %767
        %v769 = vmax.f32 %v733, %v734
        %770 = vmax.xlane.f32.xlu0 %v769
        %v771 = vpop.xlane.xlu0 %770
        %v772 = vmax.f32 %v735, %v736
        %773 = vmax.xlane.f32.xlu0 %v772
        %v774 = vpop.xlane.xlu0 %773
        %v775 = vmax.f32 %v737, %v738
        %776 = vmax.xlane.f32.xlu0 %v775
        %v777 = vpop.xlane.xlu0 %776
        %v778 = vmax.f32 %v739, %v740
        %779 = vmax.xlane.f32.xlu0 %v778
        %v780 = vpop.xlane.xlu0 %779
        %v781 = vmax.f32 %v741, %v742
        %782 = vmax.xlane.f32.xlu0 %v781
        %v783 = vpop.xlane.xlu0 %782
        %v784 = vmax.f32 %v743, %v744
        %785 = vmax.xlane.f32.xlu0 %v784
        %v786 = vpop.xlane.xlu0 %785
        %v787 = vmax.f32 %v745, %v746
        %788 = vmax.xlane.f32.xlu0 %v787
        %v789 = vpop.xlane.xlu0 %788
        %v790 = vmax.f32 %v747, %v748
        %791 = vmax.xlane.f32.xlu0 %v790
        %v792 = vpop.xlane.xlu0 %791
        %v793 = vmax.f32 %v749, %v750
        %794 = vmax.xlane.f32.xlu0 %v793
        %v795 = vpop.xlane.xlu0 %794
        %v796 = vmax.f32 %v751, %v752
        %797 = vmax.xlane.f32.xlu0 %v796
        %v798 = vpop.xlane.xlu0 %797
        %v799 = vmax.f32 %v753, %v754
        %800 = vmax.xlane.f32.xlu0 %v799
        %v801 = vpop.xlane.xlu0 %800
        %v802 = vmax.f32 %v755, %v756
        %803 = vmax.xlane.f32.xlu0 %v802
        %v804 = vpop.xlane.xlu0 %803
        %v805 = vsub.f32 %v725, %v759
        %v806 = vsub.f32 %v726, %v759
        %v807 = vsub.f32 %v727, %v762
        %v808 = vsub.f32 %v728, %v762
        %v809 = vsub.f32 %v729, %v765
        %v810 = vsub.f32 %v730, %v765
        %v811 = vsub.f32 %v731, %v768
        %v812 = vsub.f32 %v732, %v768
        %v813 = vsub.f32 %v733, %v771
        %v814 = vsub.f32 %v734, %v771
        %v815 = vsub.f32 %v735, %v774
        %v816 = vsub.f32 %v736, %v774
        %v817 = vsub.f32 %v737, %v777
        %v818 = vsub.f32 %v738, %v777
        %v819 = vsub.f32 %v739, %v780
        %v820 = vsub.f32 %v740, %v780
        %v821 = vsub.f32 %v741, %v783
        %v822 = vsub.f32 %v742, %v783
        %v823 = vsub.f32 %v743, %v786
        %v824 = vsub.f32 %v744, %v786
        %v825 = vsub.f32 %v745, %v789
        %v826 = vsub.f32 %v746, %v789
        %v827 = vsub.f32 %v747, %v792
        %v828 = vsub.f32 %v748, %v792
        %v829 = vsub.f32 %v749, %v795
        %v830 = vsub.f32 %v750, %v795
        %v831 = vsub.f32 %v751, %v798
        %v832 = vsub.f32 %v752, %v798
        %v833 = vsub.f32 %v753, %v801
        %v834 = vsub.f32 %v754, %v801
        %v835 = vsub.f32 %v755, %v804
        %v836 = vsub.f32 %v756, %v804
        %v837 = vmul.f32 %v805, 1.442695
        %v838 = vpow.pop %v837
        %v839 = vmul.f32 %v806, 1.442695
        %v840 = vpow.pop %v839
        %v841 = vmul.f32 %v807, 1.442695
        %v842 = vpow.pop %v841
        %v843 = vmul.f32 %v808, 1.442695
        %v844 = vpow.pop %v843
        %v845 = vmul.f32 %v809, 1.442695
        %v846 = vpow.pop %v845
        %v847 = vmul.f32 %v810, 1.442695
        %v848 = vpow.pop %v847
        %v849 = vmul.f32 %v811, 1.442695
        %v850 = vpow.pop %v849
        %v851 = vmul.f32 %v812, 1.442695
        %v852 = vpow.pop %v851
        %v853 = vmul.f32 %v813, 1.442695
        %v854 = vpow.pop %v853
        %v855 = vmul.f32 %v814, 1.442695
        %v856 = vpow.pop %v855
        %v857 = vmul.f32 %v815, 1.442695
        %v858 = vpow.pop %v857
        %v859 = vmul.f32 %v816, 1.442695
        %v860 = vpow.pop %v859
        %v861 = vmul.f32 %v817, 1.442695
        %v862 = vpow.pop %v861
        %v863 = vmul.f32 %v818, 1.442695
        %v864 = vpow.pop %v863
        %v865 = vmul.f32 %v819, 1.442695
        %v866 = vpow.pop %v865
        %v867 = vmul.f32 %v820, 1.442695
        %v868 = vpow.pop %v867
        %v869 = vmul.f32 %v821, 1.442695
        %v870 = vpow.pop %v869
        %v871 = vmul.f32 %v822, 1.442695
        %v872 = vpow.pop %v871
        %v873 = vmul.f32 %v823, 1.442695
        %v874 = vpow.pop %v873
        %v875 = vmul.f32 %v824, 1.442695
        %v876 = vpow.pop %v875
        %v877 = vmul.f32 %v825, 1.442695
        %v878 = vpow.pop %v877
        %v879 = vmul.f32 %v826, 1.442695
        %v880 = vpow.pop %v879
        %v881 = vmul.f32 %v827, 1.442695
        %v882 = vpow.pop %v881
        %v883 = vmul.f32 %v828, 1.442695
        %v884 = vpow.pop %v883
        %v885 = vmul.f32 %v829, 1.442695
        %v886 = vpow.pop %v885
        %v887 = vmul.f32 %v830, 1.442695
        %v888 = vpow.pop %v887
        %v889 = vmul.f32 %v831, 1.442695
        %v890 = vpow.pop %v889
        %v891 = vmul.f32 %v832, 1.442695
        %v892 = vpow.pop %v891
        %v893 = vmul.f32 %v833, 1.442695
        %v894 = vpow.pop %v893
        %v895 = vmul.f32 %v834, 1.442695
        %v896 = vpow.pop %v895
        %v897 = vmul.f32 %v835, 1.442695
        %v898 = vpow.pop %v897
        %v899 = vmul.f32 %v836, 1.442695
        %v900 = vpow.pop %v899
        %v901 = vadd.f32 %v838, %v840
        %902 = vadd.xlane.f32.xlu0 %v901
        %v903 = vpop.xlane.xlu0 %902
        %v904 = vadd.f32 %v842, %v844
        %905 = vadd.xlane.f32.xlu0 %v904
        %v906 = vpop.xlane.xlu0 %905
        %v907 = vadd.f32 %v846, %v848
        %908 = vadd.xlane.f32.xlu0 %v907
        %v909 = vpop.xlane.xlu0 %908
        %v910 = vadd.f32 %v850, %v852
        %911 = vadd.xlane.f32.xlu0 %v910
        %v912 = vpop.xlane.xlu0 %911
        %v913 = vadd.f32 %v854, %v856
        %914 = vadd.xlane.f32.xlu0 %v913
        %v915 = vpop.xlane.xlu0 %914
        %v916 = vadd.f32 %v858, %v860
        %917 = vadd.xlane.f32.xlu0 %v916
        %v918 = vpop.xlane.xlu0 %917
        %v919 = vadd.f32 %v862, %v864
        %920 = vadd.xlane.f32.xlu0 %v919
        %v921 = vpop.xlane.xlu0 %920
        %v922 = vadd.f32 %v866, %v868
        %923 = vadd.xlane.f32.xlu0 %v922
        %v924 = vpop.xlane.xlu0 %923
        %v925 = vadd.f32 %v870, %v872
        %926 = vadd.xlane.f32.xlu0 %v925
        %v927 = vpop.xlane.xlu0 %926
        %v928 = vadd.f32 %v874, %v876
        %929 = vadd.xlane.f32.xlu0 %v928
        %v930 = vpop.xlane.xlu0 %929
        %v931 = vadd.f32 %v878, %v880
        %932 = vadd.xlane.f32.xlu0 %v931
        %v933 = vpop.xlane.xlu0 %932
        %v934 = vadd.f32 %v882, %v884
        %935 = vadd.xlane.f32.xlu0 %v934
        %v936 = vpop.xlane.xlu0 %935
        %v937 = vadd.f32 %v886, %v888
        %938 = vadd.xlane.f32.xlu0 %v937
        %v939 = vpop.xlane.xlu0 %938
        %v940 = vadd.f32 %v890, %v892
        %941 = vadd.xlane.f32.xlu0 %v940
        %v942 = vpop.xlane.xlu0 %941
        %v943 = vadd.f32 %v894, %v896
        %944 = vadd.xlane.f32.xlu0 %v943
        %v945 = vpop.xlane.xlu0 %944
        %v946 = vadd.f32 %v898, %v900
        %947 = vadd.xlane.f32.xlu0 %v946
        %v948 = vpop.xlane.xlu0 %947
        %v949 = vrcp.pop %v903
        %v950 = vrcp.pop %v906
        %v951 = vrcp.pop %v909
        %v952 = vrcp.pop %v912
        %v953 = vrcp.pop %v915
        %v954 = vrcp.pop %v918
        %v955 = vrcp.pop %v921
        %v956 = vrcp.pop %v924
        %v957 = vrcp.pop %v927
        %v958 = vrcp.pop %v930
        %v959 = vrcp.pop %v933
        %v960 = vrcp.pop %v936
        %v961 = vrcp.pop %v939
        %v962 = vrcp.pop %v942
        %v963 = vrcp.pop %v945
        %v964 = vrcp.pop %v948
        %v965 = vmul.f32 %v838, %v949
        %v966 = vmul.f32 %v840, %v949
        %v967 = vmul.f32 %v842, %v950
        %v968 = vmul.f32 %v844, %v950
        %v969 = vmul.f32 %v846, %v951
        %v970 = vmul.f32 %v848, %v951
        %v971 = vmul.f32 %v850, %v952
        %v972 = vmul.f32 %v852, %v952
        %v973 = vmul.f32 %v854, %v953
        %v974 = vmul.f32 %v856, %v953
        %v975 = vmul.f32 %v858, %v954
        %v976 = vmul.f32 %v860, %v954
        %v977 = vmul.f32 %v862, %v955
        %v978 = vmul.f32 %v864, %v955
        %v979 = vmul.f32 %v866, %v956
        %v980 = vmul.f32 %v868, %v956
        %v981 = vmul.f32 %v870, %v957
        %v982 = vmul.f32 %v872, %v957
        %v983 = vmul.f32 %v874, %v958
        %v984 = vmul.f32 %v876, %v958
        %v985 = vmul.f32 %v878, %v959
        %v986 = vmul.f32 %v880, %v959
        %v987 = vmul.f32 %v882, %v960
        %v988 = vmul.f32 %v884, %v960
        %v989 = vmul.f32 %v886, %v961
        %v990 = vmul.f32 %v888, %v961
        %v991 = vmul.f32 %v890, %v962
        %v992 = vmul.f32 %v892, %v962
        %v993 = vmul.f32 %v894, %v963
        %v994 = vmul.f32 %v896, %v963
        %v995 = vmul.f32 %v898, %v964
        %v996 = vmul.f32 %v900, %v964
        %v997 = vld [vmem:[#allocation8] sm:$0xff]
        %v998 = vld [vmem:[#allocation8 + $0x8] sm:$0xff]
        %v999 = vld [vmem:[#allocation8 + $0x10] sm:$0xff]
        %v1000 = vld [vmem:[#allocation8 + $0x18] sm:$0xff]
        %v1001 = vld [vmem:[#allocation8 + $0x20] sm:$0xff]
        %v1002 = vld [vmem:[#allocation8 + $0x28] sm:$0xff]
        %v1003 = vld [vmem:[#allocation8 + $0x30] sm:$0xff]
        %v1004 = vld [vmem:[#allocation8 + $0x38] sm:$0xff]
        %v1005 = vld [vmem:[#allocation8 + $0x40] sm:$0xff]
        %v1006 = vld [vmem:[#allocation8 + $0x48] sm:$0xff]
        %v1007 = vld [vmem:[#allocation8 + $0x50] sm:$0xff]
        %v1008 = vld [vmem:[#allocation8 + $0x58] sm:$0xff]
        %v1009 = vld [vmem:[#allocation8 + $0x60] sm:$0xff]
        %v1010 = vld [vmem:[#allocation8 + $0x68] sm:$0xff]
        %v1011 = vld [vmem:[#allocation8 + $0x70] sm:$0xff]
        %v1012 = vld [vmem:[#allocation8 + $0x78] sm:$0xff]
        %v1013 = vld [vmem:[#allocation8 + $0x80] sm:$0xff]
        %v1014 = vld [vmem:[#allocation8 + $0x88] sm:$0xff]
        %v1015 = vld [vmem:[#allocation8 + $0x90] sm:$0xff]
        %v1016 = vld [vmem:[#allocation8 + $0x98] sm:$0xff]
        %v1017 = vld [vmem:[#allocation8 + $0xa0] sm:$0xff]
        %v1018 = vld [vmem:[#allocation8 + $0xa8] sm:$0xff]
        %v1019 = vld [vmem:[#allocation8 + $0xb0] sm:$0xff]
        %v1020 = vld [vmem:[#allocation8 + $0xb8] sm:$0xff]
        %v1021 = vld [vmem:[#allocation8 + $0xc0] sm:$0xff]
        %v1022 = vld [vmem:[#allocation8 + $0xc8] sm:$0xff]
        %v1023 = vld [vmem:[#allocation8 + $0xd0] sm:$0xff]
        %v1024 = vld [vmem:[#allocation8 + $0xd8] sm:$0xff]
        %v1025 = vld [vmem:[#allocation8 + $0xe0] sm:$0xff]
        %v1026 = vld [vmem:[#allocation8 + $0xe8] sm:$0xff]
        %v1027 = vld [vmem:[#allocation8 + $0xf0] sm:$0xff]
        %v1028 = vld [vmem:[#allocation8 + $0xf8] sm:$0xff]
        %1029 = vmatprep.subr.mxu0 0.0
        %1030 = vmatpush1.msra.mxu0 %v997
        %1031 = vmatprep.subr.mxu0 0.0
        %1032 = vmatpush1.msra.mxu0 %v998
        %1033 = vmatprep.subr.mxu0 0.0
        %1034 = vmatpush1.msra.mxu0 %v999
        %1035 = vmatprep.subr.mxu0 0.0
        %1036 = vmatpush1.msra.mxu0 %v1000
        %1037 = vmatprep.subr.mxu0 0.0
        %1038 = vmatpush1.msra.mxu0 %v1001
        %1039 = vmatprep.subr.mxu0 0.0
        %1040 = vmatpush1.msra.mxu0 %v1002
        %1041 = vmatprep.subr.mxu0 0.0
        %1042 = vmatpush1.msra.mxu0 %v1003
        %1043 = vmatprep.subr.mxu0 0.0
        %1044 = vmatpush1.msra.mxu0 %v1004
        %1045 = vmatprep.subr.mxu0 0.0
        %1046 = vmatpush1.msra.mxu0 %v1005
        %1047 = vmatprep.subr.mxu0 0.0
        %1048 = vmatpush1.msra.mxu0 %v1006
        %1049 = vmatprep.subr.mxu0 0.0
        %1050 = vmatpush1.msra.mxu0 %v1007
        %1051 = vmatprep.subr.mxu0 0.0
        %1052 = vmatpush1.msra.mxu0 %v1008
        %1053 = vmatprep.subr.mxu0 0.0
        %1054 = vmatpush1.msra.mxu0 %v1009
        %1055 = vmatprep.subr.mxu0 0.0
        %1056 = vmatpush1.msra.mxu0 %v1010
        %1057 = vmatprep.subr.mxu0 0.0
        %1058 = vmatpush1.msra.mxu0 %v1011
        %1059 = vmatprep.subr.mxu0 0.0
        %1060 = vmatpush1.msra.mxu0 %v1012
        %1061 = vmatprep.subr.mxu0 0.0
        %1062 = vmatpush1.msra.mxu0 %v1013
        %1063 = vmatprep.subr.mxu0 0.0
        %1064 = vmatpush1.msra.mxu0 %v1014
        %1065 = vmatprep.subr.mxu0 0.0
        %1066 = vmatpush1.msra.mxu0 %v1015
        %1067 = vmatprep.subr.mxu0 0.0
        %1068 = vmatpush1.msra.mxu0 %v1016
        %1069 = vmatprep.subr.mxu0 0.0
        %1070 = vmatpush1.msra.mxu0 %v1017
        %1071 = vmatprep.subr.mxu0 0.0
        %1072 = vmatpush1.msra.mxu0 %v1018
        %1073 = vmatprep.subr.mxu0 0.0
        %1074 = vmatpush1.msra.mxu0 %v1019
        %1075 = vmatprep.subr.mxu0 0.0
        %1076 = vmatpush1.msra.mxu0 %v1020
        %1077 = vmatprep.subr.mxu0 0.0
        %1078 = vmatpush1.msra.mxu0 %v1021
        %1079 = vmatprep.subr.mxu0 0.0
        %1080 = vmatpush1.msra.mxu0 %v1022
        %1081 = vmatprep.subr.mxu0 0.0
        %1082 = vmatpush1.msra.mxu0 %v1023
        %1083 = vmatprep.subr.mxu0 0.0
        %1084 = vmatpush1.msra.mxu0 %v1024
        %1085 = vmatprep.subr.mxu0 0.0
        %1086 = vmatpush1.msra.mxu0 %v1025
        %1087 = vmatprep.subr.mxu0 0.0
        %1088 = vmatpush1.msra.mxu0 %v1026
        %1089 = vmatprep.subr.mxu0 0.0
        %1090 = vmatpush1.msra.mxu0 %v1027
        %1091 = vmatprep.subr.mxu0 0.0
        %1092 = vmatpush1.msra.mxu0 %v1028
        %1093 = vmatprep.mubr.f32.mxu0 %v966
        %1094 = vmatmul.mubr.f32.gmra.mrb[0].mxu0 %v965
        %v1095 = vpop.f32.mrb[0].mxu0
        %v1096 = vadd.f32 0.0, %v1095
        %v1097 = vpop.f32.mrb[0].mxu0
        %1098 = vmatprep.mubr.f32.mxu0 %v968
        %1099 = vmatmul.mubr.f32.gmra.mrb[0].mxu0 %v967
        %v1100 = vpop.f32.mrb[0].mxu0
        %v1101 = vadd.f32 0.0, %v1100
        %v1102 = vpop.f32.mrb[0].mxu0
        %1103 = vmatprep.mubr.f32.mxu0 %v970
        %1104 = vmatmul.mubr.f32.gmra.mrb[0].mxu0 %v969
        %v1105 = vpop.f32.mrb[0].mxu0
        %v1106 = vadd.f32 0.0, %v1105
        %v1107 = vpop.f32.mrb[0].mxu0
        %1108 = vmatprep.mubr.f32.mxu0 %v972
        %1109 = vmatmul.mubr.f32.gmra.mrb[0].mxu0 %v971
        %v1110 = vpop.f32.mrb[0].mxu0
        %v1111 = vadd.f32 0.0, %v1110
        %v1112 = vpop.f32.mrb[0].mxu0
        %1113 = vmatprep.mubr.f32.mxu0 %v974
        %1114 = vmatmul.mubr.f32.gmra.mrb[0].mxu0 %v973
        %v1115 = vpop.f32.mrb[0].mxu0
        %v1116 = vadd.f32 0.0, %v1115
        %v1117 = vpop.f32.mrb[0].mxu0
        %1118 = vmatprep.mubr.f32.mxu0 %v976
        %1119 = vmatmul.mubr.f32.gmra.mrb[0].mxu0 %v975
        %v1120 = vpop.f32.mrb[0].mxu0
        %v1121 = vadd.f32 0.0, %v1120
        %v1122 = vpop.f32.mrb[0].mxu0
        %1123 = vmatprep.mubr.f32.mxu0 %v978
        %1124 = vmatmul.mubr.f32.gmra.mrb[0].mxu0 %v977
        %v1125 = vpop.f32.mrb[0].mxu0
        %v1126 = vadd.f32 0.0, %v1125
        %v1127 = vpop.f32.mrb[0].mxu0
        %1128 = vmatprep.mubr.f32.mxu0 %v980
        %1129 = vmatmul.mubr.f32.gmra.mrb[0].mxu0 %v979
        %v1130 = vpop.f32.mrb[0].mxu0
        %v1131 = vadd.f32 0.0, %v1130
        %v1132 = vpop.f32.mrb[0].mxu0
        %1133 = vmatprep.mubr.f32.mxu0 %v982
        %1134 = vmatmul.mubr.f32.gmra.mrb[0].mxu0 %v981
        %v1135 = vpop.f32.mrb[0].mxu0
        %v1136 = vadd.f32 0.0, %v1135
        %v1137 = vpop.f32.mrb[0].mxu0
        %1138 = vmatprep.mubr.f32.mxu0 %v984
        %1139 = vmatmul.mubr.f32.gmra.mrb[0].mxu0 %v983
        %v1140 = vpop.f32.mrb[0].mxu0
        %v1141 = vadd.f32 0.0, %v1140
        %v1142 = vpop.f32.mrb[0].mxu0
        %1143 = vmatprep.mubr.f32.mxu0 %v986
        %1144 = vmatmul.mubr.f32.gmra.mrb[0].mxu0 %v985
        %v1145 = vpop.f32.mrb[0].mxu0
        %v1146 = vadd.f32 0.0, %v1145
        %v1147 = vpop.f32.mrb[0].mxu0
        %1148 = vmatprep.mubr.f32.mxu0 %v988
        %1149 = vmatmul.mubr.f32.gmra.mrb[0].mxu0 %v987
        %v1150 = vpop.f32.mrb[0].mxu0
        %v1151 = vadd.f32 0.0, %v1150
        %v1152 = vpop.f32.mrb[0].mxu0
        %1153 = vmatprep.mubr.f32.mxu0 %v990
        %1154 = vmatmul.mubr.f32.gmra.mrb[0].mxu0 %v989
        %v1155 = vpop.f32.mrb[0].mxu0
        %v1156 = vadd.f32 0.0, %v1155
        %v1157 = vpop.f32.mrb[0].mxu0
        %1158 = vmatprep.mubr.f32.mxu0 %v992
        %1159 = vmatmul.mubr.f32.gmra.mrb[0].mxu0 %v991
        %v1160 = vpop.f32.mrb[0].mxu0
        %v1161 = vadd.f32 0.0, %v1160
        %v1162 = vpop.f32.mrb[0].mxu0
        %1163 = vmatprep.mubr.f32.mxu0 %v994
        %1164 = vmatmul.mubr.f32.gmra.mrb[0].mxu0 %v993
        %v1165 = vpop.f32.mrb[0].mxu0
        %v1166 = vadd.f32 0.0, %v1165
        %v1167 = vpop.f32.mrb[0].mxu0
        %1168 = vmatprep.mubr.f32.mxu0 %v996
        %1169 = vmatmul.mubr.f32.gmra.mrb[0].mxu0 %v995
        %v1170 = vpop.f32.mrb[0].mxu0
        %v1171 = vadd.f32 0.0, %v1170
        %v1172 = vpop.f32.mrb[0].mxu0
        %1173 = vdwg.mxu0
        %vm1174 = vcmp.gt.f32.partialorder %v1096, 0.0
        %vm1175 = vcmp.gt.f32.partialorder %v1101, 0.0
        %vm1176 = vcmp.gt.f32.partialorder %v1106, 0.0
        %vm1177 = vcmp.gt.f32.partialorder %v1111, 0.0
        %vm1178 = vcmp.gt.f32.partialorder %v1116, 0.0
        %vm1179 = vcmp.gt.f32.partialorder %v1121, 0.0
        %vm1180 = vcmp.gt.f32.partialorder %v1126, 0.0
        %vm1181 = vcmp.gt.f32.partialorder %v1131, 0.0
        %vm1182 = vcmp.gt.f32.partialorder %v1136, 0.0
        %vm1183 = vcmp.gt.f32.partialorder %v1141, 0.0
        %vm1184 = vcmp.gt.f32.partialorder %v1146, 0.0
        %vm1185 = vcmp.gt.f32.partialorder %v1151, 0.0
        %vm1186 = vcmp.gt.f32.partialorder %v1156, 0.0
        %vm1187 = vcmp.gt.f32.partialorder %v1161, 0.0
        %vm1188 = vcmp.gt.f32.partialorder %v1166, 0.0
        %vm1189 = vcmp.gt.f32.partialorder %v1171, 0.0
        %v1190 = vmul.f32 %v1096, 1.442695
        %v1191 = vpow.pop %v1190
        %v1192 = vmul.f32 %v1101, 1.442695
        %v1193 = vpow.pop %v1192
        %v1194 = vmul.f32 %v1106, 1.442695
        %v1195 = vpow.pop %v1194
        %v1196 = vmul.f32 %v1111, 1.442695
        %v1197 = vpow.pop %v1196
        %v1198 = vmul.f32 %v1116, 1.442695
        %v1199 = vpow.pop %v1198
        %v1200 = vmul.f32 %v1121, 1.442695
        %v1201 = vpow.pop %v1200
        %v1202 = vmul.f32 %v1126, 1.442695
        %v1203 = vpow.pop %v1202
        %v1204 = vmul.f32 %v1131, 1.442695
        %v1205 = vpow.pop %v1204
        %v1206 = vmul.f32 %v1136, 1.442695
        %v1207 = vpow.pop %v1206
        %v1208 = vmul.f32 %v1141, 1.442695
        %v1209 = vpow.pop %v1208
        %v1210 = vmul.f32 %v1146, 1.442695
        %v1211 = vpow.pop %v1210
        %v1212 = vmul.f32 %v1151, 1.442695
        %v1213 = vpow.pop %v1212
        %v1214 = vmul.f32 %v1156, 1.442695
        %v1215 = vpow.pop %v1214
        %v1216 = vmul.f32 %v1161, 1.442695
        %v1217 = vpow.pop %v1216
        %v1218 = vmul.f32 %v1166, 1.442695
        %v1219 = vpow.pop %v1218
        %v1220 = vmul.f32 %v1171, 1.442695
        %v1221 = vpow.pop %v1220
        %v1222 = vsub.f32 %v1191, 1.0
        %v1223 = vsub.f32 %v1193, 1.0
        %v1224 = vsub.f32 %v1195, 1.0
        %v1225 = vsub.f32 %v1197, 1.0
        %v1226 = vsub.f32 %v1199, 1.0
        %v1227 = vsub.f32 %v1201, 1.0
        %v1228 = vsub.f32 %v1203, 1.0
        %v1229 = vsub.f32 %v1205, 1.0
        %v1230 = vsub.f32 %v1207, 1.0
        %v1231 = vsub.f32 %v1209, 1.0
        %v1232 = vsub.f32 %v1211, 1.0
        %v1233 = vsub.f32 %v1213, 1.0
        %v1234 = vsub.f32 %v1215, 1.0
        %v1235 = vsub.f32 %v1217, 1.0
        %v1236 = vsub.f32 %v1219, 1.0
        %v1237 = vsub.f32 %v1221, 1.0
        %v1238 = vsel %vm1174, %v1096, %v1222
        %v1239 = vsel %vm1175, %v1101, %v1223
        %v1240 = vsel %vm1176, %v1106, %v1224
        %v1241 = vsel %vm1177, %v1111, %v1225
        %v1242 = vsel %vm1178, %v1116, %v1226
        %v1243 = vsel %vm1179, %v1121, %v1227
        %v1244 = vsel %vm1180, %v1126, %v1228
        %v1245 = vsel %vm1181, %v1131, %v1229
        %v1246 = vsel %vm1182, %v1136, %v1230
        %v1247 = vsel %vm1183, %v1141, %v1231
        %v1248 = vsel %vm1184, %v1146, %v1232
        %v1249 = vsel %vm1185, %v1151, %v1233
        %v1250 = vsel %vm1186, %v1156, %v1234
        %v1251 = vsel %vm1187, %v1161, %v1235
        %v1252 = vsel %vm1188, %v1166, %v1236
        %v1253 = vsel %vm1189, %v1171, %v1237
        %v1254 = vld [vmem:[#allocation10] sm:$0xff]
        %v1255 = vld [vmem:[#allocation10 + $0x8] sm:$0xff]
        %v1256 = vld [vmem:[#allocation10 + $0x10] sm:$0xff]
        %v1257 = vld [vmem:[#allocation10 + $0x18] sm:$0xff]
        %v1258 = vld [vmem:[#allocation10 + $0x20] sm:$0xff]
        %v1259 = vld [vmem:[#allocation10 + $0x28] sm:$0xff]
        %v1260 = vld [vmem:[#allocation10 + $0x30] sm:$0xff]
        %v1261 = vld [vmem:[#allocation10 + $0x38] sm:$0xff]
        %v1262 = vld [vmem:[#allocation10 + $0x40] sm:$0xff]
        %v1263 = vld [vmem:[#allocation10 + $0x48] sm:$0xff]
        %v1264 = vld [vmem:[#allocation10 + $0x50] sm:$0xff]
        %v1265 = vld [vmem:[#allocation10 + $0x58] sm:$0xff]
        %v1266 = vld [vmem:[#allocation10 + $0x60] sm:$0xff]
        %v1267 = vld [vmem:[#allocation10 + $0x68] sm:$0xff]
        %v1268 = vld [vmem:[#allocation10 + $0x70] sm:$0xff]
        %v1269 = vld [vmem:[#allocation10 + $0x78] sm:$0xff]
        %1270 = vmatprep.subr.mxu0 0.0
        %1271 = vmatpush1.msra.mxu0 %v1254
        %1272 = vmatprep.subr.mxu0 0.0
        %1273 = vmatpush1.msra.mxu0 %v1255
        %1274 = vmatprep.subr.mxu0 0.0
        %1275 = vmatpush1.msra.mxu0 %v1256
        %1276 = vmatprep.subr.mxu0 0.0
        %1277 = vmatpush1.msra.mxu0 %v1257
        %1278 = vmatprep.subr.mxu0 0.0
        %1279 = vmatpush1.msra.mxu0 %v1258
        %1280 = vmatprep.subr.mxu0 0.0
        %1281 = vmatpush1.msra.mxu0 %v1259
        %1282 = vmatprep.subr.mxu0 0.0
        %1283 = vmatpush1.msra.mxu0 %v1260
        %1284 = vmatprep.subr.mxu0 0.0
        %1285 = vmatpush1.msra.mxu0 %v1261
        %1286 = vmatprep.subr.mxu0 0.0
        %1287 = vmatpush1.msra.mxu0 %v1262
        %1288 = vmatprep.subr.mxu0 0.0
        %1289 = vmatpush1.msra.mxu0 %v1263
        %1290 = vmatprep.subr.mxu0 0.0
        %1291 = vmatpush1.msra.mxu0 %v1264
        %1292 = vmatprep.subr.mxu0 0.0
        %1293 = vmatpush1.msra.mxu0 %v1265
        %1294 = vmatprep.subr.mxu0 0.0
        %1295 = vmatpush1.msra.mxu0 %v1266
        %1296 = vmatprep.subr.mxu0 0.0
        %1297 = vmatpush1.msra.mxu0 %v1267
        %1298 = vmatprep.subr.mxu0 0.0
        %1299 = vmatpush1.msra.mxu0 %v1268
        %1300 = vmatprep.subr.mxu0 0.0
        %1301 = vmatpush1.msra.mxu0 %v1269
        %1302 = vmatprep.subr.mxu0 0.0
        %1303 = vmatpush1.msra.mxu0 0.0
        %1304 = vmatprep.subr.mxu0 0.0
        %1305 = vmatpush1.msra.mxu0 0.0
        %1306 = vmatprep.subr.mxu0 0.0
        %1307 = vmatpush1.msra.mxu0 0.0
        %1308 = vmatprep.subr.mxu0 0.0
        %1309 = vmatpush1.msra.mxu0 0.0
        %1310 = vmatprep.subr.mxu0 0.0
        %1311 = vmatpush1.msra.mxu0 0.0
        %1312 = vmatprep.subr.mxu0 0.0
        %1313 = vmatpush1.msra.mxu0 0.0
        %1314 = vmatprep.subr.mxu0 0.0
        %1315 = vmatpush1.msra.mxu0 0.0
        %1316 = vmatprep.subr.mxu0 0.0
        %1317 = vmatpush1.msra.mxu0 0.0
        %1318 = vmatprep.subr.mxu0 0.0
        %1319 = vmatpush1.msra.mxu0 0.0
        %1320 = vmatprep.subr.mxu0 0.0
        %1321 = vmatpush1.msra.mxu0 0.0
        %1322 = vmatprep.subr.mxu0 0.0
        %1323 = vmatpush1.msra.mxu0 0.0
        %1324 = vmatprep.subr.mxu0 0.0
        %1325 = vmatpush1.msra.mxu0 0.0
        %1326 = vmatprep.subr.mxu0 0.0
        %1327 = vmatpush1.msra.mxu0 0.0
        %1328 = vmatprep.subr.mxu0 0.0
        %1329 = vmatpush1.msra.mxu0 0.0
        %1330 = vmatprep.subr.mxu0 0.0
        %1331 = vmatpush1.msra.mxu0 0.0
        %1332 = vmatprep.subr.mxu0 0.0
        %1333 = vmatpush1.msra.mxu0 0.0
        %1334 = vmatprep.mubr.f32.mxu0 0.0
        %1335 = vmatmul.mubr.f32.gmra.mrb[0].mxu0 %v1238
        %v1336 = vpop.f32.mrb[0].mxu0
        %v1337 = vadd.f32 0.0, %v1336
        %v1338 = vpop.f32.mrb[0].mxu0
        %1339 = vmatprep.mubr.f32.mxu0 0.0
        %1340 = vmatmul.mubr.f32.gmra.mrb[0].mxu0 %v1239
        %v1341 = vpop.f32.mrb[0].mxu0
        %v1342 = vadd.f32 0.0, %v1341
        %v1343 = vpop.f32.mrb[0].mxu0
        %1344 = vmatprep.mubr.f32.mxu0 0.0
        %1345 = vmatmul.mubr.f32.gmra.mrb[0].mxu0 %v1240
        %v1346 = vpop.f32.mrb[0].mxu0
        %v1347 = vadd.f32 0.0, %v1346
        %v1348 = vpop.f32.mrb[0].mxu0
        %1349 = vmatprep.mubr.f32.mxu0 0.0
        %1350 = vmatmul.mubr.f32.gmra.mrb[0].mxu0 %v1241
        %v1351 = vpop.f32.mrb[0].mxu0
        %v1352 = vadd.f32 0.0, %v1351
        %v1353 = vpop.f32.mrb[0].mxu0
        %1354 = vmatprep.mubr.f32.mxu0 0.0
        %1355 = vmatmul.mubr.f32.gmra.mrb[0].mxu0 %v1242
        %v1356 = vpop.f32.mrb[0].mxu0
        %v1357 = vadd.f32 0.0, %v1356
        %v1358 = vpop.f32.mrb[0].mxu0
        %1359 = vmatprep.mubr.f32.mxu0 0.0
        %1360 = vmatmul.mubr.f32.gmra.mrb[0].mxu0 %v1243
        %v1361 = vpop.f32.mrb[0].mxu0
        %v1362 = vadd.f32 0.0, %v1361
        %v1363 = vpop.f32.mrb[0].mxu0
        %1364 = vmatprep.mubr.f32.mxu0 0.0
        %1365 = vmatmul.mubr.f32.gmra.mrb[0].mxu0 %v1244
        %v1366 = vpop.f32.mrb[0].mxu0
        %v1367 = vadd.f32 0.0, %v1366
        %v1368 = vpop.f32.mrb[0].mxu0
        %1369 = vmatprep.mubr.f32.mxu0 0.0
        %1370 = vmatmul.mubr.f32.gmra.mrb[0].mxu0 %v1245
        %v1371 = vpop.f32.mrb[0].mxu0
        %v1372 = vadd.f32 0.0, %v1371
        %v1373 = vpop.f32.mrb[0].mxu0
        %1374 = vmatprep.mubr.f32.mxu0 0.0
        %1375 = vmatmul.mubr.f32.gmra.mrb[0].mxu0 %v1246
        %v1376 = vpop.f32.mrb[0].mxu0
        %v1377 = vadd.f32 0.0, %v1376
        %v1378 = vpop.f32.mrb[0].mxu0
        %1379 = vmatprep.mubr.f32.mxu0 0.0
        %1380 = vmatmul.mubr.f32.gmra.mrb[0].mxu0 %v1247
        %v1381 = vpop.f32.mrb[0].mxu0
        %v1382 = vadd.f32 0.0, %v1381
        %v1383 = vpop.f32.mrb[0].mxu0
        %1384 = vmatprep.mubr.f32.mxu0 0.0
        %1385 = vmatmul.mubr.f32.gmra.mrb[0].mxu0 %v1248
        %v1386 = vpop.f32.mrb[0].mxu0
        %v1387 = vadd.f32 0.0, %v1386
        %v1388 = vpop.f32.mrb[0].mxu0
        %1389 = vmatprep.mubr.f32.mxu0 0.0
        %1390 = vmatmul.mubr.f32.gmra.mrb[0].mxu0 %v1249
        %v1391 = vpop.f32.mrb[0].mxu0
        %v1392 = vadd.f32 0.0, %v1391
        %v1393 = vpop.f32.mrb[0].mxu0
        %1394 = vmatprep.mubr.f32.mxu0 0.0
        %1395 = vmatmul.mubr.f32.gmra.mrb[0].mxu0 %v1250
        %v1396 = vpop.f32.mrb[0].mxu0
        %v1397 = vadd.f32 0.0, %v1396
        %v1398 = vpop.f32.mrb[0].mxu0
        %1399 = vmatprep.mubr.f32.mxu0 0.0
        %1400 = vmatmul.mubr.f32.gmra.mrb[0].mxu0 %v1251
        %v1401 = vpop.f32.mrb[0].mxu0
        %v1402 = vadd.f32 0.0, %v1401
        %v1403 = vpop.f32.mrb[0].mxu0
        %1404 = vmatprep.mubr.f32.mxu0 0.0
        %1405 = vmatmul.mubr.f32.gmra.mrb[0].mxu0 %v1252
        %v1406 = vpop.f32.mrb[0].mxu0
        %v1407 = vadd.f32 0.0, %v1406
        %v1408 = vpop.f32.mrb[0].mxu0
        %1409 = vmatprep.mubr.f32.mxu0 0.0
        %1410 = vmatmul.mubr.f32.gmra.mrb[0].mxu0 %v1253
        %v1411 = vpop.f32.mrb[0].mxu0
        %v1412 = vadd.f32 0.0, %v1411
        %v1413 = vpop.f32.mrb[0].mxu0
        %1414 = vdwg.mxu0
        %v1415 = vmul.f32 %v1337, %v1337
        %v1416 = vmul.f32 %v1342, %v1342
        %v1417 = vmul.f32 %v1347, %v1347
        %v1418 = vmul.f32 %v1352, %v1352
        %v1419 = vmul.f32 %v1357, %v1357
        %v1420 = vmul.f32 %v1362, %v1362
        %v1421 = vmul.f32 %v1367, %v1367
        %v1422 = vmul.f32 %v1372, %v1372
        %v1423 = vmul.f32 %v1377, %v1377
        %v1424 = vmul.f32 %v1382, %v1382
        %v1425 = vmul.f32 %v1387, %v1387
        %v1426 = vmul.f32 %v1392, %v1392
        %v1427 = vmul.f32 %v1397, %v1397
        %v1428 = vmul.f32 %v1402, %v1402
        %v1429 = vmul.f32 %v1407, %v1407
        %v1430 = vmul.f32 %v1412, %v1412
        %1431 = vadd.xlane.f32.xlu0 %v1415
        %v1432 = vpop.xlane.xlu0 %1431
        %1433 = vadd.xlane.f32.xlu0 %v1416
        %v1434 = vpop.xlane.xlu0 %1433
        %1435 = vadd.xlane.f32.xlu0 %v1417
        %v1436 = vpop.xlane.xlu0 %1435
        %1437 = vadd.xlane.f32.xlu0 %v1418
        %v1438 = vpop.xlane.xlu0 %1437
        %1439 = vadd.xlane.f32.xlu0 %v1419
        %v1440 = vpop.xlane.xlu0 %1439
        %1441 = vadd.xlane.f32.xlu0 %v1420
        %v1442 = vpop.xlane.xlu0 %1441
        %1443 = vadd.xlane.f32.xlu0 %v1421
        %v1444 = vpop.xlane.xlu0 %1443
        %1445 = vadd.xlane.f32.xlu0 %v1422
        %v1446 = vpop.xlane.xlu0 %1445
        %1447 = vadd.xlane.f32.xlu0 %v1423
        %v1448 = vpop.xlane.xlu0 %1447
        %1449 = vadd.xlane.f32.xlu0 %v1424
        %v1450 = vpop.xlane.xlu0 %1449
        %1451 = vadd.xlane.f32.xlu0 %v1425
        %v1452 = vpop.xlane.xlu0 %1451
        %1453 = vadd.xlane.f32.xlu0 %v1426
        %v1454 = vpop.xlane.xlu0 %1453
        %1455 = vadd.xlane.f32.xlu0 %v1427
        %v1456 = vpop.xlane.xlu0 %1455
        %1457 = vadd.xlane.f32.xlu0 %v1428
        %v1458 = vpop.xlane.xlu0 %1457
        %1459 = vadd.xlane.f32.xlu0 %v1429
        %v1460 = vpop.xlane.xlu0 %1459
        %1461 = vadd.xlane.f32.xlu0 %v1430
        %v1462 = vpop.xlane.xlu0 %1461
        %v1463 = vrsqrt.pop %v1432
        %v1464 = vmul.f32 %v1432, %v1463
        %vm1465 = vcmp.eq.f32.partialorder %v1432, inf
        %v1466 = vsel %vm1465, %v1432, %v1464
        %vm1467 = vcmp.eq.f32.partialorder %v1432, 0.0
        %v1468 = vand.u32 %v1432, 2147483648
        %v1469 = vsel %vm1467, %v1468, %v1466
        %v1470 = vrsqrt.pop %v1434
        %v1471 = vmul.f32 %v1434, %v1470
        %vm1472 = vcmp.eq.f32.partialorder %v1434, inf
        %v1473 = vsel %vm1472, %v1434, %v1471
        %vm1474 = vcmp.eq.f32.partialorder %v1434, 0.0
        %v1475 = vand.u32 %v1434, 2147483648
        %v1476 = vsel %vm1474, %v1475, %v1473
        %v1477 = vrsqrt.pop %v1436
        %v1478 = vmul.f32 %v1436, %v1477
        %vm1479 = vcmp.eq.f32.partialorder %v1436, inf
        %v1480 = vsel %vm1479, %v1436, %v1478
        %vm1481 = vcmp.eq.f32.partialorder %v1436, 0.0
        %v1482 = vand.u32 %v1436, 2147483648
        %v1483 = vsel %vm1481, %v1482, %v1480
        %v1484 = vrsqrt.pop %v1438
        %v1485 = vmul.f32 %v1438, %v1484
        %vm1486 = vcmp.eq.f32.partialorder %v1438, inf
        %v1487 = vsel %vm1486, %v1438, %v1485
        %vm1488 = vcmp.eq.f32.partialorder %v1438, 0.0
        %v1489 = vand.u32 %v1438, 2147483648
        %v1490 = vsel %vm1488, %v1489, %v1487
        %v1491 = vrsqrt.pop %v1440
        %v1492 = vmul.f32 %v1440, %v1491
        %vm1493 = vcmp.eq.f32.partialorder %v1440, inf
        %v1494 = vsel %vm1493, %v1440, %v1492
        %vm1495 = vcmp.eq.f32.partialorder %v1440, 0.0
        %v1496 = vand.u32 %v1440, 2147483648
        %v1497 = vsel %vm1495, %v1496, %v1494
        %v1498 = vrsqrt.pop %v1442
        %v1499 = vmul.f32 %v1442, %v1498
        %vm1500 = vcmp.eq.f32.partialorder %v1442, inf
        %v1501 = vsel %vm1500, %v1442, %v1499
        %vm1502 = vcmp.eq.f32.partialorder %v1442, 0.0
        %v1503 = vand.u32 %v1442, 2147483648
        %v1504 = vsel %vm1502, %v1503, %v1501
        %v1505 = vrsqrt.pop %v1444
        %v1506 = vmul.f32 %v1444, %v1505
        %vm1507 = vcmp.eq.f32.partialorder %v1444, inf
        %v1508 = vsel %vm1507, %v1444, %v1506
        %vm1509 = vcmp.eq.f32.partialorder %v1444, 0.0
        %v1510 = vand.u32 %v1444, 2147483648
        %v1511 = vsel %vm1509, %v1510, %v1508
        %v1512 = vrsqrt.pop %v1446
        %v1513 = vmul.f32 %v1446, %v1512
        %vm1514 = vcmp.eq.f32.partialorder %v1446, inf
        %v1515 = vsel %vm1514, %v1446, %v1513
        %vm1516 = vcmp.eq.f32.partialorder %v1446, 0.0
        %v1517 = vand.u32 %v1446, 2147483648
        %v1518 = vsel %vm1516, %v1517, %v1515
        %v1519 = vrsqrt.pop %v1448
        %v1520 = vmul.f32 %v1448, %v1519
        %vm1521 = vcmp.eq.f32.partialorder %v1448, inf
        %v1522 = vsel %vm1521, %v1448, %v1520
        %vm1523 = vcmp.eq.f32.partialorder %v1448, 0.0
        %v1524 = vand.u32 %v1448, 2147483648
        %v1525 = vsel %vm1523, %v1524, %v1522
        %v1526 = vrsqrt.pop %v1450
        %v1527 = vmul.f32 %v1450, %v1526
        %vm1528 = vcmp.eq.f32.partialorder %v1450, inf
        %v1529 = vsel %vm1528, %v1450, %v1527
        %vm1530 = vcmp.eq.f32.partialorder %v1450, 0.0
        %v1531 = vand.u32 %v1450, 2147483648
        %v1532 = vsel %vm1530, %v1531, %v1529
        %v1533 = vrsqrt.pop %v1452
        %v1534 = vmul.f32 %v1452, %v1533
        %vm1535 = vcmp.eq.f32.partialorder %v1452, inf
        %v1536 = vsel %vm1535, %v1452, %v1534
        %vm1537 = vcmp.eq.f32.partialorder %v1452, 0.0
        %v1538 = vand.u32 %v1452, 2147483648
        %v1539 = vsel %vm1537, %v1538, %v1536
        %v1540 = vrsqrt.pop %v1454
        %v1541 = vmul.f32 %v1454, %v1540
        %vm1542 = vcmp.eq.f32.partialorder %v1454, inf
        %v1543 = vsel %vm1542, %v1454, %v1541
        %vm1544 = vcmp.eq.f32.partialorder %v1454, 0.0
        %v1545 = vand.u32 %v1454, 2147483648
        %v1546 = vsel %vm1544, %v1545, %v1543
        %v1547 = vrsqrt.pop %v1456
        %v1548 = vmul.f32 %v1456, %v1547
        %vm1549 = vcmp.eq.f32.partialorder %v1456, inf
        %v1550 = vsel %vm1549, %v1456, %v1548
        %vm1551 = vcmp.eq.f32.partialorder %v1456, 0.0
        %v1552 = vand.u32 %v1456, 2147483648
        %v1553 = vsel %vm1551, %v1552, %v1550
        %v1554 = vrsqrt.pop %v1458
        %v1555 = vmul.f32 %v1458, %v1554
        %vm1556 = vcmp.eq.f32.partialorder %v1458, inf
        %v1557 = vsel %vm1556, %v1458, %v1555
        %vm1558 = vcmp.eq.f32.partialorder %v1458, 0.0
        %v1559 = vand.u32 %v1458, 2147483648
        %v1560 = vsel %vm1558, %v1559, %v1557
        %v1561 = vrsqrt.pop %v1460
        %v1562 = vmul.f32 %v1460, %v1561
        %vm1563 = vcmp.eq.f32.partialorder %v1460, inf
        %v1564 = vsel %vm1563, %v1460, %v1562
        %vm1565 = vcmp.eq.f32.partialorder %v1460, 0.0
        %v1566 = vand.u32 %v1460, 2147483648
        %v1567 = vsel %vm1565, %v1566, %v1564
        %v1568 = vrsqrt.pop %v1462
        %v1569 = vmul.f32 %v1462, %v1568
        %vm1570 = vcmp.eq.f32.partialorder %v1462, inf
        %v1571 = vsel %vm1570, %v1462, %v1569
        %vm1572 = vcmp.eq.f32.partialorder %v1462, 0.0
        %v1573 = vand.u32 %v1462, 2147483648
        %v1574 = vsel %vm1572, %v1573, %v1571
        %v1575 = vmax.f32 %v1469, 1e-12
        %v1576 = vmax.f32 %v1476, 1e-12
        %v1577 = vmax.f32 %v1483, 1e-12
        %v1578 = vmax.f32 %v1490, 1e-12
        %v1579 = vmax.f32 %v1497, 1e-12
        %v1580 = vmax.f32 %v1504, 1e-12
        %v1581 = vmax.f32 %v1511, 1e-12
        %v1582 = vmax.f32 %v1518, 1e-12
        %v1583 = vmax.f32 %v1525, 1e-12
        %v1584 = vmax.f32 %v1532, 1e-12
        %v1585 = vmax.f32 %v1539, 1e-12
        %v1586 = vmax.f32 %v1546, 1e-12
        %v1587 = vmax.f32 %v1553, 1e-12
        %v1588 = vmax.f32 %v1560, 1e-12
        %v1589 = vmax.f32 %v1567, 1e-12
        %v1590 = vmax.f32 %v1574, 1e-12
        %v1591 = vrcp.pop %v1575
        %v1592 = vmul.f32 %v1337, %v1591
        %v1593 = vrcp.pop %v1576
        %v1594 = vmul.f32 %v1342, %v1593
        %v1595 = vrcp.pop %v1577
        %v1596 = vmul.f32 %v1347, %v1595
        %v1597 = vrcp.pop %v1578
        %v1598 = vmul.f32 %v1352, %v1597
        %v1599 = vrcp.pop %v1579
        %v1600 = vmul.f32 %v1357, %v1599
        %v1601 = vrcp.pop %v1580
        %v1602 = vmul.f32 %v1362, %v1601
        %v1603 = vrcp.pop %v1581
        %v1604 = vmul.f32 %v1367, %v1603
        %v1605 = vrcp.pop %v1582
        %v1606 = vmul.f32 %v1372, %v1605
        %v1607 = vrcp.pop %v1583
        %v1608 = vmul.f32 %v1377, %v1607
        %v1609 = vrcp.pop %v1584
        %v1610 = vmul.f32 %v1382, %v1609
        %v1611 = vrcp.pop %v1585
        %v1612 = vmul.f32 %v1387, %v1611
        %v1613 = vrcp.pop %v1586
        %v1614 = vmul.f32 %v1392, %v1613
        %v1615 = vrcp.pop %v1587
        %v1616 = vmul.f32 %v1397, %v1615
        %v1617 = vrcp.pop %v1588
        %v1618 = vmul.f32 %v1402, %v1617
        %v1619 = vrcp.pop %v1589
        %v1620 = vmul.f32 %v1407, %v1619
        %v1621 = vrcp.pop %v1590
        %v1622 = vmul.f32 %v1412, %v1621
        %1623 = vst [vmem:[%s397] sm:$0xff] %v1592
        %1624 = vst [vmem:[%s397 + $0x8] sm:$0xff] %v1594
        %1625 = vst [vmem:[%s397 + $0x10] sm:$0xff] %v1596
        %1626 = vst [vmem:[%s397 + $0x18] sm:$0xff] %v1598
        %1627 = vst [vmem:[%s397 + $0x20] sm:$0xff] %v1600
        %1628 = vst [vmem:[%s397 + $0x28] sm:$0xff] %v1602
        %1629 = vst [vmem:[%s397 + $0x30] sm:$0xff] %v1604
        %1630 = vst [vmem:[%s397 + $0x38] sm:$0xff] %v1606
        %1631 = vst [vmem:[%s397 + $0x40] sm:$0xff] %v1608
        %1632 = vst [vmem:[%s397 + $0x48] sm:$0xff] %v1610
        %1633 = vst [vmem:[%s397 + $0x50] sm:$0xff] %v1612
        %1634 = vst [vmem:[%s397 + $0x58] sm:$0xff] %v1614
        %1635 = vst [vmem:[%s397 + $0x60] sm:$0xff] %v1616
        %1636 = vst [vmem:[%s397 + $0x68] sm:$0xff] %v1618
        %1637 = vst [vmem:[%s397 + $0x70] sm:$0xff] %v1620
        %1638 = vst [vmem:[%s397 + $0x78] sm:$0xff] %v1622
        %v1639 = vld [vmem:[#allocation11] sm:$0xff]
        %v1640 = vld [vmem:[#allocation11 + $0x8] sm:$0xff]
        %v1641 = vld [vmem:[#allocation11 + $0x10] sm:$0xff]
        %v1642 = vld [vmem:[#allocation11 + $0x18] sm:$0xff]
        %v1643 = vld [vmem:[#allocation11 + $0x20] sm:$0xff]
        %v1644 = vld [vmem:[#allocation11 + $0x28] sm:$0xff]
        %v1645 = vld [vmem:[#allocation11 + $0x30] sm:$0xff]
        %v1646 = vld [vmem:[#allocation11 + $0x38] sm:$0xff]
        %v1647 = vld [vmem:[#allocation11 + $0x40] sm:$0xff]
        %v1648 = vld [vmem:[#allocation11 + $0x48] sm:$0xff]
        %v1649 = vld [vmem:[#allocation11 + $0x50] sm:$0xff]
        %v1650 = vld [vmem:[#allocation11 + $0x58] sm:$0xff]
        %v1651 = vld [vmem:[#allocation11 + $0x60] sm:$0xff]
        %v1652 = vld [vmem:[#allocation11 + $0x68] sm:$0xff]
        %v1653 = vld [vmem:[#allocation11 + $0x70] sm:$0xff]
        %v1654 = vld [vmem:[#allocation11 + $0x78] sm:$0xff]
        %1655 = vmatprep.subr.mxu0 0.0
        %1656 = vmatpush1.msra.mxu0 %v1639
        %1657 = vmatprep.subr.mxu0 0.0
        %1658 = vmatpush1.msra.mxu0 %v1640
        %1659 = vmatprep.subr.mxu0 0.0
        %1660 = vmatpush1.msra.mxu0 %v1641
        %1661 = vmatprep.subr.mxu0 0.0
        %1662 = vmatpush1.msra.mxu0 %v1642
        %1663 = vmatprep.subr.mxu0 0.0
        %1664 = vmatpush1.msra.mxu0 %v1643
        %1665 = vmatprep.subr.mxu0 0.0
        %1666 = vmatpush1.msra.mxu0 %v1644
        %1667 = vmatprep.subr.mxu0 0.0
        %1668 = vmatpush1.msra.mxu0 %v1645
        %1669 = vmatprep.subr.mxu0 0.0
        %1670 = vmatpush1.msra.mxu0 %v1646
        %1671 = vmatprep.subr.mxu0 0.0
        %1672 = vmatpush1.msra.mxu0 %v1647
        %1673 = vmatprep.subr.mxu0 0.0
        %1674 = vmatpush1.msra.mxu0 %v1648
        %1675 = vmatprep.subr.mxu0 0.0
        %1676 = vmatpush1.msra.mxu0 %v1649
        %1677 = vmatprep.subr.mxu0 0.0
        %1678 = vmatpush1.msra.mxu0 %v1650
        %1679 = vmatprep.subr.mxu0 0.0
        %1680 = vmatpush1.msra.mxu0 %v1651
        %1681 = vmatprep.subr.mxu0 0.0
        %1682 = vmatpush1.msra.mxu0 %v1652
        %1683 = vmatprep.subr.mxu0 0.0
        %1684 = vmatpush1.msra.mxu0 %v1653
        %1685 = vmatprep.subr.mxu0 0.0
        %1686 = vmatpush1.msra.mxu0 %v1654
        %1687 = vmatprep.subr.mxu0 0.0
        %1688 = vmatpush1.msra.mxu0 0.0
        %1689 = vmatprep.subr.mxu0 0.0
        %1690 = vmatpush1.msra.mxu0 0.0
        %1691 = vmatprep.subr.mxu0 0.0
        %1692 = vmatpush1.msra.mxu0 0.0
        %1693 = vmatprep.subr.mxu0 0.0
        %1694 = vmatpush1.msra.mxu0 0.0
        %1695 = vmatprep.subr.mxu0 0.0
        %1696 = vmatpush1.msra.mxu0 0.0
        %1697 = vmatprep.subr.mxu0 0.0
        %1698 = vmatpush1.msra.mxu0 0.0
        %1699 = vmatprep.subr.mxu0 0.0
        %1700 = vmatpush1.msra.mxu0 0.0
        %1701 = vmatprep.subr.mxu0 0.0
        %1702 = vmatpush1.msra.mxu0 0.0
        %1703 = vmatprep.subr.mxu0 0.0
        %1704 = vmatpush1.msra.mxu0 0.0
        %1705 = vmatprep.subr.mxu0 0.0
        %1706 = vmatpush1.msra.mxu0 0.0
        %1707 = vmatprep.subr.mxu0 0.0
        %1708 = vmatpush1.msra.mxu0 0.0
        %1709 = vmatprep.subr.mxu0 0.0
        %1710 = vmatpush1.msra.mxu0 0.0
        %1711 = vmatprep.subr.mxu0 0.0
        %1712 = vmatpush1.msra.mxu0 0.0
        %1713 = vmatprep.subr.mxu0 0.0
        %1714 = vmatpush1.msra.mxu0 0.0
        %1715 = vmatprep.subr.mxu0 0.0
        %1716 = vmatpush1.msra.mxu0 0.0
        %1717 = vmatprep.subr.mxu0 0.0
        %1718 = vmatpush1.msra.mxu0 0.0
        %1719 = vmatprep.mubr.f32.mxu0 0.0
        %1720 = vmatmul.mubr.f32.gmra.mrb[0].mxu0 %v1592
        %v1721 = vpop.f32.mrb[0].mxu0
        %v1722 = vadd.f32 0.0, %v1721
        %v1723 = vpop.f32.mrb[0].mxu0
        %1724 = vmatprep.mubr.f32.mxu0 0.0
        %1725 = vmatmul.mubr.f32.gmra.mrb[0].mxu0 %v1594
        %v1726 = vpop.f32.mrb[0].mxu0
        %v1727 = vadd.f32 0.0, %v1726
        %v1728 = vpop.f32.mrb[0].mxu0
        %1729 = vmatprep.mubr.f32.mxu0 0.0
        %1730 = vmatmul.mubr.f32.gmra.mrb[0].mxu0 %v1596
        %v1731 = vpop.f32.mrb[0].mxu0
        %v1732 = vadd.f32 0.0, %v1731
        %v1733 = vpop.f32.mrb[0].mxu0
        %1734 = vmatprep.mubr.f32.mxu0 0.0
        %1735 = vmatmul.mubr.f32.gmra.mrb[0].mxu0 %v1598
        %v1736 = vpop.f32.mrb[0].mxu0
        %v1737 = vadd.f32 0.0, %v1736
        %v1738 = vpop.f32.mrb[0].mxu0
        %1739 = vmatprep.mubr.f32.mxu0 0.0
        %1740 = vmatmul.mubr.f32.gmra.mrb[0].mxu0 %v1600
        %v1741 = vpop.f32.mrb[0].mxu0
        %v1742 = vadd.f32 0.0, %v1741
        %v1743 = vpop.f32.mrb[0].mxu0
        %1744 = vmatprep.mubr.f32.mxu0 0.0
        %1745 = vmatmul.mubr.f32.gmra.mrb[0].mxu0 %v1602
        %v1746 = vpop.f32.mrb[0].mxu0
        %v1747 = vadd.f32 0.0, %v1746
        %v1748 = vpop.f32.mrb[0].mxu0
        %1749 = vmatprep.mubr.f32.mxu0 0.0
        %1750 = vmatmul.mubr.f32.gmra.mrb[0].mxu0 %v1604
        %v1751 = vpop.f32.mrb[0].mxu0
        %v1752 = vadd.f32 0.0, %v1751
        %v1753 = vpop.f32.mrb[0].mxu0
        %1754 = vmatprep.mubr.f32.mxu0 0.0
        %1755 = vmatmul.mubr.f32.gmra.mrb[0].mxu0 %v1606
        %v1756 = vpop.f32.mrb[0].mxu0
        %v1757 = vadd.f32 0.0, %v1756
        %v1758 = vpop.f32.mrb[0].mxu0
        %1759 = vmatprep.mubr.f32.mxu0 0.0
        %1760 = vmatmul.mubr.f32.gmra.mrb[0].mxu0 %v1608
        %v1761 = vpop.f32.mrb[0].mxu0
        %v1762 = vadd.f32 0.0, %v1761
        %v1763 = vpop.f32.mrb[0].mxu0
        %1764 = vmatprep.mubr.f32.mxu0 0.0
        %1765 = vmatmul.mubr.f32.gmra.mrb[0].mxu0 %v1610
        %v1766 = vpop.f32.mrb[0].mxu0
        %v1767 = vadd.f32 0.0, %v1766
        %v1768 = vpop.f32.mrb[0].mxu0
        %1769 = vmatprep.mubr.f32.mxu0 0.0
        %1770 = vmatmul.mubr.f32.gmra.mrb[0].mxu0 %v1612
        %v1771 = vpop.f32.mrb[0].mxu0
        %v1772 = vadd.f32 0.0, %v1771
        %v1773 = vpop.f32.mrb[0].mxu0
        %1774 = vmatprep.mubr.f32.mxu0 0.0
        %1775 = vmatmul.mubr.f32.gmra.mrb[0].mxu0 %v1614
        %v1776 = vpop.f32.mrb[0].mxu0
        %v1777 = vadd.f32 0.0, %v1776
        %v1778 = vpop.f32.mrb[0].mxu0
        %1779 = vmatprep.mubr.f32.mxu0 0.0
        %1780 = vmatmul.mubr.f32.gmra.mrb[0].mxu0 %v1616
        %v1781 = vpop.f32.mrb[0].mxu0
        %v1782 = vadd.f32 0.0, %v1781
        %v1783 = vpop.f32.mrb[0].mxu0
        %1784 = vmatprep.mubr.f32.mxu0 0.0
        %1785 = vmatmul.mubr.f32.gmra.mrb[0].mxu0 %v1618
        %v1786 = vpop.f32.mrb[0].mxu0
        %v1787 = vadd.f32 0.0, %v1786
        %v1788 = vpop.f32.mrb[0].mxu0
        %1789 = vmatprep.mubr.f32.mxu0 0.0
        %1790 = vmatmul.mubr.f32.gmra.mrb[0].mxu0 %v1620
        %v1791 = vpop.f32.mrb[0].mxu0
        %v1792 = vadd.f32 0.0, %v1791
        %v1793 = vpop.f32.mrb[0].mxu0
        %1794 = vmatprep.mubr.f32.mxu0 0.0
        %1795 = vmatmul.mubr.f32.gmra.mrb[0].mxu0 %v1622
        %v1796 = vpop.f32.mrb[0].mxu0
        %v1797 = vadd.f32 0.0, %v1796
        %v1798 = vpop.f32.mrb[0].mxu0
        %1799 = vdwg.mxu0
        %1800 = vst [vmem:[%s404] sm:$0xff] %v1722
        %1801 = vst [vmem:[%s404 + $0x8] sm:$0xff] %v1727
        %1802 = vst [vmem:[%s404 + $0x10] sm:$0xff] %v1732
        %1803 = vst [vmem:[%s404 + $0x18] sm:$0xff] %v1737
        %1804 = vst [vmem:[%s404 + $0x20] sm:$0xff] %v1742
        %1805 = vst [vmem:[%s404 + $0x28] sm:$0xff] %v1747
        %1806 = vst [vmem:[%s404 + $0x30] sm:$0xff] %v1752
        %1807 = vst [vmem:[%s404 + $0x38] sm:$0xff] %v1757
        %1808 = vst [vmem:[%s404 + $0x40] sm:$0xff] %v1762
        %1809 = vst [vmem:[%s404 + $0x48] sm:$0xff] %v1767
        %1810 = vst [vmem:[%s404 + $0x50] sm:$0xff] %v1772
        %1811 = vst [vmem:[%s404 + $0x58] sm:$0xff] %v1777
        %1812 = vst [vmem:[%s404 + $0x60] sm:$0xff] %v1782
        %1813 = vst [vmem:[%s404 + $0x68] sm:$0xff] %v1787
        %1814 = vst [vmem:[%s404 + $0x70] sm:$0xff] %v1792
        %1815 = vst [vmem:[%s404 + $0x78] sm:$0xff] %v1797
        %s1816 = sand.u32 %s177, 1
        %s1817 = scalar_lea.sflag [#allocation4], %s1816
        %s1818 = sand.u32 %s177, 1
        %s1819 = smul.addr %s1818, 128
        %s1820 = scalar_lea.vmem [#allocation13], %s1819
        %s1821 = sand.u32 %s203, 1
        %s1822 = scalar_lea.sflag [#allocation15], %s1821
        %s1823 = sand.u32 %s203, 1
        %s1824 = smul.addr %s1823, 128
        %s1825 = scalar_lea.vmem [#allocation14], %s1824
        // Predicated region
        $region69: #{passage_forward.4} parent=43 // pred_check
          %p1826 = pneg %p187
        $region70: #{passage_forward.4} parent=43 // pred_check_branch
          %1828 = sbr.rel (%p1826) target = $region72
        $region71: #{passage_forward.4} parent=43 // pred_region
          %s1829 = smul.u32 16, %s33
          %s1831 = ssub.s32 2048, 2048
          %1832 = vsyncadd %s1817, %s1831
          %s1833 = smul.addr %s1829, 128
          %s1834 = scalar_lea.hbm %s6, %s1833
          %s1835 = sshll.u32 %s1820, 4
          %s1836 = int_to_ptr.vmem [resolvable:$true] %s1835
          %1841 = dma.vmem_to_hbm [thread:$0]  %s1836, 2048, %s1834, %s1817, 128, 128, 8
        $region72: #{passage_forward.4} parent=43 // pred_fallthru
          _
        // Predicated region
        $region73: #{passage_forward.4} parent=43 // pred_check
          %p1842 = pneg %p213
        $region74: #{passage_forward.4} parent=43 // pred_check_branch
          %1844 = sbr.rel (%p1842) target = $region76
        $region75: #{passage_forward.4} parent=43 // pred_region
          %s1845 = smul.u32 16, %s33
          %s1847 = ssub.s32 2048, 2048
          %1848 = vsyncadd %s1822, %s1847
          %s1849 = smul.addr %s1845, 128
          %s1850 = scalar_lea.hbm %s7, %s1849
          %s1851 = sshll.u32 %s1825, 4
          %s1852 = int_to_ptr.vmem [resolvable:$true] %s1851
          %1857 = dma.vmem_to_hbm [thread:$0]  %s1852, 2048, %s1850, %s1822, 128, 128, 8
        $region76: #{passage_forward.4} parent=43 // pred_fallthru
          _
      $region44: #{passage_forward.4} parent=5 // pred_fallthru
        _
      %p1858 = scmp.le.s32.totalorder 2, %s28
      // Predicated region
      $region77: #{passage_forward.4} parent=5 // pred_check
        %p1859 = pneg %p1858
      $region78: #{passage_forward.4} parent=5 // pred_check_branch
        %1861 = sbr.rel (%p1859) target = $region80
      $region79: #{passage_forward.4} parent=5 // pred_region
        %s1862 = ssub.s32 %s28, 2
        // Predicated region
        $region81: #{passage_forward.4} parent=79 // pred_check
          %p1863 = pneg %p193
        $region82: #{passage_forward.4} parent=79 // pred_check_branch
          %1865 = sbr.rel (%p1863) target = $region84
        $region83: #{passage_forward.4} parent=79 // pred_region
          %s1866 = sand.u32 %s178, 1
          %s1867 = scalar_lea.sflag [#allocation4], %s1866
          %s1868 = sand.u32 %s178, 1
          %s1869 = smul.addr %s1868, 128
          %s1870 = scalar_lea.vmem [#allocation13], %s1869
          %1871 = dma.done %s1867, 2048
        $region84: #{passage_forward.4} parent=79 // pred_fallthru
          _
        // Predicated region
        $region85: #{passage_forward.4} parent=79 // pred_check
          %p1872 = pneg %p219
        $region86: #{passage_forward.4} parent=79 // pred_check_branch
          %1874 = sbr.rel (%p1872) target = $region88
        $region87: #{passage_forward.4} parent=79 // pred_region
          %s1875 = sand.u32 %s204, 1
          %s1876 = scalar_lea.sflag [#allocation15], %s1875
          %s1877 = sand.u32 %s204, 1
          %s1878 = smul.addr %s1877, 128
          %s1879 = scalar_lea.vmem [#allocation14], %s1878
          %1880 = dma.done %s1876, 2048
        $region88: #{passage_forward.4} parent=79 // pred_fallthru
          _
      $region80: #{passage_forward.4} parent=5 // pred_fallthru
        _
    $region6: #{passage_forward.4} parent=1 // loop_footer
      %s32 = sadd.s32 1, %s28
    $region7: #{passage_forward.4} parent=1 // loop_footer_branch
      %27 = sbr.rel target = $region3
    $region8: #{passage_forward.4} parent=1 // loop_exit
      _
    %1881 = vsyncpa [#allocation3], 1
    %s1882 = scalar_lea.sflag [#allocation3], 1
    %1883 = vsyncpa %s1882, 1
    %1884 = vsyncpa [#allocation6], 1
    %s1885 = scalar_lea.sflag [#allocation6], 1
    %1886 = vsyncpa %s1885, 1
    %1887 = vsyncpa [#allocation9], 1
    %1888 = vsyncpa [#allocation12], 1
    %1889 = vsyncpa [#allocation4], 1
    %s1890 = scalar_lea.sflag [#allocation4], 1
    %1891 = vsyncpa %s1890, 1
    %1892 = vsyncpa [#allocation15], 1
    %s1893 = scalar_lea.sflag [#allocation15], 1
    %1894 = vsyncpa %s1893, 1

// kernel: passage_forward.5
$region0: #{passage_forward.5}
  #allocation0 [shape = 'u32[]', space=smem, size = 0x4, offset = 0x4, fixed_abs, tag = 'smem constant byte address 0x4 - core index']
  #allocation1 [shape = 'u32[144,128]{1,0:T(1,128)}', space=vmem, size = 0x12000, scoped, tag = 'internal scratch']
  #allocation2 [shape = 'f32[1]{0:T(128)}', space=smem, size = 0x200, scoped, tag = 'scratch operand']
  %s0 = inlined_call_operand.hbm [shape: s8[256,256], index: 0, kind: input, shape index: {}]
  %s1 = inlined_call_operand.hbm [shape: f32[256,1], index: 1, kind: input, shape index: {}]
  %s2 = inlined_call_operand.hbm [shape: f32[8,256], index: 2, kind: input, shape index: {}]
  %s3 = inlined_call_operand.hbm [shape: f32[256,128], index: 3, kind: input, shape index: {}]
  %s4 = inlined_call_operand.hbm [shape: f32[128,128], index: 4, kind: input, shape index: {}]
  %s5 = inlined_call_operand.hbm [shape: f32[256,128], index: 5, kind: input, shape index: {}]
  %s6 = inlined_call_operand.hbm [shape: f32[256,128], index: 6, kind: output, shape index: {0}]
  %s7 = inlined_call_operand.hbm [shape: f32[1,1], index: 7, kind: output, shape index: {1}]
  %8 = xla_tuple %s6, %s7
  %s9 = sld [smem:[#allocation0]]
  $region97: #{passage_forward.5} parent=0
    _
  %s11 = ssub.s32 1, %s9
  %s12 = scalar_select 0, %s11, %s9
  $region1: #{passage_forward.5} parent=0
    #allocation3 [shape = 'u8[65536]{0}', space=vmem, size = 0x10000, scoped, tag = 'input window, operand 0']
    #allocation4 [shape = 's32[2]{0}', space=sflag, size = 0x8, scoped, tag = 'scoped memory for passage_forward.5']
    #allocation5 [shape = 's32[2]{0}', space=sflag, size = 0x8, scoped, tag = 'scoped memory for passage_forward.5']
    #allocation6 [shape = 's32[2]{0}', space=sflag, size = 0x8, scoped, tag = 'scoped memory for passage_forward.5']
    #allocation7 [shape = 'u8[131072]{0}', space=vmem, size = 0x20000, scoped, tag = 'input window, operand 1']
    #allocation8 [shape = 's32[2]{0}', space=sflag, size = 0x8, scoped, tag = 'scoped memory for passage_forward.5']
    #allocation9 [shape = 'u8[8192]{0}', space=vmem, size = 0x2000, scoped, tag = 'input window, operand 2, single buffered']
    #allocation10 [shape = 'u8[131072]{0}', space=vmem, size = 0x20000, scoped, tag = 'input window, operand 3, single buffered']
    #allocation11 [shape = 's32[1]{0}', space=sflag, size = 0x4, scoped, tag = 'scoped memory for passage_forward.5']
    #allocation12 [shape = 'u8[65536]{0}', space=vmem, size = 0x10000, scoped, tag = 'input window, operand 4, single buffered']
    #allocation13 [shape = 'u8[131072]{0}', space=vmem, size = 0x20000, scoped, tag = 'input window, operand 5']
    #allocation14 [shape = 's32[2]{0}', space=sflag, size = 0x8, scoped, tag = 'scoped memory for passage_forward.5']
    #allocation15 [shape = 'u8[131072]{0}', space=vmem, size = 0x20000, scoped, tag = 'output window, operand 0']
    #allocation16 [shape = 'u8[512]{0}', space=smem, size = 0x200, scoped, tag = 'output window, operand 1, single buffered']
    %13 = vsyncpa [#allocation4], 0
    %s14 = scalar_lea.sflag [#allocation4], 1
    %15 = vsyncpa %s14, 0
    %16 = vsyncpa [#allocation8], 0
    %s17 = scalar_lea.sflag [#allocation8], 1
    %18 = vsyncpa %s17, 0
    %19 = vsyncpa [#allocation11], 0
    %20 = vsyncpa [#allocation14], 0
    %s21 = scalar_lea.sflag [#allocation14], 1
    %22 = vsyncpa %s21, 0
    %23 = vsyncpa [#allocation5], 0
    %s24 = scalar_lea.sflag [#allocation5], 1
    %25 = vsyncpa %s24, 0
    %26 = vsyncpa [#allocation6], 0
    loop: start=0, step=1, limit=4
    $region2: #{passage_forward.5} parent=1 // loop_pre_header
      _
    $region3: #{passage_forward.5} parent=1 // loop_header
      %s28 = sphi 0, %s32
      %p29 = scmp.ge.s32.totalorder %s28, 4
      %s38 = sphi 0, %s40
      %s41 = sphi 0, %s38
      %s42 = sphi 0, %s41
      %s58 = sphi 0, %s42
      %s64 = sphi 0, %s66
      %s67 = sphi 0, %s64
      %s68 = sphi 0, %s67
      %s84 = sphi 0, %s68
      %s88 = sphi 0, %s88
      %s90 = sphi 0, %s88
      %s91 = sphi 0, %s90
      %s105 = sphi 0, %s91
      %s109 = sphi 0, %s109
      %s111 = sphi 0, %s109
      %s112 = sphi 0, %s111
      %s126 = sphi 0, %s112
      %s130 = sphi 0, %s130
      %s132 = sphi 0, %s130
      %s133 = sphi 0, %s132
      %s147 = sphi 0, %s133
      %s153 = sphi 0, %s155
      %s156 = sphi 0, %s153
      %s157 = sphi 0, %s156
      %s173 = sphi 0, %s157
      %s179 = sphi 0, %s181
      %s182 = sphi 0, %s179
      %s183 = sphi 0, %s182
      %s199 = sphi 0, %s183
      %s203 = sphi 0, %s203
      %s205 = sphi 0, %s203
      %s206 = sphi 0, %s205
      %s220 = sphi 0, %s206
    $region4: #{passage_forward.5} parent=1 // loop_header_branch
      %31 = sbr.rel (%p29) target = $region8
    $region5: #{passage_forward.5} parent=1 // loop_body
      %s33 = ssub.s32 %s28, 1
      %s34 = ssub.s32 %s28, 2
      %s35 = sadd.s32 %s28, 1
      %s36 = ssub.s32 %s28, %s35
      %p37 = scmp.eq.s32.totalorder %s36, 0
      %s39 = sadd.s32 %s38, 1
      %s40 = scalar_select %p37, %s38, %s39
      %p43 = pneg %p37
      %p44 = scmp.eq.s32.totalorder %s28, 1
      %p45 = por %p43, %p44
      %p46 = scmp.ne.s32.totalorder %s38, %s41
      %p47 = scmp.eq.s32.totalorder %s28, 0
      %p48 = por %p46, %p47
      %p49 = scmp.ne.s32.totalorder %s38, %s41
      %p50 = scmp.eq.s32.totalorder %s33, 1
      %p51 = por %p49, %p50
      %p52 = scmp.ne.s32.totalorder %s41, %s42
      %p53 = scmp.eq.s32.totalorder %s33, 0
      %p54 = por %p52, %p53
      %p55 = scmp.ne.s32.totalorder %s41, %s42
      %p56 = scmp.eq.s32.totalorder %s34, 1
      %p57 = por %p55, %p56
      %p59 = scmp.ne.s32.totalorder %s42, %s58
      %p60 = scmp.eq.s32.totalorder %s34, 0
      %p61 = por %p59, %p60
      %s62 = ssub.s32 %s28, %s35
      %p63 = scmp.eq.s32.totalorder %s62, 0
      %s65 = sadd.s32 %s64, 1
      %s66 = scalar_select %p63, %s64, %s65
      %p69 = pneg %p63
      %p70 = scmp.eq.s32.totalorder %s28, 1
      %p71 = por %p69, %p70
      %p72 = scmp.ne.s32.totalorder %s64, %s67
      %p73 = scmp.eq.s32.totalorder %s28, 0
      %p74 = por %p72, %p73
      %p75 = scmp.ne.s32.totalorder %s64, %s67
      %p76 = scmp.eq.s32.totalorder %s33, 1
      %p77 = por %p75, %p76
      %p78 = scmp.ne.s32.totalorder %s67, %s68
      %p79 = scmp.eq.s32.totalorder %s33, 0
      %p80 = por %p78, %p79
      %p81 = scmp.ne.s32.totalorder %s67, %s68
      %p82 = scmp.eq.s32.totalorder %s34, 1
      %p83 = por %p81, %p82
      %p85 = scmp.ne.s32.totalorder %s68, %s84
      %p86 = scmp.eq.s32.totalorder %s34, 0
      %p87 = por %p85, %p86
      %s89 = sadd.s32 %s88, 1
      %p92 = scmp.eq.s32.totalorder %s28, 1
      %p93 = scmp.ne.s32.totalorder %s88, %s90
      %p94 = scmp.eq.s32.totalorder %s28, 0
      %p95 = por %p93, %p94
      %p96 = scmp.ne.s32.totalorder %s88, %s90
      %p97 = scmp.eq.s32.totalorder %s33, 1
      %p98 = por %p96, %p97
      %p99 = scmp.ne.s32.totalorder %s90, %s91
      %p100 = scmp.eq.s32.totalorder %s33, 0
      %p101 = por %p99, %p100
      %p102 = scmp.ne.s32.totalorder %s90, %s91
      %p103 = scmp.eq.s32.totalorder %s34, 1
      %p104 = por %p102, %p103
      %p106 = scmp.ne.s32.totalorder %s91, %s105
      %p107 = scmp.eq.s32.totalorder %s34, 0
      %p108 = por %p106, %p107
      %s110 = sadd.s32 %s109, 1
      %p113 = scmp.eq.s32.totalorder %s28, 1
      %p114 = scmp.ne.s32.totalorder %s109, %s111
      %p115 = scmp.eq.s32.totalorder %s28, 0
      %p116 = por %p114, %p115
      %p117 = scmp.ne.s32.totalorder %s109, %s111
      %p118 = scmp.eq.s32.totalorder %s33, 1
      %p119 = por %p117, %p118
      %p120 = scmp.ne.s32.totalorder %s111, %s112
      %p121 = scmp.eq.s32.totalorder %s33, 0
      %p122 = por %p120, %p121
      %p123 = scmp.ne.s32.totalorder %s111, %s112
      %p124 = scmp.eq.s32.totalorder %s34, 1
      %p125 = por %p123, %p124
      %p127 = scmp.ne.s32.totalorder %s112, %s126
      %p128 = scmp.eq.s32.totalorder %s34, 0
      %p129 = por %p127, %p128
      %s131 = sadd.s32 %s130, 1
      %p134 = scmp.eq.s32.totalorder %s28, 1
      %p135 = scmp.ne.s32.totalorder %s130, %s132
      %p136 = scmp.eq.s32.totalorder %s28, 0
      %p137 = por %p135, %p136
      %p138 = scmp.ne.s32.totalorder %s130, %s132
      %p139 = scmp.eq.s32.totalorder %s33, 1
      %p140 = por %p138, %p139
      %p141 = scmp.ne.s32.totalorder %s132, %s133
      %p142 = scmp.eq.s32.totalorder %s33, 0
      %p143 = por %p141, %p142
      %p144 = scmp.ne.s32.totalorder %s132, %s133
      %p145 = scmp.eq.s32.totalorder %s34, 1
      %p146 = por %p144, %p145
      %p148 = scmp.ne.s32.totalorder %s133, %s147
      %p149 = scmp.eq.s32.totalorder %s34, 0
      %p150 = por %p148, %p149
      %s151 = ssub.s32 %s28, %s35
      %p152 = scmp.eq.s32.totalorder %s151, 0
      %s154 = sadd.s32 %s153, 1
      %s155 = scalar_select %p152, %s153, %s154
      %p158 = pneg %p152
      %p159 = scmp.eq.s32.totalorder %s28, 1
      %p160 = por %p158, %p159
      %p161 = scmp.ne.s32.totalorder %s153, %s156
      %p162 = scmp.eq.s32.totalorder %s28, 0
      %p163 = por %p161, %p162
      %p164 = scmp.ne.s32.totalorder %s153, %s156
      %p165 = scmp.eq.s32.totalorder %s33, 1
      %p166 = por %p164, %p165
      %p167 = scmp.ne.s32.totalorder %s156, %s157
      %p168 = scmp.eq.s32.totalorder %s33, 0
      %p169 = por %p167, %p168
      %p170 = scmp.ne.s32.totalorder %s156, %s157
      %p171 = scmp.eq.s32.totalorder %s34, 1
      %p172 = por %p170, %p171
      %p174 = scmp.ne.s32.totalorder %s157, %s173
      %p175 = scmp.eq.s32.totalorder %s34, 0
      %p176 = por %p174, %p175
      %s177 = ssub.s32 %s28, %s35
      %p178 = scmp.eq.s32.totalorder %s177, 0
      %s180 = sadd.s32 %s179, 1
      %s181 = scalar_select %p178, %s179, %s180
      %p184 = pneg %p178
      %p185 = scmp.eq.s32.totalorder %s28, 1
      %p186 = por %p184, %p185
      %p187 = scmp.ne.s32.totalorder %s179, %s182
      %p188 = scmp.eq.s32.totalorder %s28, 0
      %p189 = por %p187, %p188
      %p190 = scmp.ne.s32.totalorder %s179, %s182
      %p191 = scmp.eq.s32.totalorder %s33, 1
      %p192 = por %p190, %p191
      %p193 = scmp.ne.s32.totalorder %s182, %s183
      %p194 = scmp.eq.s32.totalorder %s33, 0
      %p195 = por %p193, %p194
      %p196 = scmp.ne.s32.totalorder %s182, %s183
      %p197 = scmp.eq.s32.totalorder %s34, 1
      %p198 = por %p196, %p197
      %p200 = scmp.ne.s32.totalorder %s183, %s199
      %p201 = scmp.eq.s32.totalorder %s34, 0
      %p202 = por %p200, %p201
      %s204 = sadd.s32 %s203, 1
      %p207 = scmp.eq.s32.totalorder %s28, 1
      %p208 = scmp.ne.s32.totalorder %s203, %s205
      %p209 = scmp.eq.s32.totalorder %s28, 0
      %p210 = por %p208, %p209
      %p211 = scmp.ne.s32.totalorder %s203, %s205
      %p212 = scmp.eq.s32.totalorder %s33, 1
      %p213 = por %p211, %p212
      %p214 = scmp.ne.s32.totalorder %s205, %s206
      %p215 = scmp.eq.s32.totalorder %s33, 0
      %p216 = por %p214, %p215
      %p217 = scmp.ne.s32.totalorder %s205, %s206
      %p218 = scmp.eq.s32.totalorder %s34, 1
      %p219 = por %p217, %p218
      %p221 = scmp.ne.s32.totalorder %s206, %s220
      %p222 = scmp.eq.s32.totalorder %s34, 0
      %p223 = por %p221, %p222
      %p224 = scmp.le.s32.totalorder 1, %s28
      %p225 = scmp.lt.s32.totalorder %s28, 3
      %p226 = pnand %p224, %p225
      %p227 = pneg %p226
      // Predicated region
      $region9: #{passage_forward.5} parent=5 // pred_check
        _
      $region10: #{passage_forward.5} parent=5 // pred_check_branch
        %229 = sbr.rel (%p226) target = $region12
      $region11: #{passage_forward.5} parent=5 // pred_region
        %s230 = ssub.s32 %s28, 1
        // Predicated region
        $region13: #{passage_forward.5} parent=11 // pred_check
          %p231 = pneg %p101
        $region14: #{passage_forward.5} parent=11 // pred_check_branch
          %233 = sbr.rel (%p231) target = $region16
        $region15: #{passage_forward.5} parent=11 // pred_region
          %s235 = ssub.s32 256, 256
          %236 = vsyncadd [#allocation8], %s235
          %s238 = sshll.u32 [#allocation9], 4
          %s239 = int_to_ptr.vmem [resolvable:$true] %s238
          %241 = dma.hbm_to_vmem [thread:$0]  %s2, 256, %s239, [#allocation8]
        $region16: #{passage_forward.5} parent=11 // pred_fallthru
          _
        // Predicated region
        $region17: #{passage_forward.5} parent=11 // pred_check
          %p242 = pneg %p122
        $region18: #{passage_forward.5} parent=11 // pred_check_branch
          %244 = sbr.rel (%p242) target = $region20
        $region19: #{passage_forward.5} parent=11 // pred_region
          %s246 = ssub.s32 4096, 4096
          %247 = vsyncadd [#allocation11], %s246
          %s248 = sshll.u32 [#allocation10], 4
          %s249 = int_to_ptr.vmem [resolvable:$true] %s248
          %254 = dma.hbm_to_vmem [thread:$0]  %s3, 4096, %s249, [#allocation11], 128, 128, 8
        $region20: #{passage_forward.5} parent=11 // pred_fallthru
          _
        // Predicated region
        $region21: #{passage_forward.5} parent=11 // pred_check
          %p255 = pneg %p143
        $region22: #{passage_forward.5} parent=11 // pred_check_branch
          %257 = sbr.rel (%p255) target = $region24
        $region23: #{passage_forward.5} parent=11 // pred_region
          %s259 = ssub.s32 2048, 2048
          %260 = vsyncadd [#allocation11], %s259
          %s261 = sshll.u32 [#allocation12], 4
          %s262 = int_to_ptr.vmem [resolvable:$true] %s261
          %267 = dma.hbm_to_vmem [thread:$0]  %s4, 2048, %s262, [#allocation11], 128, 128, 8
        $region24: #{passage_forward.5} parent=11 // pred_fallthru
          _
      $region12: #{passage_forward.5} parent=5 // pred_fallthru
        _
      %p268 = scmp.lt.s32.totalorder %s28, 2
      // Predicated region
      $region25: #{passage_forward.5} parent=5 // pred_check
        %p269 = pneg %p268
      $region26: #{passage_forward.5} parent=5 // pred_check_branch
        %271 = sbr.rel (%p269) target = $region28
      $region27: #{passage_forward.5} parent=5 // pred_region
        // Predicated region
        $region29: #{passage_forward.5} parent=27 // pred_check
          %p272 = pneg %p48
        $region30: #{passage_forward.5} parent=27 // pred_check_branch
          %274 = sbr.rel (%p272) target = $region32
        $region31: #{passage_forward.5} parent=27 // pred_region
          %s275 = sand.u32 %s38, 1
          %s276 = scalar_lea.sflag [#allocation4], %s275
          %s277 = sand.u32 %s38, 1
          %s278 = smul.addr %s277, 64
          %s279 = scalar_lea.vmem [#allocation3], %s278
          %s280 = smul.u32 16, %s28
          %s282 = ssub.s32 1024, 1024
          %283 = vsyncadd %s276, %s282
          %s284 = smul.addr %s280, 2
          %s285 = smul.addr %s284, 32
          %s286 = scalar_lea.hbm %s0, %s285
          %s287 = sshll.u32 %s279, 4
          %s288 = int_to_ptr.vmem [resolvable:$true] %s287
          %293 = dma.hbm_to_vmem [thread:$0]  %s286, 1024, %s288, %s276, 64, 64, 4
        $region32: #{passage_forward.5} parent=27 // pred_fallthru
          _
        // Predicated region
        $region33: #{passage_forward.5} parent=27 // pred_check
          %p294 = pneg %p74
        $region34: #{passage_forward.5} parent=27 // pred_check_branch
          %296 = sbr.rel (%p294) target = $region36
        $region35: #{passage_forward.5} parent=27 // pred_region
          %s297 = sand.u32 %s28, 1
          %s298 = scalar_lea.sflag [#allocation8], %s297
          %s299 = sand.u32 %s64, 1
          %s300 = smul.addr %s299, 128
          %s301 = scalar_lea.vmem [#allocation7], %s300
          %s302 = smul.u32 16, %s28
          %s304 = ssub.s32 2048, 2048
          %305 = vsyncadd %s298, %s304
          %s306 = smul.addr %s302, 128
          %s307 = scalar_lea.hbm %s1, %s306
          %s308 = sshll.u32 %s301, 4
          %s309 = int_to_ptr.vmem [resolvable:$true] %s308
          %314 = dma.hbm_to_vmem [thread:$0]  %s307, 2048, %s309, %s298, 128, 128, 8
        $region36: #{passage_forward.5} parent=27 // pred_fallthru
          _
        // Predicated region
        $region37: #{passage_forward.5} parent=27 // pred_check
          %p315 = pneg %p163
        $region38: #{passage_forward.5} parent=27 // pred_check_branch
          %317 = sbr.rel (%p315) target = $region40
        $region39: #{passage_forward.5} parent=27 // pred_region
          %s318 = sand.u32 %s153, 1
          %s319 = scalar_lea.sflag [#allocation14], %s318
          %s320 = sand.u32 %s153, 1
          %s321 = smul.addr %s320, 128
          %s322 = scalar_lea.vmem [#allocation13], %s321
          %s323 = smul.u32 16, %s28
          %s325 = ssub.s32 2048, 2048
          %326 = vsyncadd %s319, %s325
          %s327 = smul.addr %s323, 128
          %s328 = scalar_lea.hbm %s5, %s327
          %s329 = sshll.u32 %s322, 4
          %s330 = int_to_ptr.vmem [resolvable:$true] %s329
          %335 = dma.hbm_to_vmem [thread:$0]  %s328, 2048, %s330, %s319, 128, 128, 8
        $region40: #{passage_forward.5} parent=27 // pred_fallthru
          _
      $region28: #{passage_forward.5} parent=5 // pred_fallthru
        _
      %p336 = scmp.le.s32.totalorder 1, %s28
      %p337 = scmp.lt.s32.totalorder %s28, 3
      %p338 = pnand %p336, %p337
      %p339 = pneg %p338
      // Predicated region
      $region41: #{passage_forward.5} parent=5 // pred_check
        _
      $region42: #{passage_forward.5} parent=5 // pred_check_branch
        %341 = sbr.rel (%p338) target = $region44
      $region43: #{passage_forward.5} parent=5 // pred_region
        %s342 = ssub.s32 %s28, 1
        %s343 = sand.u32 %s41, 1
        %s344 = scalar_lea.sflag [#allocation4], %s343
        %s345 = sand.u32 %s41, 1
        %s346 = smul.addr %s345, 64
        %s347 = scalar_lea.vmem [#allocation3], %s346
        // Predicated region
        $region45: #{passage_forward.5} parent=43 // pred_check
          %p348 = pneg %p54
        $region46: #{passage_forward.5} parent=43 // pred_check_branch
          %350 = sbr.rel (%p348) target = $region48
        $region47: #{passage_forward.5} parent=43 // pred_region
          %351 = dma.done %s344, 1024
        $region48: #{passage_forward.5} parent=43 // pred_fallthru
          _
        %s352 = sand.u32 %s33, 1
        %s353 = scalar_lea.sflag [#allocation8], %s352
        %s354 = sand.u32 %s67, 1
        %s355 = smul.addr %s354, 128
        %s356 = scalar_lea.vmem [#allocation7], %s355
        // Predicated region
        $region49: #{passage_forward.5} parent=43 // pred_check
          %p357 = pneg %p80
        $region50: #{passage_forward.5} parent=43 // pred_check_branch
          %359 = sbr.rel (%p357) target = $region52
        $region51: #{passage_forward.5} parent=43 // pred_region
          %360 = dma.done %s353, 2048
        $region52: #{passage_forward.5} parent=43 // pred_fallthru
          _
        // Predicated region
        $region53: #{passage_forward.5} parent=43 // pred_check
          %p361 = pneg %p101
        $region54: #{passage_forward.5} parent=43 // pred_check_branch
          %363 = sbr.rel (%p361) target = $region56
        $region55: #{passage_forward.5} parent=43 // pred_region
          %364 = dma.done [#allocation8], 256
        $region56: #{passage_forward.5} parent=43 // pred_fallthru
          _
        // Predicated region
        $region57: #{passage_forward.5} parent=43 // pred_check
          %p365 = pneg %p122
        $region58: #{passage_forward.5} parent=43 // pred_check_branch
          %367 = sbr.rel (%p365) target = $region60
        $region59: #{passage_forward.5} parent=43 // pred_region
          %368 = dma.done [#allocation11], 4096
        $region60: #{passage_forward.5} parent=43 // pred_fallthru
          _
        // Predicated region
        $region61: #{passage_forward.5} parent=43 // pred_check
          %p369 = pneg %p143
        $region62: #{passage_forward.5} parent=43 // pred_check_branch
          %371 = sbr.rel (%p369) target = $region64
        $region63: #{passage_forward.5} parent=43 // pred_region
          %372 = dma.done [#allocation11], 2048
        $region64: #{passage_forward.5} parent=43 // pred_fallthru
          _
        %s373 = sand.u32 %s156, 1
        %s374 = scalar_lea.sflag [#allocation14], %s373
        %s375 = sand.u32 %s156, 1
        %s376 = smul.addr %s375, 128
        %s377 = scalar_lea.vmem [#allocation13], %s376
        // Predicated region
        $region65: #{passage_forward.5} parent=43 // pred_check
          %p378 = pneg %p169
        $region66: #{passage_forward.5} parent=43 // pred_check_branch
          %380 = sbr.rel (%p378) target = $region68
        $region67: #{passage_forward.5} parent=43 // pred_region
          %381 = dma.done %s374, 2048
        $region68: #{passage_forward.5} parent=43 // pred_fallthru
          _
        %s382 = sand.u32 %s41, 1
        %s383 = scalar_lea.sflag [#allocation4], %s382
        %s384 = sand.u32 %s41, 1
        %s385 = smul.addr %s384, 64
        %s386 = scalar_lea.vmem [#allocation3], %s385
        %p387 = pneg %p54
        %p388 = pneg %p51
        %s389 = sand.u32 %s33, 1
        %s390 = scalar_lea.sflag [#allocation8], %s389
        %s391 = sand.u32 %s67, 1
        %s392 = smul.addr %s391, 128
        %s393 = scalar_lea.vmem [#allocation7], %s392
        %p394 = pneg %p80
        %p395 = pneg %p77
        %p396 = pneg %p101
        %p397 = pneg %p98
        %p398 = pneg %p122
        %p399 = pneg %p119
        %p400 = pneg %p143
        %p401 = pneg %p140
        %s402 = sand.u32 %s156, 1
        %s403 = scalar_lea.sflag [#allocation14], %s402
        %s404 = sand.u32 %s156, 1
        %s405 = smul.addr %s404, 128
        %s406 = scalar_lea.vmem [#allocation13], %s405
        %p407 = pneg %p169
        %p408 = pneg %p166
        %p409 = pneg %p195
        %p410 = pneg %p192
        %s411 = sand.u32 %s182, 1
        %s412 = scalar_lea.sflag [#allocation5], %s411
        %s413 = sand.u32 %s182, 1
        %s414 = smul.addr %s413, 128
        %s415 = scalar_lea.vmem [#allocation15], %s414
        %p416 = pneg %p216
        %p417 = pneg %p213
        %s418 = smul.u32 16, %s33
        %s419 = smul.u32 16, %s33
        %s420 = smul.u32 16, %s33
        %s421 = smul.u32 16, %s33
        %v422 = vld [vmem:[%s347] sm:$0xf]
        %v423 = vld [vmem:[%s347 + $0x4] sm:$0xf]
        %v424 = vld [vmem:[%s347 + $0x8] sm:$0xf]
        %v425 = vld [vmem:[%s347 + $0xc] sm:$0xf]
        %v426 = vld [vmem:[%s347 + $0x10] sm:$0xf]
        %v427 = vld [vmem:[%s347 + $0x14] sm:$0xf]
        %v428 = vld [vmem:[%s347 + $0x18] sm:$0xf]
        %v429 = vld [vmem:[%s347 + $0x1c] sm:$0xf]
        %v430 = vld [vmem:[%s347 + $0x20] sm:$0xf]
        %v431 = vld [vmem:[%s347 + $0x24] sm:$0xf]
        %v432 = vld [vmem:[%s347 + $0x28] sm:$0xf]
        %v433 = vld [vmem:[%s347 + $0x2c] sm:$0xf]
        %v434 = vld [vmem:[%s347 + $0x30] sm:$0xf]
        %v435 = vld [vmem:[%s347 + $0x34] sm:$0xf]
        %v436 = vld [vmem:[%s347 + $0x38] sm:$0xf]
        %v437 = vld [vmem:[%s347 + $0x3c] sm:$0xf]
        %v438 = vld [vmem:[%s356] sm:$0xff]
        %v439 = vld [vmem:[%s356 + $0x8] sm:$0xff]
        %v440 = vld [vmem:[%s356 + $0x10] sm:$0xff]
        %v441 = vld [vmem:[%s356 + $0x18] sm:$0xff]
        %v442 = vld [vmem:[%s356 + $0x20] sm:$0xff]
        %v443 = vld [vmem:[%s356 + $0x28] sm:$0xff]
        %v444 = vld [vmem:[%s356 + $0x30] sm:$0xff]
        %v445 = vld [vmem:[%s356 + $0x38] sm:$0xff]
        %v446 = vld [vmem:[%s356 + $0x40] sm:$0xff]
        %v447 = vld [vmem:[%s356 + $0x48] sm:$0xff]
        %v448 = vld [vmem:[%s356 + $0x50] sm:$0xff]
        %v449 = vld [vmem:[%s356 + $0x58] sm:$0xff]
        %v450 = vld [vmem:[%s356 + $0x60] sm:$0xff]
        %v451 = vld [vmem:[%s356 + $0x68] sm:$0xff]
        %v452 = vld [vmem:[%s356 + $0x70] sm:$0xff]
        %v453 = vld [vmem:[%s356 + $0x78] sm:$0xff]
        %v454 = vld [vmem:[#allocation9] ss:$8 sm:$0x3]
        %456 = vset.pattern.permute.xlu0 0
        %457 = vperm.xlu0 %456, %v438
        %v458 = vpop.permute.xlu0 %457
        %461 = vset.pattern.permute.xlu0 0
        %462 = vperm.xlu0 %461, %v439
        %v463 = vpop.permute.xlu0 %462
        %466 = vset.pattern.permute.xlu0 0
        %467 = vperm.xlu0 %466, %v440
        %v468 = vpop.permute.xlu0 %467
        %471 = vset.pattern.permute.xlu0 0
        %472 = vperm.xlu0 %471, %v441
        %v473 = vpop.permute.xlu0 %472
        %476 = vset.pattern.permute.xlu0 0
        %477 = vperm.xlu0 %476, %v442
        %v478 = vpop.permute.xlu0 %477
        %481 = vset.pattern.permute.xlu0 0
        %482 = vperm.xlu0 %481, %v443
        %v483 = vpop.permute.xlu0 %482
        %486 = vset.pattern.permute.xlu0 0
        %487 = vperm.xlu0 %486, %v444
        %v488 = vpop.permute.xlu0 %487
        %491 = vset.pattern.permute.xlu0 0
        %492 = vperm.xlu0 %491, %v445
        %v493 = vpop.permute.xlu0 %492
        %496 = vset.pattern.permute.xlu0 0
        %497 = vperm.xlu0 %496, %v446
        %v498 = vpop.permute.xlu0 %497
        %501 = vset.pattern.permute.xlu0 0
        %502 = vperm.xlu0 %501, %v447
        %v503 = vpop.permute.xlu0 %502
        %506 = vset.pattern.permute.xlu0 0
        %507 = vperm.xlu0 %506, %v448
        %v508 = vpop.permute.xlu0 %507
        %511 = vset.pattern.permute.xlu0 0
        %512 = vperm.xlu0 %511, %v449
        %v513 = vpop.permute.xlu0 %512
        %516 = vset.pattern.permute.xlu0 0
        %517 = vperm.xlu0 %516, %v450
        %v518 = vpop.permute.xlu0 %517
        %521 = vset.pattern.permute.xlu0 0
        %522 = vperm.xlu0 %521, %v451
        %v523 = vpop.permute.xlu0 %522
        %526 = vset.pattern.permute.xlu0 0
        %527 = vperm.xlu0 %526, %v452
        %v528 = vpop.permute.xlu0 %527
        %531 = vset.pattern.permute.xlu0 0
        %532 = vperm.xlu0 %531, %v453
        %v533 = vpop.permute.xlu0 %532
        %v536 = vlaneseq
        %v537 = vshrl.u32 %v536, 7
        %v538 = vsub.s32 0, %v537
        %v539 = vrot.slane %v454, %v538
        %v540 = vlaneseq
        %v541 = vshrl.u32 %v540, 7
        %v542 = vsub.s32 1, %v541
        %v543 = vrot.slane %v454, %v542
        %v546 = vadd.f32 %v458, %v539
        %v547 = vadd.f32 %v458, %v543
        %v548 = vadd.f32 %v463, %v539
        %v549 = vadd.f32 %v463, %v543
        %v550 = vadd.f32 %v468, %v539
        %v551 = vadd.f32 %v468, %v543
        %v552 = vadd.f32 %v473, %v539
        %v553 = vadd.f32 %v473, %v543
        %v554 = vadd.f32 %v478, %v539
        %v555 = vadd.f32 %v478, %v543
        %v556 = vadd.f32 %v483, %v539
        %v557 = vadd.f32 %v483, %v543
        %v558 = vadd.f32 %v488, %v539
        %v559 = vadd.f32 %v488, %v543
        %v560 = vadd.f32 %v493, %v539
        %v561 = vadd.f32 %v493, %v543
        %v562 = vadd.f32 %v498, %v539
        %v563 = vadd.f32 %v498, %v543
        %v564 = vadd.f32 %v503, %v539
        %v565 = vadd.f32 %v503, %v543
        %v566 = vadd.f32 %v508, %v539
        %v567 = vadd.f32 %v508, %v543
        %v568 = vadd.f32 %v513, %v539
        %v569 = vadd.f32 %v513, %v543
        %v570 = vadd.f32 %v518, %v539
        %v571 = vadd.f32 %v518, %v543
        %v572 = vadd.f32 %v523, %v539
        %v573 = vadd.f32 %v523, %v543
        %v574 = vadd.f32 %v528, %v539
        %v575 = vadd.f32 %v528, %v543
        %v576 = vadd.f32 %v533, %v539
        %v577 = vadd.f32 %v533, %v543
        %v578 = vmul.f32 %v546, 0.2
        %v579 = vmul.f32 %v547, 0.2
        %v580 = vmul.f32 %v548, 0.2
        %v581 = vmul.f32 %v549, 0.2
        %v582 = vmul.f32 %v550, 0.2
        %v583 = vmul.f32 %v551, 0.2
        %v584 = vmul.f32 %v552, 0.2
        %v585 = vmul.f32 %v553, 0.2
        %v586 = vmul.f32 %v554, 0.2
        %v587 = vmul.f32 %v555, 0.2
        %v588 = vmul.f32 %v556, 0.2
        %v589 = vmul.f32 %v557, 0.2
        %v590 = vmul.f32 %v558, 0.2
        %v591 = vmul.f32 %v559, 0.2
        %v592 = vmul.f32 %v560, 0.2
        %v593 = vmul.f32 %v561, 0.2
        %v594 = vmul.f32 %v562, 0.2
        %v595 = vmul.f32 %v563, 0.2
        %v596 = vmul.f32 %v564, 0.2
        %v597 = vmul.f32 %v565, 0.2
        %v598 = vmul.f32 %v566, 0.2
        %v599 = vmul.f32 %v567, 0.2
        %v600 = vmul.f32 %v568, 0.2
        %v601 = vmul.f32 %v569, 0.2
        %v602 = vmul.f32 %v570, 0.2
        %v603 = vmul.f32 %v571, 0.2
        %v604 = vmul.f32 %v572, 0.2
        %v605 = vmul.f32 %v573, 0.2
        %v606 = vmul.f32 %v574, 0.2
        %v607 = vmul.f32 %v575, 0.2
        %v608 = vmul.f32 %v576, 0.2
        %v609 = vmul.f32 %v577, 0.2
        %v610 = vmax.f32 %v546, %v578
        %v611 = vmax.f32 %v547, %v579
        %v612 = vmax.f32 %v548, %v580
        %v613 = vmax.f32 %v549, %v581
        %v614 = vmax.f32 %v550, %v582
        %v615 = vmax.f32 %v551, %v583
        %v616 = vmax.f32 %v552, %v584
        %v617 = vmax.f32 %v553, %v585
        %v618 = vmax.f32 %v554, %v586
        %v619 = vmax.f32 %v555, %v587
        %v620 = vmax.f32 %v556, %v588
        %v621 = vmax.f32 %v557, %v589
        %v622 = vmax.f32 %v558, %v590
        %v623 = vmax.f32 %v559, %v591
        %v624 = vmax.f32 %v560, %v592
        %v625 = vmax.f32 %v561, %v593
        %v626 = vmax.f32 %v562, %v594
        %v627 = vmax.f32 %v563, %v595
        %v628 = vmax.f32 %v564, %v596
        %v629 = vmax.f32 %v565, %v597
        %v630 = vmax.f32 %v566, %v598
        %v631 = vmax.f32 %v567, %v599
        %v632 = vmax.f32 %v568, %v600
        %v633 = vmax.f32 %v569, %v601
        %v634 = vmax.f32 %v570, %v602
        %v635 = vmax.f32 %v571, %v603
        %v636 = vmax.f32 %v572, %v604
        %v637 = vmax.f32 %v573, %v605
        %v638 = vmax.f32 %v574, %v606
        %v639 = vmax.f32 %v575, %v607
        %v640 = vmax.f32 %v576, %v608
        %v641 = vmax.f32 %v577, %v609
        %v642 = vunpack.c.0.s8 %v422
        %v643 = vunpack.c.1.s8 %v422
        %v644 = vunpack.c.0.s8 %v423
        %v645 = vunpack.c.1.s8 %v423
        %v646 = vunpack.c.0.s8 %v424
        %v647 = vunpack.c.1.s8 %v424
        %v648 = vunpack.c.0.s8 %v425
        %v649 = vunpack.c.1.s8 %v425
        %v650 = vunpack.c.0.s8 %v426
        %v651 = vunpack.c.1.s8 %v426
        %v652 = vunpack.c.0.s8 %v427
        %v653 = vunpack.c.1.s8 %v427
        %v654 = vunpack.c.0.s8 %v428
        %v655 = vunpack.c.1.s8 %v428
        %v656 = vunpack.c.0.s8 %v429
        %v657 = vunpack.c.1.s8 %v429
        %v658 = vunpack.c.0.s8 %v430
        %v659 = vunpack.c.1.s8 %v430
        %v660 = vunpack.c.0.s8 %v431
        %v661 = vunpack.c.1.s8 %v431
        %v662 = vunpack.c.0.s8 %v432
        %v663 = vunpack.c.1.s8 %v432
        %v664 = vunpack.c.0.s8 %v433
        %v665 = vunpack.c.1.s8 %v433
        %v666 = vunpack.c.0.s8 %v434
        %v667 = vunpack.c.1.s8 %v434
        %v668 = vunpack.c.0.s8 %v435
        %v669 = vunpack.c.1.s8 %v435
        %v670 = vunpack.c.0.s8 %v436
        %v671 = vunpack.c.1.s8 %v436
        %v672 = vunpack.c.0.s8 %v437
        %v673 = vunpack.c.1.s8 %v437
        %v674 = vcvt.s32.f32 %v642
        %v675 = vcvt.s32.f32 %v643
        %v676 = vcvt.s32.f32 %v644
        %v677 = vcvt.s32.f32 %v645
        %v678 = vcvt.s32.f32 %v646
        %v679 = vcvt.s32.f32 %v647
        %v680 = vcvt.s32.f32 %v648
        %v681 = vcvt.s32.f32 %v649
        %v682 = vcvt.s32.f32 %v650
        %v683 = vcvt.s32.f32 %v651
        %v684 = vcvt.s32.f32 %v652
        %v685 = vcvt.s32.f32 %v653
        %v686 = vcvt.s32.f32 %v654
        %v687 = vcvt.s32.f32 %v655
        %v688 = vcvt.s32.f32 %v656
        %v689 = vcvt.s32.f32 %v657
        %v690 = vcvt.s32.f32 %v658
        %v691 = vcvt.s32.f32 %v659
        %v692 = vcvt.s32.f32 %v660
        %v693 = vcvt.s32.f32 %v661
        %v694 = vcvt.s32.f32 %v662
        %v695 = vcvt.s32.f32 %v663
        %v696 = vcvt.s32.f32 %v664
        %v697 = vcvt.s32.f32 %v665
        %v698 = vcvt.s32.f32 %v666
        %v699 = vcvt.s32.f32 %v667
        %v700 = vcvt.s32.f32 %v668
        %v701 = vcvt.s32.f32 %v669
        %v702 = vcvt.s32.f32 %v670
        %v703 = vcvt.s32.f32 %v671
        %v704 = vcvt.s32.f32 %v672
        %v705 = vcvt.s32.f32 %v673
        %vm706 = vcmp.gt.f32.partialorder %v674, 0.0
        %vm707 = vcmp.gt.f32.partialorder %v675, 0.0
        %vm708 = vcmp.gt.f32.partialorder %v676, 0.0
        %vm709 = vcmp.gt.f32.partialorder %v677, 0.0
        %vm710 = vcmp.gt.f32.partialorder %v678, 0.0
        %vm711 = vcmp.gt.f32.partialorder %v679, 0.0
        %vm712 = vcmp.gt.f32.partialorder %v680, 0.0
        %vm713 = vcmp.gt.f32.partialorder %v681, 0.0
        %vm714 = vcmp.gt.f32.partialorder %v682, 0.0
        %vm715 = vcmp.gt.f32.partialorder %v683, 0.0
        %vm716 = vcmp.gt.f32.partialorder %v684, 0.0
        %vm717 = vcmp.gt.f32.partialorder %v685, 0.0
        %vm718 = vcmp.gt.f32.partialorder %v686, 0.0
        %vm719 = vcmp.gt.f32.partialorder %v687, 0.0
        %vm720 = vcmp.gt.f32.partialorder %v688, 0.0
        %vm721 = vcmp.gt.f32.partialorder %v689, 0.0
        %vm722 = vcmp.gt.f32.partialorder %v690, 0.0
        %vm723 = vcmp.gt.f32.partialorder %v691, 0.0
        %vm724 = vcmp.gt.f32.partialorder %v692, 0.0
        %vm725 = vcmp.gt.f32.partialorder %v693, 0.0
        %vm726 = vcmp.gt.f32.partialorder %v694, 0.0
        %vm727 = vcmp.gt.f32.partialorder %v695, 0.0
        %vm728 = vcmp.gt.f32.partialorder %v696, 0.0
        %vm729 = vcmp.gt.f32.partialorder %v697, 0.0
        %vm730 = vcmp.gt.f32.partialorder %v698, 0.0
        %vm731 = vcmp.gt.f32.partialorder %v699, 0.0
        %vm732 = vcmp.gt.f32.partialorder %v700, 0.0
        %vm733 = vcmp.gt.f32.partialorder %v701, 0.0
        %vm734 = vcmp.gt.f32.partialorder %v702, 0.0
        %vm735 = vcmp.gt.f32.partialorder %v703, 0.0
        %vm736 = vcmp.gt.f32.partialorder %v704, 0.0
        %vm737 = vcmp.gt.f32.partialorder %v705, 0.0
        %v738 = vsel %vm706, %v610, -1e+30
        %v739 = vsel %vm707, %v611, -1e+30
        %v740 = vsel %vm708, %v612, -1e+30
        %v741 = vsel %vm709, %v613, -1e+30
        %v742 = vsel %vm710, %v614, -1e+30
        %v743 = vsel %vm711, %v615, -1e+30
        %v744 = vsel %vm712, %v616, -1e+30
        %v745 = vsel %vm713, %v617, -1e+30
        %v746 = vsel %vm714, %v618, -1e+30
        %v747 = vsel %vm715, %v619, -1e+30
        %v748 = vsel %vm716, %v620, -1e+30
        %v749 = vsel %vm717, %v621, -1e+30
        %v750 = vsel %vm718, %v622, -1e+30
        %v751 = vsel %vm719, %v623, -1e+30
        %v752 = vsel %vm720, %v624, -1e+30
        %v753 = vsel %vm721, %v625, -1e+30
        %v754 = vsel %vm722, %v626, -1e+30
        %v755 = vsel %vm723, %v627, -1e+30
        %v756 = vsel %vm724, %v628, -1e+30
        %v757 = vsel %vm725, %v629, -1e+30
        %v758 = vsel %vm726, %v630, -1e+30
        %v759 = vsel %vm727, %v631, -1e+30
        %v760 = vsel %vm728, %v632, -1e+30
        %v761 = vsel %vm729, %v633, -1e+30
        %v762 = vsel %vm730, %v634, -1e+30
        %v763 = vsel %vm731, %v635, -1e+30
        %v764 = vsel %vm732, %v636, -1e+30
        %v765 = vsel %vm733, %v637, -1e+30
        %v766 = vsel %vm734, %v638, -1e+30
        %v767 = vsel %vm735, %v639, -1e+30
        %v768 = vsel %vm736, %v640, -1e+30
        %v769 = vsel %vm737, %v641, -1e+30
        %v770 = vmax.f32 %v738, %v739
        %771 = vmax.xlane.f32.xlu0 %v770
        %v772 = vpop.xlane.xlu0 %771
        %v773 = vmax.f32 %v740, %v741
        %774 = vmax.xlane.f32.xlu0 %v773
        %v775 = vpop.xlane.xlu0 %774
        %v776 = vmax.f32 %v742, %v743
        %777 = vmax.xlane.f32.xlu0 %v776
        %v778 = vpop.xlane.xlu0 %777
        %v779 = vmax.f32 %v744, %v745
        %780 = vmax.xlane.f32.xlu0 %v779
        %v781 = vpop.xlane.xlu0 %780
        %v782 = vmax.f32 %v746, %v747
        %783 = vmax.xlane.f32.xlu0 %v782
        %v784 = vpop.xlane.xlu0 %783
        %v785 = vmax.f32 %v748, %v749
        %786 = vmax.xlane.f32.xlu0 %v785
        %v787 = vpop.xlane.xlu0 %786
        %v788 = vmax.f32 %v750, %v751
        %789 = vmax.xlane.f32.xlu0 %v788
        %v790 = vpop.xlane.xlu0 %789
        %v791 = vmax.f32 %v752, %v753
        %792 = vmax.xlane.f32.xlu0 %v791
        %v793 = vpop.xlane.xlu0 %792
        %v794 = vmax.f32 %v754, %v755
        %795 = vmax.xlane.f32.xlu0 %v794
        %v796 = vpop.xlane.xlu0 %795
        %v797 = vmax.f32 %v756, %v757
        %798 = vmax.xlane.f32.xlu0 %v797
        %v799 = vpop.xlane.xlu0 %798
        %v800 = vmax.f32 %v758, %v759
        %801 = vmax.xlane.f32.xlu0 %v800
        %v802 = vpop.xlane.xlu0 %801
        %v803 = vmax.f32 %v760, %v761
        %804 = vmax.xlane.f32.xlu0 %v803
        %v805 = vpop.xlane.xlu0 %804
        %v806 = vmax.f32 %v762, %v763
        %807 = vmax.xlane.f32.xlu0 %v806
        %v808 = vpop.xlane.xlu0 %807
        %v809 = vmax.f32 %v764, %v765
        %810 = vmax.xlane.f32.xlu0 %v809
        %v811 = vpop.xlane.xlu0 %810
        %v812 = vmax.f32 %v766, %v767
        %813 = vmax.xlane.f32.xlu0 %v812
        %v814 = vpop.xlane.xlu0 %813
        %v815 = vmax.f32 %v768, %v769
        %816 = vmax.xlane.f32.xlu0 %v815
        %v817 = vpop.xlane.xlu0 %816
        %v818 = vsub.f32 %v738, %v772
        %v819 = vsub.f32 %v739, %v772
        %v820 = vsub.f32 %v740, %v775
        %v821 = vsub.f32 %v741, %v775
        %v822 = vsub.f32 %v742, %v778
        %v823 = vsub.f32 %v743, %v778
        %v824 = vsub.f32 %v744, %v781
        %v825 = vsub.f32 %v745, %v781
        %v826 = vsub.f32 %v746, %v784
        %v827 = vsub.f32 %v747, %v784
        %v828 = vsub.f32 %v748, %v787
        %v829 = vsub.f32 %v749, %v787
        %v830 = vsub.f32 %v750, %v790
        %v831 = vsub.f32 %v751, %v790
        %v832 = vsub.f32 %v752, %v793
        %v833 = vsub.f32 %v753, %v793
        %v834 = vsub.f32 %v754, %v796
        %v835 = vsub.f32 %v755, %v796
        %v836 = vsub.f32 %v756, %v799
        %v837 = vsub.f32 %v757, %v799
        %v838 = vsub.f32 %v758, %v802
        %v839 = vsub.f32 %v759, %v802
        %v840 = vsub.f32 %v760, %v805
        %v841 = vsub.f32 %v761, %v805
        %v842 = vsub.f32 %v762, %v808
        %v843 = vsub.f32 %v763, %v808
        %v844 = vsub.f32 %v764, %v811
        %v845 = vsub.f32 %v765, %v811
        %v846 = vsub.f32 %v766, %v814
        %v847 = vsub.f32 %v767, %v814
        %v848 = vsub.f32 %v768, %v817
        %v849 = vsub.f32 %v769, %v817
        %v850 = vmul.f32 %v818, 1.442695
        %v851 = vpow.pop %v850
        %v852 = vmul.f32 %v819, 1.442695
        %v853 = vpow.pop %v852
        %v854 = vmul.f32 %v820, 1.442695
        %v855 = vpow.pop %v854
        %v856 = vmul.f32 %v821, 1.442695
        %v857 = vpow.pop %v856
        %v858 = vmul.f32 %v822, 1.442695
        %v859 = vpow.pop %v858
        %v860 = vmul.f32 %v823, 1.442695
        %v861 = vpow.pop %v860
        %v862 = vmul.f32 %v824, 1.442695
        %v863 = vpow.pop %v862
        %v864 = vmul.f32 %v825, 1.442695
        %v865 = vpow.pop %v864
        %v866 = vmul.f32 %v826, 1.442695
        %v867 = vpow.pop %v866
        %v868 = vmul.f32 %v827, 1.442695
        %v869 = vpow.pop %v868
        %v870 = vmul.f32 %v828, 1.442695
        %v871 = vpow.pop %v870
        %v872 = vmul.f32 %v829, 1.442695
        %v873 = vpow.pop %v872
        %v874 = vmul.f32 %v830, 1.442695
        %v875 = vpow.pop %v874
        %v876 = vmul.f32 %v831, 1.442695
        %v877 = vpow.pop %v876
        %v878 = vmul.f32 %v832, 1.442695
        %v879 = vpow.pop %v878
        %v880 = vmul.f32 %v833, 1.442695
        %v881 = vpow.pop %v880
        %v882 = vmul.f32 %v834, 1.442695
        %v883 = vpow.pop %v882
        %v884 = vmul.f32 %v835, 1.442695
        %v885 = vpow.pop %v884
        %v886 = vmul.f32 %v836, 1.442695
        %v887 = vpow.pop %v886
        %v888 = vmul.f32 %v837, 1.442695
        %v889 = vpow.pop %v888
        %v890 = vmul.f32 %v838, 1.442695
        %v891 = vpow.pop %v890
        %v892 = vmul.f32 %v839, 1.442695
        %v893 = vpow.pop %v892
        %v894 = vmul.f32 %v840, 1.442695
        %v895 = vpow.pop %v894
        %v896 = vmul.f32 %v841, 1.442695
        %v897 = vpow.pop %v896
        %v898 = vmul.f32 %v842, 1.442695
        %v899 = vpow.pop %v898
        %v900 = vmul.f32 %v843, 1.442695
        %v901 = vpow.pop %v900
        %v902 = vmul.f32 %v844, 1.442695
        %v903 = vpow.pop %v902
        %v904 = vmul.f32 %v845, 1.442695
        %v905 = vpow.pop %v904
        %v906 = vmul.f32 %v846, 1.442695
        %v907 = vpow.pop %v906
        %v908 = vmul.f32 %v847, 1.442695
        %v909 = vpow.pop %v908
        %v910 = vmul.f32 %v848, 1.442695
        %v911 = vpow.pop %v910
        %v912 = vmul.f32 %v849, 1.442695
        %v913 = vpow.pop %v912
        %v914 = vadd.f32 %v851, %v853
        %915 = vadd.xlane.f32.xlu0 %v914
        %v916 = vpop.xlane.xlu0 %915
        %v917 = vadd.f32 %v855, %v857
        %918 = vadd.xlane.f32.xlu0 %v917
        %v919 = vpop.xlane.xlu0 %918
        %v920 = vadd.f32 %v859, %v861
        %921 = vadd.xlane.f32.xlu0 %v920
        %v922 = vpop.xlane.xlu0 %921
        %v923 = vadd.f32 %v863, %v865
        %924 = vadd.xlane.f32.xlu0 %v923
        %v925 = vpop.xlane.xlu0 %924
        %v926 = vadd.f32 %v867, %v869
        %927 = vadd.xlane.f32.xlu0 %v926
        %v928 = vpop.xlane.xlu0 %927
        %v929 = vadd.f32 %v871, %v873
        %930 = vadd.xlane.f32.xlu0 %v929
        %v931 = vpop.xlane.xlu0 %930
        %v932 = vadd.f32 %v875, %v877
        %933 = vadd.xlane.f32.xlu0 %v932
        %v934 = vpop.xlane.xlu0 %933
        %v935 = vadd.f32 %v879, %v881
        %936 = vadd.xlane.f32.xlu0 %v935
        %v937 = vpop.xlane.xlu0 %936
        %v938 = vadd.f32 %v883, %v885
        %939 = vadd.xlane.f32.xlu0 %v938
        %v940 = vpop.xlane.xlu0 %939
        %v941 = vadd.f32 %v887, %v889
        %942 = vadd.xlane.f32.xlu0 %v941
        %v943 = vpop.xlane.xlu0 %942
        %v944 = vadd.f32 %v891, %v893
        %945 = vadd.xlane.f32.xlu0 %v944
        %v946 = vpop.xlane.xlu0 %945
        %v947 = vadd.f32 %v895, %v897
        %948 = vadd.xlane.f32.xlu0 %v947
        %v949 = vpop.xlane.xlu0 %948
        %v950 = vadd.f32 %v899, %v901
        %951 = vadd.xlane.f32.xlu0 %v950
        %v952 = vpop.xlane.xlu0 %951
        %v953 = vadd.f32 %v903, %v905
        %954 = vadd.xlane.f32.xlu0 %v953
        %v955 = vpop.xlane.xlu0 %954
        %v956 = vadd.f32 %v907, %v909
        %957 = vadd.xlane.f32.xlu0 %v956
        %v958 = vpop.xlane.xlu0 %957
        %v959 = vadd.f32 %v911, %v913
        %960 = vadd.xlane.f32.xlu0 %v959
        %v961 = vpop.xlane.xlu0 %960
        %v962 = vrcp.pop %v916
        %v963 = vrcp.pop %v919
        %v964 = vrcp.pop %v922
        %v965 = vrcp.pop %v925
        %v966 = vrcp.pop %v928
        %v967 = vrcp.pop %v931
        %v968 = vrcp.pop %v934
        %v969 = vrcp.pop %v937
        %v970 = vrcp.pop %v940
        %v971 = vrcp.pop %v943
        %v972 = vrcp.pop %v946
        %v973 = vrcp.pop %v949
        %v974 = vrcp.pop %v952
        %v975 = vrcp.pop %v955
        %v976 = vrcp.pop %v958
        %v977 = vrcp.pop %v961
        %v978 = vmul.f32 %v851, %v962
        %v979 = vmul.f32 %v853, %v962
        %v980 = vmul.f32 %v855, %v963
        %v981 = vmul.f32 %v857, %v963
        %v982 = vmul.f32 %v859, %v964
        %v983 = vmul.f32 %v861, %v964
        %v984 = vmul.f32 %v863, %v965
        %v985 = vmul.f32 %v865, %v965
        %v986 = vmul.f32 %v867, %v966
        %v987 = vmul.f32 %v869, %v966
        %v988 = vmul.f32 %v871, %v967
        %v989 = vmul.f32 %v873, %v967
        %v990 = vmul.f32 %v875, %v968
        %v991 = vmul.f32 %v877, %v968
        %v992 = vmul.f32 %v879, %v969
        %v993 = vmul.f32 %v881, %v969
        %v994 = vmul.f32 %v883, %v970
        %v995 = vmul.f32 %v885, %v970
        %v996 = vmul.f32 %v887, %v971
        %v997 = vmul.f32 %v889, %v971
        %v998 = vmul.f32 %v891, %v972
        %v999 = vmul.f32 %v893, %v972
        %v1000 = vmul.f32 %v895, %v973
        %v1001 = vmul.f32 %v897, %v973
        %v1002 = vmul.f32 %v899, %v974
        %v1003 = vmul.f32 %v901, %v974
        %v1004 = vmul.f32 %v903, %v975
        %v1005 = vmul.f32 %v905, %v975
        %v1006 = vmul.f32 %v907, %v976
        %v1007 = vmul.f32 %v909, %v976
        %v1008 = vmul.f32 %v911, %v977
        %v1009 = vmul.f32 %v913, %v977
        %v1010 = vld [vmem:[#allocation10] sm:$0xff]
        %v1011 = vld [vmem:[#allocation10 + $0x8] sm:$0xff]
        %v1012 = vld [vmem:[#allocation10 + $0x10] sm:$0xff]
        %v1013 = vld [vmem:[#allocation10 + $0x18] sm:$0xff]
        %v1014 = vld [vmem:[#allocation10 + $0x20] sm:$0xff]
        %v1015 = vld [vmem:[#allocation10 + $0x28] sm:$0xff]
        %v1016 = vld [vmem:[#allocation10 + $0x30] sm:$0xff]
        %v1017 = vld [vmem:[#allocation10 + $0x38] sm:$0xff]
        %v1018 = vld [vmem:[#allocation10 + $0x40] sm:$0xff]
        %v1019 = vld [vmem:[#allocation10 + $0x48] sm:$0xff]
        %v1020 = vld [vmem:[#allocation10 + $0x50] sm:$0xff]
        %v1021 = vld [vmem:[#allocation10 + $0x58] sm:$0xff]
        %v1022 = vld [vmem:[#allocation10 + $0x60] sm:$0xff]
        %v1023 = vld [vmem:[#allocation10 + $0x68] sm:$0xff]
        %v1024 = vld [vmem:[#allocation10 + $0x70] sm:$0xff]
        %v1025 = vld [vmem:[#allocation10 + $0x78] sm:$0xff]
        %v1026 = vld [vmem:[#allocation10 + $0x80] sm:$0xff]
        %v1027 = vld [vmem:[#allocation10 + $0x88] sm:$0xff]
        %v1028 = vld [vmem:[#allocation10 + $0x90] sm:$0xff]
        %v1029 = vld [vmem:[#allocation10 + $0x98] sm:$0xff]
        %v1030 = vld [vmem:[#allocation10 + $0xa0] sm:$0xff]
        %v1031 = vld [vmem:[#allocation10 + $0xa8] sm:$0xff]
        %v1032 = vld [vmem:[#allocation10 + $0xb0] sm:$0xff]
        %v1033 = vld [vmem:[#allocation10 + $0xb8] sm:$0xff]
        %v1034 = vld [vmem:[#allocation10 + $0xc0] sm:$0xff]
        %v1035 = vld [vmem:[#allocation10 + $0xc8] sm:$0xff]
        %v1036 = vld [vmem:[#allocation10 + $0xd0] sm:$0xff]
        %v1037 = vld [vmem:[#allocation10 + $0xd8] sm:$0xff]
        %v1038 = vld [vmem:[#allocation10 + $0xe0] sm:$0xff]
        %v1039 = vld [vmem:[#allocation10 + $0xe8] sm:$0xff]
        %v1040 = vld [vmem:[#allocation10 + $0xf0] sm:$0xff]
        %v1041 = vld [vmem:[#allocation10 + $0xf8] sm:$0xff]
        %1042 = vmatprep.subr.mxu0 0.0
        %1043 = vmatpush1.msra.mxu0 %v1010
        %1044 = vmatprep.subr.mxu0 0.0
        %1045 = vmatpush1.msra.mxu0 %v1011
        %1046 = vmatprep.subr.mxu0 0.0
        %1047 = vmatpush1.msra.mxu0 %v1012
        %1048 = vmatprep.subr.mxu0 0.0
        %1049 = vmatpush1.msra.mxu0 %v1013
        %1050 = vmatprep.subr.mxu0 0.0
        %1051 = vmatpush1.msra.mxu0 %v1014
        %1052 = vmatprep.subr.mxu0 0.0
        %1053 = vmatpush1.msra.mxu0 %v1015
        %1054 = vmatprep.subr.mxu0 0.0
        %1055 = vmatpush1.msra.mxu0 %v1016
        %1056 = vmatprep.subr.mxu0 0.0
        %1057 = vmatpush1.msra.mxu0 %v1017
        %1058 = vmatprep.subr.mxu0 0.0
        %1059 = vmatpush1.msra.mxu0 %v1018
        %1060 = vmatprep.subr.mxu0 0.0
        %1061 = vmatpush1.msra.mxu0 %v1019
        %1062 = vmatprep.subr.mxu0 0.0
        %1063 = vmatpush1.msra.mxu0 %v1020
        %1064 = vmatprep.subr.mxu0 0.0
        %1065 = vmatpush1.msra.mxu0 %v1021
        %1066 = vmatprep.subr.mxu0 0.0
        %1067 = vmatpush1.msra.mxu0 %v1022
        %1068 = vmatprep.subr.mxu0 0.0
        %1069 = vmatpush1.msra.mxu0 %v1023
        %1070 = vmatprep.subr.mxu0 0.0
        %1071 = vmatpush1.msra.mxu0 %v1024
        %1072 = vmatprep.subr.mxu0 0.0
        %1073 = vmatpush1.msra.mxu0 %v1025
        %1074 = vmatprep.subr.mxu0 0.0
        %1075 = vmatpush1.msra.mxu0 %v1026
        %1076 = vmatprep.subr.mxu0 0.0
        %1077 = vmatpush1.msra.mxu0 %v1027
        %1078 = vmatprep.subr.mxu0 0.0
        %1079 = vmatpush1.msra.mxu0 %v1028
        %1080 = vmatprep.subr.mxu0 0.0
        %1081 = vmatpush1.msra.mxu0 %v1029
        %1082 = vmatprep.subr.mxu0 0.0
        %1083 = vmatpush1.msra.mxu0 %v1030
        %1084 = vmatprep.subr.mxu0 0.0
        %1085 = vmatpush1.msra.mxu0 %v1031
        %1086 = vmatprep.subr.mxu0 0.0
        %1087 = vmatpush1.msra.mxu0 %v1032
        %1088 = vmatprep.subr.mxu0 0.0
        %1089 = vmatpush1.msra.mxu0 %v1033
        %1090 = vmatprep.subr.mxu0 0.0
        %1091 = vmatpush1.msra.mxu0 %v1034
        %1092 = vmatprep.subr.mxu0 0.0
        %1093 = vmatpush1.msra.mxu0 %v1035
        %1094 = vmatprep.subr.mxu0 0.0
        %1095 = vmatpush1.msra.mxu0 %v1036
        %1096 = vmatprep.subr.mxu0 0.0
        %1097 = vmatpush1.msra.mxu0 %v1037
        %1098 = vmatprep.subr.mxu0 0.0
        %1099 = vmatpush1.msra.mxu0 %v1038
        %1100 = vmatprep.subr.mxu0 0.0
        %1101 = vmatpush1.msra.mxu0 %v1039
        %1102 = vmatprep.subr.mxu0 0.0
        %1103 = vmatpush1.msra.mxu0 %v1040
        %1104 = vmatprep.subr.mxu0 0.0
        %1105 = vmatpush1.msra.mxu0 %v1041
        %1106 = vmatprep.mubr.f32.mxu0 %v979
        %1107 = vmatmul.mubr.f32.gmra.mrb[0].mxu0 %v978
        %v1108 = vpop.f32.mrb[0].mxu0
        %v1109 = vadd.f32 0.0, %v1108
        %v1110 = vpop.f32.mrb[0].mxu0
        %1111 = vmatprep.mubr.f32.mxu0 %v981
        %1112 = vmatmul.mubr.f32.gmra.mrb[0].mxu0 %v980
        %v1113 = vpop.f32.mrb[0].mxu0
        %v1114 = vadd.f32 0.0, %v1113
        %v1115 = vpop.f32.mrb[0].mxu0
        %1116 = vmatprep.mubr.f32.mxu0 %v983
        %1117 = vmatmul.mubr.f32.gmra.mrb[0].mxu0 %v982
        %v1118 = vpop.f32.mrb[0].mxu0
        %v1119 = vadd.f32 0.0, %v1118
        %v1120 = vpop.f32.mrb[0].mxu0
        %1121 = vmatprep.mubr.f32.mxu0 %v985
        %1122 = vmatmul.mubr.f32.gmra.mrb[0].mxu0 %v984
        %v1123 = vpop.f32.mrb[0].mxu0
        %v1124 = vadd.f32 0.0, %v1123
        %v1125 = vpop.f32.mrb[0].mxu0
        %1126 = vmatprep.mubr.f32.mxu0 %v987
        %1127 = vmatmul.mubr.f32.gmra.mrb[0].mxu0 %v986
        %v1128 = vpop.f32.mrb[0].mxu0
        %v1129 = vadd.f32 0.0, %v1128
        %v1130 = vpop.f32.mrb[0].mxu0
        %1131 = vmatprep.mubr.f32.mxu0 %v989
        %1132 = vmatmul.mubr.f32.gmra.mrb[0].mxu0 %v988
        %v1133 = vpop.f32.mrb[0].mxu0
        %v1134 = vadd.f32 0.0, %v1133
        %v1135 = vpop.f32.mrb[0].mxu0
        %1136 = vmatprep.mubr.f32.mxu0 %v991
        %1137 = vmatmul.mubr.f32.gmra.mrb[0].mxu0 %v990
        %v1138 = vpop.f32.mrb[0].mxu0
        %v1139 = vadd.f32 0.0, %v1138
        %v1140 = vpop.f32.mrb[0].mxu0
        %1141 = vmatprep.mubr.f32.mxu0 %v993
        %1142 = vmatmul.mubr.f32.gmra.mrb[0].mxu0 %v992
        %v1143 = vpop.f32.mrb[0].mxu0
        %v1144 = vadd.f32 0.0, %v1143
        %v1145 = vpop.f32.mrb[0].mxu0
        %1146 = vmatprep.mubr.f32.mxu0 %v995
        %1147 = vmatmul.mubr.f32.gmra.mrb[0].mxu0 %v994
        %v1148 = vpop.f32.mrb[0].mxu0
        %v1149 = vadd.f32 0.0, %v1148
        %v1150 = vpop.f32.mrb[0].mxu0
        %1151 = vmatprep.mubr.f32.mxu0 %v997
        %1152 = vmatmul.mubr.f32.gmra.mrb[0].mxu0 %v996
        %v1153 = vpop.f32.mrb[0].mxu0
        %v1154 = vadd.f32 0.0, %v1153
        %v1155 = vpop.f32.mrb[0].mxu0
        %1156 = vmatprep.mubr.f32.mxu0 %v999
        %1157 = vmatmul.mubr.f32.gmra.mrb[0].mxu0 %v998
        %v1158 = vpop.f32.mrb[0].mxu0
        %v1159 = vadd.f32 0.0, %v1158
        %v1160 = vpop.f32.mrb[0].mxu0
        %1161 = vmatprep.mubr.f32.mxu0 %v1001
        %1162 = vmatmul.mubr.f32.gmra.mrb[0].mxu0 %v1000
        %v1163 = vpop.f32.mrb[0].mxu0
        %v1164 = vadd.f32 0.0, %v1163
        %v1165 = vpop.f32.mrb[0].mxu0
        %1166 = vmatprep.mubr.f32.mxu0 %v1003
        %1167 = vmatmul.mubr.f32.gmra.mrb[0].mxu0 %v1002
        %v1168 = vpop.f32.mrb[0].mxu0
        %v1169 = vadd.f32 0.0, %v1168
        %v1170 = vpop.f32.mrb[0].mxu0
        %1171 = vmatprep.mubr.f32.mxu0 %v1005
        %1172 = vmatmul.mubr.f32.gmra.mrb[0].mxu0 %v1004
        %v1173 = vpop.f32.mrb[0].mxu0
        %v1174 = vadd.f32 0.0, %v1173
        %v1175 = vpop.f32.mrb[0].mxu0
        %1176 = vmatprep.mubr.f32.mxu0 %v1007
        %1177 = vmatmul.mubr.f32.gmra.mrb[0].mxu0 %v1006
        %v1178 = vpop.f32.mrb[0].mxu0
        %v1179 = vadd.f32 0.0, %v1178
        %v1180 = vpop.f32.mrb[0].mxu0
        %1181 = vmatprep.mubr.f32.mxu0 %v1009
        %1182 = vmatmul.mubr.f32.gmra.mrb[0].mxu0 %v1008
        %v1183 = vpop.f32.mrb[0].mxu0
        %v1184 = vadd.f32 0.0, %v1183
        %v1185 = vpop.f32.mrb[0].mxu0
        %1186 = vdwg.mxu0
        %vm1187 = vcmp.gt.f32.partialorder %v1109, 0.0
        %vm1188 = vcmp.gt.f32.partialorder %v1114, 0.0
        %vm1189 = vcmp.gt.f32.partialorder %v1119, 0.0
        %vm1190 = vcmp.gt.f32.partialorder %v1124, 0.0
        %vm1191 = vcmp.gt.f32.partialorder %v1129, 0.0
        %vm1192 = vcmp.gt.f32.partialorder %v1134, 0.0
        %vm1193 = vcmp.gt.f32.partialorder %v1139, 0.0
        %vm1194 = vcmp.gt.f32.partialorder %v1144, 0.0
        %vm1195 = vcmp.gt.f32.partialorder %v1149, 0.0
        %vm1196 = vcmp.gt.f32.partialorder %v1154, 0.0
        %vm1197 = vcmp.gt.f32.partialorder %v1159, 0.0
        %vm1198 = vcmp.gt.f32.partialorder %v1164, 0.0
        %vm1199 = vcmp.gt.f32.partialorder %v1169, 0.0
        %vm1200 = vcmp.gt.f32.partialorder %v1174, 0.0
        %vm1201 = vcmp.gt.f32.partialorder %v1179, 0.0
        %vm1202 = vcmp.gt.f32.partialorder %v1184, 0.0
        %v1203 = vmul.f32 %v1109, 1.442695
        %v1204 = vpow.pop %v1203
        %v1205 = vmul.f32 %v1114, 1.442695
        %v1206 = vpow.pop %v1205
        %v1207 = vmul.f32 %v1119, 1.442695
        %v1208 = vpow.pop %v1207
        %v1209 = vmul.f32 %v1124, 1.442695
        %v1210 = vpow.pop %v1209
        %v1211 = vmul.f32 %v1129, 1.442695
        %v1212 = vpow.pop %v1211
        %v1213 = vmul.f32 %v1134, 1.442695
        %v1214 = vpow.pop %v1213
        %v1215 = vmul.f32 %v1139, 1.442695
        %v1216 = vpow.pop %v1215
        %v1217 = vmul.f32 %v1144, 1.442695
        %v1218 = vpow.pop %v1217
        %v1219 = vmul.f32 %v1149, 1.442695
        %v1220 = vpow.pop %v1219
        %v1221 = vmul.f32 %v1154, 1.442695
        %v1222 = vpow.pop %v1221
        %v1223 = vmul.f32 %v1159, 1.442695
        %v1224 = vpow.pop %v1223
        %v1225 = vmul.f32 %v1164, 1.442695
        %v1226 = vpow.pop %v1225
        %v1227 = vmul.f32 %v1169, 1.442695
        %v1228 = vpow.pop %v1227
        %v1229 = vmul.f32 %v1174, 1.442695
        %v1230 = vpow.pop %v1229
        %v1231 = vmul.f32 %v1179, 1.442695
        %v1232 = vpow.pop %v1231
        %v1233 = vmul.f32 %v1184, 1.442695
        %v1234 = vpow.pop %v1233
        %v1235 = vsub.f32 %v1204, 1.0
        %v1236 = vsub.f32 %v1206, 1.0
        %v1237 = vsub.f32 %v1208, 1.0
        %v1238 = vsub.f32 %v1210, 1.0
        %v1239 = vsub.f32 %v1212, 1.0
        %v1240 = vsub.f32 %v1214, 1.0
        %v1241 = vsub.f32 %v1216, 1.0
        %v1242 = vsub.f32 %v1218, 1.0
        %v1243 = vsub.f32 %v1220, 1.0
        %v1244 = vsub.f32 %v1222, 1.0
        %v1245 = vsub.f32 %v1224, 1.0
        %v1246 = vsub.f32 %v1226, 1.0
        %v1247 = vsub.f32 %v1228, 1.0
        %v1248 = vsub.f32 %v1230, 1.0
        %v1249 = vsub.f32 %v1232, 1.0
        %v1250 = vsub.f32 %v1234, 1.0
        %v1251 = vsel %vm1187, %v1109, %v1235
        %v1252 = vsel %vm1188, %v1114, %v1236
        %v1253 = vsel %vm1189, %v1119, %v1237
        %v1254 = vsel %vm1190, %v1124, %v1238
        %v1255 = vsel %vm1191, %v1129, %v1239
        %v1256 = vsel %vm1192, %v1134, %v1240
        %v1257 = vsel %vm1193, %v1139, %v1241
        %v1258 = vsel %vm1194, %v1144, %v1242
        %v1259 = vsel %vm1195, %v1149, %v1243
        %v1260 = vsel %vm1196, %v1154, %v1244
        %v1261 = vsel %vm1197, %v1159, %v1245
        %v1262 = vsel %vm1198, %v1164, %v1246
        %v1263 = vsel %vm1199, %v1169, %v1247
        %v1264 = vsel %vm1200, %v1174, %v1248
        %v1265 = vsel %vm1201, %v1179, %v1249
        %v1266 = vsel %vm1202, %v1184, %v1250
        %v1267 = vld [vmem:[#allocation12] sm:$0xff]
        %v1268 = vld [vmem:[#allocation12 + $0x8] sm:$0xff]
        %v1269 = vld [vmem:[#allocation12 + $0x10] sm:$0xff]
        %v1270 = vld [vmem:[#allocation12 + $0x18] sm:$0xff]
        %v1271 = vld [vmem:[#allocation12 + $0x20] sm:$0xff]
        %v1272 = vld [vmem:[#allocation12 + $0x28] sm:$0xff]
        %v1273 = vld [vmem:[#allocation12 + $0x30] sm:$0xff]
        %v1274 = vld [vmem:[#allocation12 + $0x38] sm:$0xff]
        %v1275 = vld [vmem:[#allocation12 + $0x40] sm:$0xff]
        %v1276 = vld [vmem:[#allocation12 + $0x48] sm:$0xff]
        %v1277 = vld [vmem:[#allocation12 + $0x50] sm:$0xff]
        %v1278 = vld [vmem:[#allocation12 + $0x58] sm:$0xff]
        %v1279 = vld [vmem:[#allocation12 + $0x60] sm:$0xff]
        %v1280 = vld [vmem:[#allocation12 + $0x68] sm:$0xff]
        %v1281 = vld [vmem:[#allocation12 + $0x70] sm:$0xff]
        %v1282 = vld [vmem:[#allocation12 + $0x78] sm:$0xff]
        %1283 = vmatprep.subr.mxu0 0.0
        %1284 = vmatpush1.msra.mxu0 %v1267
        %1285 = vmatprep.subr.mxu0 0.0
        %1286 = vmatpush1.msra.mxu0 %v1268
        %1287 = vmatprep.subr.mxu0 0.0
        %1288 = vmatpush1.msra.mxu0 %v1269
        %1289 = vmatprep.subr.mxu0 0.0
        %1290 = vmatpush1.msra.mxu0 %v1270
        %1291 = vmatprep.subr.mxu0 0.0
        %1292 = vmatpush1.msra.mxu0 %v1271
        %1293 = vmatprep.subr.mxu0 0.0
        %1294 = vmatpush1.msra.mxu0 %v1272
        %1295 = vmatprep.subr.mxu0 0.0
        %1296 = vmatpush1.msra.mxu0 %v1273
        %1297 = vmatprep.subr.mxu0 0.0
        %1298 = vmatpush1.msra.mxu0 %v1274
        %1299 = vmatprep.subr.mxu0 0.0
        %1300 = vmatpush1.msra.mxu0 %v1275
        %1301 = vmatprep.subr.mxu0 0.0
        %1302 = vmatpush1.msra.mxu0 %v1276
        %1303 = vmatprep.subr.mxu0 0.0
        %1304 = vmatpush1.msra.mxu0 %v1277
        %1305 = vmatprep.subr.mxu0 0.0
        %1306 = vmatpush1.msra.mxu0 %v1278
        %1307 = vmatprep.subr.mxu0 0.0
        %1308 = vmatpush1.msra.mxu0 %v1279
        %1309 = vmatprep.subr.mxu0 0.0
        %1310 = vmatpush1.msra.mxu0 %v1280
        %1311 = vmatprep.subr.mxu0 0.0
        %1312 = vmatpush1.msra.mxu0 %v1281
        %1313 = vmatprep.subr.mxu0 0.0
        %1314 = vmatpush1.msra.mxu0 %v1282
        %1315 = vmatprep.subr.mxu0 0.0
        %1316 = vmatpush1.msra.mxu0 0.0
        %1317 = vmatprep.subr.mxu0 0.0
        %1318 = vmatpush1.msra.mxu0 0.0
        %1319 = vmatprep.subr.mxu0 0.0
        %1320 = vmatpush1.msra.mxu0 0.0
        %1321 = vmatprep.subr.mxu0 0.0
        %1322 = vmatpush1.msra.mxu0 0.0
        %1323 = vmatprep.subr.mxu0 0.0
        %1324 = vmatpush1.msra.mxu0 0.0
        %1325 = vmatprep.subr.mxu0 0.0
        %1326 = vmatpush1.msra.mxu0 0.0
        %1327 = vmatprep.subr.mxu0 0.0
        %1328 = vmatpush1.msra.mxu0 0.0
        %1329 = vmatprep.subr.mxu0 0.0
        %1330 = vmatpush1.msra.mxu0 0.0
        %1331 = vmatprep.subr.mxu0 0.0
        %1332 = vmatpush1.msra.mxu0 0.0
        %1333 = vmatprep.subr.mxu0 0.0
        %1334 = vmatpush1.msra.mxu0 0.0
        %1335 = vmatprep.subr.mxu0 0.0
        %1336 = vmatpush1.msra.mxu0 0.0
        %1337 = vmatprep.subr.mxu0 0.0
        %1338 = vmatpush1.msra.mxu0 0.0
        %1339 = vmatprep.subr.mxu0 0.0
        %1340 = vmatpush1.msra.mxu0 0.0
        %1341 = vmatprep.subr.mxu0 0.0
        %1342 = vmatpush1.msra.mxu0 0.0
        %1343 = vmatprep.subr.mxu0 0.0
        %1344 = vmatpush1.msra.mxu0 0.0
        %1345 = vmatprep.subr.mxu0 0.0
        %1346 = vmatpush1.msra.mxu0 0.0
        %1347 = vmatprep.mubr.f32.mxu0 0.0
        %1348 = vmatmul.mubr.f32.gmra.mrb[0].mxu0 %v1251
        %v1349 = vpop.f32.mrb[0].mxu0
        %v1350 = vadd.f32 0.0, %v1349
        %v1351 = vpop.f32.mrb[0].mxu0
        %1352 = vmatprep.mubr.f32.mxu0 0.0
        %1353 = vmatmul.mubr.f32.gmra.mrb[0].mxu0 %v1252
        %v1354 = vpop.f32.mrb[0].mxu0
        %v1355 = vadd.f32 0.0, %v1354
        %v1356 = vpop.f32.mrb[0].mxu0
        %1357 = vmatprep.mubr.f32.mxu0 0.0
        %1358 = vmatmul.mubr.f32.gmra.mrb[0].mxu0 %v1253
        %v1359 = vpop.f32.mrb[0].mxu0
        %v1360 = vadd.f32 0.0, %v1359
        %v1361 = vpop.f32.mrb[0].mxu0
        %1362 = vmatprep.mubr.f32.mxu0 0.0
        %1363 = vmatmul.mubr.f32.gmra.mrb[0].mxu0 %v1254
        %v1364 = vpop.f32.mrb[0].mxu0
        %v1365 = vadd.f32 0.0, %v1364
        %v1366 = vpop.f32.mrb[0].mxu0
        %1367 = vmatprep.mubr.f32.mxu0 0.0
        %1368 = vmatmul.mubr.f32.gmra.mrb[0].mxu0 %v1255
        %v1369 = vpop.f32.mrb[0].mxu0
        %v1370 = vadd.f32 0.0, %v1369
        %v1371 = vpop.f32.mrb[0].mxu0
        %1372 = vmatprep.mubr.f32.mxu0 0.0
        %1373 = vmatmul.mubr.f32.gmra.mrb[0].mxu0 %v1256
        %v1374 = vpop.f32.mrb[0].mxu0
        %v1375 = vadd.f32 0.0, %v1374
        %v1376 = vpop.f32.mrb[0].mxu0
        %1377 = vmatprep.mubr.f32.mxu0 0.0
        %1378 = vmatmul.mubr.f32.gmra.mrb[0].mxu0 %v1257
        %v1379 = vpop.f32.mrb[0].mxu0
        %v1380 = vadd.f32 0.0, %v1379
        %v1381 = vpop.f32.mrb[0].mxu0
        %1382 = vmatprep.mubr.f32.mxu0 0.0
        %1383 = vmatmul.mubr.f32.gmra.mrb[0].mxu0 %v1258
        %v1384 = vpop.f32.mrb[0].mxu0
        %v1385 = vadd.f32 0.0, %v1384
        %v1386 = vpop.f32.mrb[0].mxu0
        %1387 = vmatprep.mubr.f32.mxu0 0.0
        %1388 = vmatmul.mubr.f32.gmra.mrb[0].mxu0 %v1259
        %v1389 = vpop.f32.mrb[0].mxu0
        %v1390 = vadd.f32 0.0, %v1389
        %v1391 = vpop.f32.mrb[0].mxu0
        %1392 = vmatprep.mubr.f32.mxu0 0.0
        %1393 = vmatmul.mubr.f32.gmra.mrb[0].mxu0 %v1260
        %v1394 = vpop.f32.mrb[0].mxu0
        %v1395 = vadd.f32 0.0, %v1394
        %v1396 = vpop.f32.mrb[0].mxu0
        %1397 = vmatprep.mubr.f32.mxu0 0.0
        %1398 = vmatmul.mubr.f32.gmra.mrb[0].mxu0 %v1261
        %v1399 = vpop.f32.mrb[0].mxu0
        %v1400 = vadd.f32 0.0, %v1399
        %v1401 = vpop.f32.mrb[0].mxu0
        %1402 = vmatprep.mubr.f32.mxu0 0.0
        %1403 = vmatmul.mubr.f32.gmra.mrb[0].mxu0 %v1262
        %v1404 = vpop.f32.mrb[0].mxu0
        %v1405 = vadd.f32 0.0, %v1404
        %v1406 = vpop.f32.mrb[0].mxu0
        %1407 = vmatprep.mubr.f32.mxu0 0.0
        %1408 = vmatmul.mubr.f32.gmra.mrb[0].mxu0 %v1263
        %v1409 = vpop.f32.mrb[0].mxu0
        %v1410 = vadd.f32 0.0, %v1409
        %v1411 = vpop.f32.mrb[0].mxu0
        %1412 = vmatprep.mubr.f32.mxu0 0.0
        %1413 = vmatmul.mubr.f32.gmra.mrb[0].mxu0 %v1264
        %v1414 = vpop.f32.mrb[0].mxu0
        %v1415 = vadd.f32 0.0, %v1414
        %v1416 = vpop.f32.mrb[0].mxu0
        %1417 = vmatprep.mubr.f32.mxu0 0.0
        %1418 = vmatmul.mubr.f32.gmra.mrb[0].mxu0 %v1265
        %v1419 = vpop.f32.mrb[0].mxu0
        %v1420 = vadd.f32 0.0, %v1419
        %v1421 = vpop.f32.mrb[0].mxu0
        %1422 = vmatprep.mubr.f32.mxu0 0.0
        %1423 = vmatmul.mubr.f32.gmra.mrb[0].mxu0 %v1266
        %v1424 = vpop.f32.mrb[0].mxu0
        %v1425 = vadd.f32 0.0, %v1424
        %v1426 = vpop.f32.mrb[0].mxu0
        %1427 = vdwg.mxu0
        %1428 = vst [vmem:[%s415] sm:$0xff] %v1350
        %1429 = vst [vmem:[%s415 + $0x8] sm:$0xff] %v1355
        %1430 = vst [vmem:[%s415 + $0x10] sm:$0xff] %v1360
        %1431 = vst [vmem:[%s415 + $0x18] sm:$0xff] %v1365
        %1432 = vst [vmem:[%s415 + $0x20] sm:$0xff] %v1370
        %1433 = vst [vmem:[%s415 + $0x28] sm:$0xff] %v1375
        %1434 = vst [vmem:[%s415 + $0x30] sm:$0xff] %v1380
        %1435 = vst [vmem:[%s415 + $0x38] sm:$0xff] %v1385
        %1436 = vst [vmem:[%s415 + $0x40] sm:$0xff] %v1390
        %1437 = vst [vmem:[%s415 + $0x48] sm:$0xff] %v1395
        %1438 = vst [vmem:[%s415 + $0x50] sm:$0xff] %v1400
        %1439 = vst [vmem:[%s415 + $0x58] sm:$0xff] %v1405
        %1440 = vst [vmem:[%s415 + $0x60] sm:$0xff] %v1410
        %1441 = vst [vmem:[%s415 + $0x68] sm:$0xff] %v1415
        %1442 = vst [vmem:[%s415 + $0x70] sm:$0xff] %v1420
        %1443 = vst [vmem:[%s415 + $0x78] sm:$0xff] %v1425
        %v1444 = vld [vmem:[%s377] sm:$0xff]
        %v1445 = vld [vmem:[%s377 + $0x8] sm:$0xff]
        %v1446 = vld [vmem:[%s377 + $0x10] sm:$0xff]
        %v1447 = vld [vmem:[%s377 + $0x18] sm:$0xff]
        %v1448 = vld [vmem:[%s377 + $0x20] sm:$0xff]
        %v1449 = vld [vmem:[%s377 + $0x28] sm:$0xff]
        %v1450 = vld [vmem:[%s377 + $0x30] sm:$0xff]
        %v1451 = vld [vmem:[%s377 + $0x38] sm:$0xff]
        %v1452 = vld [vmem:[%s377 + $0x40] sm:$0xff]
        %v1453 = vld [vmem:[%s377 + $0x48] sm:$0xff]
        %v1454 = vld [vmem:[%s377 + $0x50] sm:$0xff]
        %v1455 = vld [vmem:[%s377 + $0x58] sm:$0xff]
        %v1456 = vld [vmem:[%s377 + $0x60] sm:$0xff]
        %v1457 = vld [vmem:[%s377 + $0x68] sm:$0xff]
        %v1458 = vld [vmem:[%s377 + $0x70] sm:$0xff]
        %v1459 = vld [vmem:[%s377 + $0x78] sm:$0xff]
        %v1460 = vsub.f32 %v1444, %v1350
        %v1461 = vsub.f32 %v1445, %v1355
        %v1462 = vsub.f32 %v1446, %v1360
        %v1463 = vsub.f32 %v1447, %v1365
        %v1464 = vsub.f32 %v1448, %v1370
        %v1465 = vsub.f32 %v1449, %v1375
        %v1466 = vsub.f32 %v1450, %v1380
        %v1467 = vsub.f32 %v1451, %v1385
        %v1468 = vsub.f32 %v1452, %v1390
        %v1469 = vsub.f32 %v1453, %v1395
        %v1470 = vsub.f32 %v1454, %v1400
        %v1471 = vsub.f32 %v1455, %v1405
        %v1472 = vsub.f32 %v1456, %v1410
        %v1473 = vsub.f32 %v1457, %v1415
        %v1474 = vsub.f32 %v1458, %v1420
        %v1475 = vsub.f32 %v1459, %v1425
        %v1476 = vmul.f32 %v1460, %v1460
        %v1477 = vmul.f32 %v1461, %v1461
        %v1478 = vmul.f32 %v1462, %v1462
        %v1479 = vmul.f32 %v1463, %v1463
        %v1480 = vmul.f32 %v1464, %v1464
        %v1481 = vmul.f32 %v1465, %v1465
        %v1482 = vmul.f32 %v1466, %v1466
        %v1483 = vmul.f32 %v1467, %v1467
        %v1484 = vmul.f32 %v1468, %v1468
        %v1485 = vmul.f32 %v1469, %v1469
        %v1486 = vmul.f32 %v1470, %v1470
        %v1487 = vmul.f32 %v1471, %v1471
        %v1488 = vmul.f32 %v1472, %v1472
        %v1489 = vmul.f32 %v1473, %v1473
        %v1490 = vmul.f32 %v1474, %v1474
        %v1491 = vmul.f32 %v1475, %v1475
        %v1492 = vadd.f32 %v1476, %v1477
        %v1493 = vadd.f32 %v1492, %v1478
        %v1494 = vadd.f32 %v1493, %v1479
        %v1495 = vadd.f32 %v1494, %v1480
        %v1496 = vadd.f32 %v1495, %v1481
        %v1497 = vadd.f32 %v1496, %v1482
        %v1498 = vadd.f32 %v1497, %v1483
        %v1499 = vadd.f32 %v1498, %v1484
        %v1500 = vadd.f32 %v1499, %v1485
        %v1501 = vadd.f32 %v1500, %v1486
        %v1502 = vadd.f32 %v1501, %v1487
        %v1503 = vadd.f32 %v1502, %v1488
        %v1504 = vadd.f32 %v1503, %v1489
        %v1505 = vadd.f32 %v1504, %v1490
        %v1506 = vadd.f32 %v1505, %v1491
        %1507 = vadd.xlane.f32.xlu0 %v1506
        %v1508 = vpop.xlane.xlu0 %1507
        %v1509 = vrot.slane %v1508, 4
        %v1510 = vadd.f32 %v1508, %v1509
        %v1511 = vrot.slane %v1510, 2
        %v1512 = vadd.f32 %v1510, %v1511
        %v1513 = vrot.slane %v1512, 1
        %v1514 = vadd.f32 %v1512, %v1513
        %s1515 = vtos %v1514
        %p1516 = scmp.eq.s32.totalorder %s33, 0
        // Predicated region
        $region69: #{passage_forward.5} parent=43 // pred_check
          %p1517 = pneg %p1516
        $region70: #{passage_forward.5} parent=43 // pred_check_branch
          %1519 = sbr.rel (%p1517) target = $region72
        $region71: #{passage_forward.5} parent=43 // pred_region
          %s1520 = scalar_lea.smem [#allocation2], 0
          %1521 = sst [smem:[%s1520]] 0.0
        $region72: #{passage_forward.5} parent=43 // pred_fallthru
          _
        %s1522 = sld [smem:[#allocation2]]
        %s1523 = sadd.f32 %s1522, %s1515
        %s1524 = scalar_lea.smem [#allocation2], 0
        %1525 = sst [smem:[%s1524]] %s1523
        %p1526 = scmp.eq.s32.totalorder %s33, 1
        // Predicated region
        $region73: #{passage_forward.5} parent=43 // pred_check
          %p1527 = pneg %p1526
        $region74: #{passage_forward.5} parent=43 // pred_check_branch
          %1529 = sbr.rel (%p1527) target = $region76
        $region75: #{passage_forward.5} parent=43 // pred_region
          %s1530 = sld [smem:[#allocation2]]
          %s1531 = smul.f32 %s1530, 0.00010416667
          %s1532 = scalar_lea.smem [#allocation16], 0
          %1533 = sst [smem:[%s1532]] %s1531
        $region76: #{passage_forward.5} parent=43 // pred_fallthru
          _
        %s1534 = sand.u32 %s182, 1
        %s1535 = scalar_lea.sflag [#allocation5], %s1534
        %s1536 = sand.u32 %s182, 1
        %s1537 = smul.addr %s1536, 128
        %s1538 = scalar_lea.vmem [#allocation15], %s1537
        // Predicated region
        $region77: #{passage_forward.5} parent=43 // pred_check
          %p1539 = pneg %p192
        $region78: #{passage_forward.5} parent=43 // pred_check_branch
          %1541 = sbr.rel (%p1539) target = $region80
        $region79: #{passage_forward.5} parent=43 // pred_region
          %s1542 = smul.u32 16, %s33
          %s1544 = ssub.s32 2048, 2048
          %1545 = vsyncadd %s1535, %s1544
          %s1546 = smul.addr %s1542, 128
          %s1547 = scalar_lea.hbm %s6, %s1546
          %s1548 = sshll.u32 %s1538, 4
          %s1549 = int_to_ptr.vmem [resolvable:$true] %s1548
          %1554 = dma.vmem_to_hbm [thread:$0]  %s1549, 2048, %s1547, %s1535, 128, 128, 8
        $region80: #{passage_forward.5} parent=43 // pred_fallthru
          _
        // Predicated region
        $region81: #{passage_forward.5} parent=43 // pred_check
          %p1555 = pneg %p213
        $region82: #{passage_forward.5} parent=43 // pred_check_branch
          %1557 = sbr.rel (%p1555) target = $region84
        $region83: #{passage_forward.5} parent=43 // pred_region
          %s1559 = ssub.s32 16, 16
          %1560 = vsyncadd [#allocation6], %s1559
          %1563 = dma.smem_to_hbm [#allocation16], 16, %s7, [#allocation6]
        $region84: #{passage_forward.5} parent=43 // pred_fallthru
          _
        // Predicated region
        $region85: #{passage_forward.5} parent=43 // pred_check
          %p1564 = pneg %p213
        $region86: #{passage_forward.5} parent=43 // pred_check_branch
          %1566 = sbr.rel (%p1564) target = $region88
        $region87: #{passage_forward.5} parent=43 // pred_region
          %1567 = dma.done [#allocation6], 16
        $region88: #{passage_forward.5} parent=43 // pred_fallthru
          _
        %1568 = sfence
      $region44: #{passage_forward.5} parent=5 // pred_fallthru
        _
      %p1569 = scmp.le.s32.totalorder 2, %s28
      // Predicated region
      $region89: #{passage_forward.5} parent=5 // pred_check
        %p1570 = pneg %p1569
      $region90: #{passage_forward.5} parent=5 // pred_check_branch
        %1572 = sbr.rel (%p1570) target = $region92
      $region91: #{passage_forward.5} parent=5 // pred_region
        %s1573 = ssub.s32 %s28, 2
        // Predicated region
        $region93: #{passage_forward.5} parent=91 // pred_check
          %p1574 = pneg %p198
        $region94: #{passage_forward.5} parent=91 // pred_check_branch
          %1576 = sbr.rel (%p1574) target = $region96
        $region95: #{passage_forward.5} parent=91 // pred_region
          %s1577 = sand.u32 %s183, 1
          %s1578 = scalar_lea.sflag [#allocation5], %s1577
          %s1579 = sand.u32 %s183, 1
          %s1580 = smul.addr %s1579, 128
          %s1581 = scalar_lea.vmem [#allocation15], %s1580
          %1582 = dma.done %s1578, 2048
        $region96: #{passage_forward.5} parent=91 // pred_fallthru
          _
      $region92: #{passage_forward.5} parent=5 // pred_fallthru
        _
    $region6: #{passage_forward.5} parent=1 // loop_footer
      %s32 = sadd.s32 1, %s28
    $region7: #{passage_forward.5} parent=1 // loop_footer_branch
      %27 = sbr.rel target = $region3
    $region8: #{passage_forward.5} parent=1 // loop_exit
      _
    %1583 = vsyncpa [#allocation4], 1
    %s1584 = scalar_lea.sflag [#allocation4], 1
    %1585 = vsyncpa %s1584, 1
    %1586 = vsyncpa [#allocation8], 1
    %s1587 = scalar_lea.sflag [#allocation8], 1
    %1588 = vsyncpa %s1587, 1
    %1589 = vsyncpa [#allocation11], 1
    %1590 = vsyncpa [#allocation14], 1
    %s1591 = scalar_lea.sflag [#allocation14], 1
    %1592 = vsyncpa %s1591, 1
    %1593 = vsyncpa [#allocation5], 1
    %s1594 = scalar_lea.sflag [#allocation5], 1
    %1595 = vsyncpa %s1594, 1
    %1596 = vsyncpa [#allocation6], 1
    %s1597 = scalar_lea.sflag [#allocation6], 1
    %1598 = vsyncpa %s1597, 1

</llo_original>
